<compile_context>
chip_gen: v7x
topology: tpu7x:2x2x1
jax: 0.10.0
libtpu: 0.0.40
codegen_flags: <defaults>
</compile_context>

<pallas_src>
import functools

import numpy as np
import jax
import jax.numpy as jnp
from jax import lax
from jax.experimental import pallas as pl
from jax.experimental.pallas import tpu as pltpu

EPS = 1e-5


def _round_up(x, m):
    return (x + m - 1) // m * m


def _pick_batch_tile(n, m, c_total_pad):
    """Largest divisor of n that keeps the resident f32 slab small while
    widening the matmul lane dimension (review #1)."""
    best = 1
    for bt in range(1, n + 1):
        if n % bt:
            continue
        lanes = bt * m
        if lanes <= 4096 and c_total_pad * lanes * 4 <= (4 << 20):
            best = bt
    return best


def _dense_block_kernel(x_ref, scale_ref, shift_ref, w_ref, mask_ref,
                        o_ref, buf_ref, *,
                        num_layers, c0, c0_pad, growth, g_pad, H, W, bt,
                        mm_dtype):
    """Whole DenseBlock for one batch tile, fully resident in VMEM.

    x_ref     : (bt, c0_pad, M)             channel-padded input (pad rows are 0)
    scale_ref : (cin_pad_max, L)            folded BN scale, padded channel layout
    shift_ref : (cin_pad_max, L)            folded BN shift, padded channel layout
    w_ref     : (L, 9, g_pad, cin_pad_max)  per-tap conv weights (padded, mm_dtype)
    mask_ref  : (9, bt*M)                   0/1 f32 validity mask per 3x3 tap
    o_ref     : (bt, c_final, M)            output in real (unpadded) NCHW layout
    buf_ref   : (c_total_pad, bt*M)         resident concat slab (VMEM scratch)
    """
    M = H * W
    lanes = bt * M

    # Input -> resident slab, batches concatenated along lanes.  The channel
    # padding rows arrive as zeros, so no memset of the slab is ever needed.
    for b in range(bt):
        buf_ref[0:c0_pad, b * M:(b + 1) * M] = x_ref[b]

    # Layers are unrolled at trace time (L is small & static here).
    # For L = 6..16 switch to lax.fori_loop / a grid axis (review note).
    for layer in range(num_layers):
        cin_p = c0_pad + layer * g_pad          # padded input channels (mult of 8)

        # Fused BatchNorm(eval) + ReLU in f32 (v5e has no bf16 VALU).
        act = buf_ref[0:cin_p, :]                               # (cin_p, lanes)
        scale = scale_ref[0:cin_p, layer:layer + 1]             # (cin_p, 1)
        shift = shift_ref[0:cin_p, layer:layer + 1]
        h = jnp.maximum(act * scale + shift, 0.0)

        # 3x3 SAME conv as 9 accumulating MXU dots on rolled+masked activations:
        # no im2col slab, exact-K (= cin_p) contraction, no patch stores.
        f = jnp.zeros((g_pad, lanes), jnp.float32)
        k = 0
        for dy in (-1, 0, 1):
            sh_y = (-dy * W) % lanes
            h_dy = h if sh_y == 0 else pltpu.roll(h, sh_y, axis=1)
            for dx in (-1, 0, 1):
                sh_x = (-dx) % lanes
                h_k = h_dy if sh_x == 0 else pltpu.roll(h_dy, sh_x, axis=1)
                # Boundary mask (zero-padding halo + no cross-image leakage),
                # then cast the matmul operand only (f32 VPU, bf16 MXU).
                h_k = (h_k * mask_ref[k:k + 1, :]).astype(mm_dtype)
                w_k = w_ref[layer, k][:, 0:cin_p]               # (g_pad, cin_p)
                f = f + jnp.dot(w_k, h_k,
                                preferred_element_type=jnp.float32)
                k += 1

        # Dense concat: aligned 8-row append; rows beyond `growth` are exact 0
        # (zero weight rows), keeping all padded slab rows zero.
        buf_ref[cin_p:cin_p + g_pad, :] = f

    # Epilogue: copy the real (unpadded) channels out in NCHW layout, per batch.
    for b in range(bt):
        o_ref[b, 0:c0, :] = buf_ref[0:c0, b * M:(b + 1) * M]
        for layer in range(num_layers):
            src = c0_pad + layer * g_pad
            dst = c0 + layer * growth
            o_ref[b, dst:dst + growth, :] = \
                buf_ref[src:src + growth, b * M:(b + 1) * M]


def dense_block_forward(x_nchw, params, *, matmul_dtype=jnp.bfloat16,
                        batch_tile=None):
    """DenseBlock forward.  x_nchw: (N, C0, H, W) f32 -> (N, C0 + L*G, H, W)."""
    N, C0, H, W = x_nchw.shape
    M = H * W
    L = len(params)
    G = params[0]["conv_w"].shape[0]
    c_final = C0 + L * G

    c0_pad = _round_up(C0, 8)
    g_pad = _round_up(G, 8)
    c_total_pad = c0_pad + L * g_pad
    cin_pad_max = c0_pad + (L - 1) * g_pad

    bt = batch_tile if batch_tile is not None else _pick_batch_tile(
        N, M, c_total_pad)
    assert N % bt == 0, (N, bt)

    # ---- wrapper-side constant folding (runs once under jit) ----
    def pad_channel_vec(v, cin):
        # Real concat order -> padded-segment layout, zeros in the pad rows.
        segs = [jnp.pad(v[0:C0], (0, c0_pad - C0))]
        for j in range((cin - C0) // G):
            segs.append(jnp.pad(v[C0 + j * G:C0 + (j + 1) * G], (0, g_pad - G)))
        out = jnp.concatenate(segs) if len(segs) > 1 else segs[0]
        return jnp.pad(out, (0, cin_pad_max - out.shape[0]))

    scales, shifts, wtaps = [], [], []
    for p in params:
        cin = p["conv_w"].shape[1]
        s = p["gamma"] * lax.rsqrt(p["running_var"] + EPS)
        b = p["beta"] - p["running_mean"] * s
        scales.append(pad_channel_vec(s, cin))
        shifts.append(pad_channel_vec(b, cin))
        # OIHW (G, cin, 3, 3) -> tap-major (9, G, cin) -> padded (9, g_pad, cin_pad_max)
        wt = jnp.transpose(p["conv_w"], (2, 3, 0, 1)).reshape(9, G, cin)
        segs = [jnp.pad(wt[:, :, 0:C0], ((0, 0), (0, 0), (0, c0_pad - C0)))]
        for j in range((cin - C0) // G):
            segs.append(jnp.pad(wt[:, :, C0 + j * G:C0 + (j + 1) * G],
                                ((0, 0), (0, 0), (0, g_pad - G))))
        wcat = jnp.concatenate(segs, axis=2) if len(segs) > 1 else segs[0]
        wpad = jnp.pad(wcat, ((0, 0), (0, g_pad - G),
                              (0, cin_pad_max - wcat.shape[2])))
        wtaps.append(wpad)

    scale_pk = jnp.stack(scales, axis=1)                      # (cin_pad_max, L)
    shift_pk = jnp.stack(shifts, axis=1)                      # (cin_pad_max, L)
    w_pk = jnp.stack(wtaps, axis=0).astype(matmul_dtype)      # (L, 9, g_pad, cin_pad_max)

    # Per-tap validity mask of the 3x3 SAME zero-padding halo, tiled across the
    # batch tile so the batched lane roll never leaks across images.
    hh, ww = np.meshgrid(np.arange(H), np.arange(W), indexing="ij")
    masks = []
    for dy in (-1, 0, 1):
        for dx in (-1, 0, 1):
            valid = ((hh + dy >= 0) & (hh + dy < H) &
                     (ww + dx >= 0) & (ww + dx < W))
            masks.append(valid.reshape(-1))
    tap_mask = jnp.asarray(np.tile(np.stack(masks, axis=0), (1, bt)),
                           jnp.float32)                        # (9, bt*M)

    # Free NCHW reshape + zero channel padding (keeps slab pad rows exact 0).
    x_flat = x_nchw.reshape(N, C0, M)
    x_padded = jnp.pad(x_flat, ((0, 0), (0, c0_pad - C0), (0, 0)))

    kernel = functools.partial(
        _dense_block_kernel, num_layers=L, c0=C0, c0_pad=c0_pad, growth=G,
        g_pad=g_pad, H=H, W=W, bt=bt, mm_dtype=matmul_dtype)

    out = pl.pallas_call(
        kernel,
        out_shape=jax.ShapeDtypeStruct((N, c_final, M), jnp.float32),
        grid_spec=pltpu.PrefetchScalarGridSpec(
            num_scalar_prefetch=0,
            grid=(N // bt,),
            in_specs=[
                pl.BlockSpec((bt, c0_pad, M), lambda n: (n, 0, 0)),
                pl.BlockSpec((cin_pad_max, L), lambda n: (0, 0)),
                pl.BlockSpec((cin_pad_max, L), lambda n: (0, 0)),
                pl.BlockSpec((L, 9, g_pad, cin_pad_max),
                             lambda n: (0, 0, 0, 0)),
                pl.BlockSpec((9, bt * M), lambda n: (0, 0)),
            ],
            out_specs=pl.BlockSpec((bt, c_final, M), lambda n: (n, 0, 0)),
            scratch_shapes=[pltpu.VMEM((c_total_pad, bt * M), jnp.float32)],
        ),
        compiler_params=pltpu.CompilerParams(
            dimension_semantics=("parallel",)),
    )(x_padded, scale_pk, shift_pk, w_pk, tap_mask)

    return out.reshape(N, c_final, H, W)


def init_dense_block_params(key, num_layers, num_input_features, growth_rate):
    """Deterministic synthetic params matching the PyTorch module's shapes."""
    params = []
    for i in range(num_layers):
        cin = num_input_features + i * growth_rate
        key, wk, gk, bk, mk, vk = jax.random.split(key, 6)
        params.append(dict(
            gamma=1.0 + 0.1 * jax.random.normal(gk, (cin,), jnp.float32),
            beta=0.1 * jax.random.normal(bk, (cin,), jnp.float32),
            running_mean=0.2 * jax.random.normal(mk, (cin,), jnp.float32),
            running_var=jax.random.uniform(vk, (cin,), jnp.float32, 0.5, 1.5),
            conv_w=0.1 * jax.random.normal(wk, (growth_rate, cin, 3, 3),
                                           jnp.float32),   # OIHW, like PyTorch
        ))
    return params


# ---------------------------- pure-JAX reference ----------------------------
def _ref_dense_block(x_nchw, params, operand_dtype=jnp.float32):
    """Reference.  operand_dtype lets us mimic the kernel's bf16 matmul
    operands (f32 accumulation) for a tight structural check."""
    x = x_nchw
    for p in params:
        s = p["gamma"] * lax.rsqrt(p["running_var"] + EPS)
        b = p["beta"] - p["running_mean"] * s
        h = jnp.maximum(x * s[None, :, None, None] + b[None, :, None, None], 0.0)
        f = lax.conv_general_dilated(
            h.astype(operand_dtype), p["conv_w"].astype(operand_dtype),
            window_strides=(1, 1), padding=((1, 1), (1, 1)),
            dimension_numbers=("NCHW", "OIHW", "NCHW"),
            preferred_element_type=jnp.float32)
        x = jnp.concatenate([x, f], axis=1)
    return x


if __name__ == "__main__":
    # Small shapes consistent with the module's forward.
    N, C0, H, W = 2, 4, 16, 16
    num_layers, growth_rate = 3, 4

    key = jax.random.PRNGKey(0)
    key, xk = jax.random.split(key)
    x = jax.random.normal(xk, (N, C0, H, W), jnp.float32)
    params = init_dense_block_params(key, num_layers, C0, growth_rate)

    fwd = jax.jit(dense_block_forward)          # default: bf16 MXU operands
    out = jax.block_until_ready(fwd(x, params))
    assert out.shape == (N, C0 + num_layers * growth_rate, H, W), out.shape

    # Tight structural check against a reference with the same bf16 operand
    # rounding (f32 accumulation), so it is insensitive to matmul precision.
    ref_bf16 = jax.block_until_ready(
        _ref_dense_block(x, params, operand_dtype=jnp.bfloat16))
    err_tight = float(jnp.max(jnp.abs(out - ref_bf16)))
    assert err_tight < 1e-2, err_tight

    # Looser semantic check against the full-f32 reference.
    ref_f32 = jax.block_until_ready(_ref_dense_block(x, params))
    err_loose = float(jnp.max(jnp.abs(out - ref_f32)))
    assert err_loose < 7e-2, err_loose

    print("KERNEL_OK")
</pallas_src>

<mosaic_0001>
module attributes {stable_mosaic.version = 11 : i64} {
  func.func @_dense_block_kernel(%arg0: i32, %arg1: memref<2x8x256xf32, #tpu.memory_space<vmem>>, %arg2: memref<24x3xf32, #tpu.memory_space<vmem>>, %arg3: memref<24x3xf32, #tpu.memory_space<vmem>>, %arg4: memref<3x9x8x24xbf16, #tpu.memory_space<vmem>>, %arg5: memref<9x512xf32, #tpu.memory_space<vmem>>, %arg6: memref<2x16x256xf32, #tpu.memory_space<vmem>>, %arg7: memref<32x512xf32, #tpu.memory_space<vmem>>) attributes {dimension_semantics = [#tpu.dimension_semantics<parallel>], iteration_bounds = array<i64: 1>, scalar_prefetch = 0 : i64, scratch_operands = 1 : i64, tpu.core_type = #tpu.core_type<tc>, window_params = [{transform_indices = @transform_0, window_bounds = array<i64: 2, 8, 256>}, {pipeline_mode = #tpu.pipeline_mode<synchronous>, transform_indices = @transform_1, window_bounds = array<i64: 24, 3>}, {pipeline_mode = #tpu.pipeline_mode<synchronous>, transform_indices = @transform_2, window_bounds = array<i64: 24, 3>}, {pipeline_mode = #tpu.pipeline_mode<synchronous>, transform_indices = @transform_3, window_bounds = array<i64: 3, 9, 8, 24>}, {pipeline_mode = #tpu.pipeline_mode<synchronous>, transform_indices = @transform_4, window_bounds = array<i64: 9, 512>}, {transform_indices = @transform_5, window_bounds = array<i64: 2, 16, 256>}]} {
    %c0 = arith.constant 0 : index
    %c0_0 = arith.constant 0 : index
    %c0_1 = arith.constant 0 : index
    %0 = vector.load %arg1[%c0, %c0_0, %c0_1] : memref<2x8x256xf32, #tpu.memory_space<vmem>>, vector<1x8x256xf32>
    %1 = vector.shape_cast %0 : vector<1x8x256xf32> to vector<8x256xf32>
    %c0_2 = arith.constant 0 : index
    %c0_3 = arith.constant 0 : index
    %2 = vector.load %arg7[%c0_2, %c0_3] : memref<32x512xf32, #tpu.memory_space<vmem>>, vector<8x256xf32>
    tpu.vector_store %arg7[%c0_2, %c0_3], %1 {strides = array<i32>} : memref<32x512xf32, #tpu.memory_space<vmem>>, vector<8x256xf32>,
    %c1 = arith.constant 1 : index
    %c0_4 = arith.constant 0 : index
    %c0_5 = arith.constant 0 : index
    %3 = vector.load %arg1[%c1, %c0_4, %c0_5] : memref<2x8x256xf32, #tpu.memory_space<vmem>>, vector<1x8x256xf32>
    %4 = vector.shape_cast %3 : vector<1x8x256xf32> to vector<8x256xf32>
    %c0_6 = arith.constant 0 : index
    %c256 = arith.constant 256 : index
    %5 = vector.load %arg7[%c0_6, %c256] : memref<32x512xf32, #tpu.memory_space<vmem>>, vector<8x256xf32>
    tpu.vector_store %arg7[%c0_6, %c256], %4 {strides = array<i32>} : memref<32x512xf32, #tpu.memory_space<vmem>>, vector<8x256xf32>,
    %c0_7 = arith.constant 0 : index
    %c0_8 = arith.constant 0 : index
    %6 = vector.load %arg7[%c0_7, %c0_8] : memref<32x512xf32, #tpu.memory_space<vmem>>, vector<8x512xf32>
    %c0_9 = arith.constant 0 : index
    %c0_10 = arith.constant 0 : index
    %7 = vector.load %arg2[%c0_9, %c0_10] : memref<24x3xf32, #tpu.memory_space<vmem>>, vector<8x1xf32>
    %c0_11 = arith.constant 0 : index
    %c0_12 = arith.constant 0 : index
    %8 = vector.load %arg3[%c0_11, %c0_12] : memref<24x3xf32, #tpu.memory_space<vmem>>, vector<8x1xf32>
    %9 = vector.broadcast %7 : vector<8x1xf32> to vector<8x512xf32>
    %10 = arith.mulf %6, %9 : vector<8x512xf32>
    %11 = vector.broadcast %8 : vector<8x1xf32> to vector<8x512xf32>
    %12 = arith.addf %10, %11 : vector<8x512xf32>
    %cst = arith.constant 0.000000e+00 : f32
    %13 = vector.broadcast %cst : f32 to vector<8x512xf32>
    %14 = arith.maximumf %12, %13 : vector<8x512xf32>
    %cst_13 = arith.constant 0.000000e+00 : f32
    %15 = vector.broadcast %cst_13 : f32 to vector<8x512xf32>
    %c16_i32 = arith.constant 16 : i32
    %16 = tpu.dynamic_rotate %14 by %c16_i32 dim 1 : vector<8x512xf32>, i32 -> vector<8x512xf32>
    %c1_i32 = arith.constant 1 : i32
    %17 = tpu.dynamic_rotate %16 by %c1_i32 dim 1 : vector<8x512xf32>, i32 -> vector<8x512xf32>
    %c0_14 = arith.constant 0 : index
    %c0_15 = arith.constant 0 : index
    %18 = vector.load %arg5[%c0_14, %c0_15] : memref<9x512xf32, #tpu.memory_space<vmem>>, vector<1x512xf32>
    %19 = vector.broadcast %18 : vector<1x512xf32> to vector<8x512xf32>
    %20 = arith.mulf %17, %19 : vector<8x512xf32>
    %21 = arith.truncf %20 : vector<8x512xf32> to vector<8x512xbf16>
    %c0_16 = arith.constant 0 : index
    %c0_17 = arith.constant 0 : index
    %c0_18 = arith.constant 0 : index
    %c0_19 = arith.constant 0 : index
    %22 = vector.load %arg4[%c0_16, %c0_17, %c0_18, %c0_19] : memref<3x9x8x24xbf16, #tpu.memory_space<vmem>>, vector<1x1x8x24xbf16>
    %23 = vector.shape_cast %22 : vector<1x1x8x24xbf16> to vector<8x24xbf16>
    %24 = vector.extract_strided_slice %23 {offsets = [0, 0], sizes = [8, 8], strides = [1, 1]} : vector<8x24xbf16> to vector<8x8xbf16>
    %cst_20 = arith.constant dense<0.000000e+00> : vector<8x512xf32>
    %25 = tpu.matmul %24, %21, %cst_20 {dimension_numbers = #tpu.dot_dimension_numbers<[1], [0], [0], [1], [0, 0, 1, 1], [], []>} : vector<8x8xbf16>, vector<8x512xbf16>, vector<8x512xf32> -> vector<8x512xf32>
    %26 = arith.addf %15, %25 : vector<8x512xf32>
    %c1_21 = arith.constant 1 : index
    %c0_22 = arith.constant 0 : index
    %27 = vector.load %arg5[%c1_21, %c0_22] : memref<9x512xf32, #tpu.memory_space<vmem>>, vector<1x512xf32>
    %28 = vector.broadcast %27 : vector<1x512xf32> to vector<8x512xf32>
    %29 = arith.mulf %16, %28 : vector<8x512xf32>
    %30 = arith.truncf %29 : vector<8x512xf32> to vector<8x512xbf16>
    %c0_23 = arith.constant 0 : index
    %c1_24 = arith.constant 1 : index
    %c0_25 = arith.constant 0 : index
    %c0_26 = arith.constant 0 : index
    %31 = vector.load %arg4[%c0_23, %c1_24, %c0_25, %c0_26] : memref<3x9x8x24xbf16, #tpu.memory_space<vmem>>, vector<1x1x8x24xbf16>
    %32 = vector.shape_cast %31 : vector<1x1x8x24xbf16> to vector<8x24xbf16>
    %33 = vector.extract_strided_slice %32 {offsets = [0, 0], sizes = [8, 8], strides = [1, 1]} : vector<8x24xbf16> to vector<8x8xbf16>
    %cst_27 = arith.constant dense<0.000000e+00> : vector<8x512xf32>
    %34 = tpu.matmul %33, %30, %cst_27 {dimension_numbers = #tpu.dot_dimension_numbers<[1], [0], [0], [1], [0, 0, 1, 1], [], []>} : vector<8x8xbf16>, vector<8x512xbf16>, vector<8x512xf32> -> vector<8x512xf32>
    %35 = arith.addf %26, %34 : vector<8x512xf32>
    %c511_i32 = arith.constant 511 : i32
    %36 = tpu.dynamic_rotate %16 by %c511_i32 dim 1 : vector<8x512xf32>, i32 -> vector<8x512xf32>
    %c2 = arith.constant 2 : index
    %c0_28 = arith.constant 0 : index
    %37 = vector.load %arg5[%c2, %c0_28] : memref<9x512xf32, #tpu.memory_space<vmem>>, vector<1x512xf32>
    %38 = vector.broadcast %37 : vector<1x512xf32> to vector<8x512xf32>
    %39 = arith.mulf %36, %38 : vector<8x512xf32>
    %40 = arith.truncf %39 : vector<8x512xf32> to vector<8x512xbf16>
    %c0_29 = arith.constant 0 : index
    %c2_30 = arith.constant 2 : index
    %c0_31 = arith.constant 0 : index
    %c0_32 = arith.constant 0 : index
    %41 = vector.load %arg4[%c0_29, %c2_30, %c0_31, %c0_32] : memref<3x9x8x24xbf16, #tpu.memory_space<vmem>>, vector<1x1x8x24xbf16>
    %42 = vector.shape_cast %41 : vector<1x1x8x24xbf16> to vector<8x24xbf16>
    %43 = vector.extract_strided_slice %42 {offsets = [0, 0], sizes = [8, 8], strides = [1, 1]} : vector<8x24xbf16> to vector<8x8xbf16>
    %cst_33 = arith.constant dense<0.000000e+00> : vector<8x512xf32>
    %44 = tpu.matmul %43, %40, %cst_33 {dimension_numbers = #tpu.dot_dimension_numbers<[1], [0], [0], [1], [0, 0, 1, 1], [], []>} : vector<8x8xbf16>, vector<8x512xbf16>, vector<8x512xf32> -> vector<8x512xf32>
    %45 = arith.addf %35, %44 : vector<8x512xf32>
    %c1_i32_34 = arith.constant 1 : i32
    %46 = tpu.dynamic_rotate %14 by %c1_i32_34 dim 1 : vector<8x512xf32>, i32 -> vector<8x512xf32>
    %c3 = arith.constant 3 : index
    %c0_35 = arith.constant 0 : index
    %47 = vector.load %arg5[%c3, %c0_35] : memref<9x512xf32, #tpu.memory_space<vmem>>, vector<1x512xf32>
    %48 = vector.broadcast %47 : vector<1x512xf32> to vector<8x512xf32>
    %49 = arith.mulf %46, %48 : vector<8x512xf32>
    %50 = arith.truncf %49 : vector<8x512xf32> to vector<8x512xbf16>
    %c0_36 = arith.constant 0 : index
    %c3_37 = arith.constant 3 : index
    %c0_38 = arith.constant 0 : index
    %c0_39 = arith.constant 0 : index
    %51 = vector.load %arg4[%c0_36, %c3_37, %c0_38, %c0_39] : memref<3x9x8x24xbf16, #tpu.memory_space<vmem>>, vector<1x1x8x24xbf16>
    %52 = vector.shape_cast %51 : vector<1x1x8x24xbf16> to vector<8x24xbf16>
    %53 = vector.extract_strided_slice %52 {offsets = [0, 0], sizes = [8, 8], strides = [1, 1]} : vector<8x24xbf16> to vector<8x8xbf16>
    %cst_40 = arith.constant dense<0.000000e+00> : vector<8x512xf32>
    %54 = tpu.matmul %53, %50, %cst_40 {dimension_numbers = #tpu.dot_dimension_numbers<[1], [0], [0], [1], [0, 0, 1, 1], [], []>} : vector<8x8xbf16>, vector<8x512xbf16>, vector<8x512xf32> -> vector<8x512xf32>
    %55 = arith.addf %45, %54 : vector<8x512xf32>
    %c4 = arith.constant 4 : index
    %c0_41 = arith.constant 0 : index
    %56 = vector.load %arg5[%c4, %c0_41] : memref<9x512xf32, #tpu.memory_space<vmem>>, vector<1x512xf32>
    %57 = vector.broadcast %56 : vector<1x512xf32> to vector<8x512xf32>
    %58 = arith.mulf %14, %57 : vector<8x512xf32>
    %59 = arith.truncf %58 : vector<8x512xf32> to vector<8x512xbf16>
    %c0_42 = arith.constant 0 : index
    %c4_43 = arith.constant 4 : index
    %c0_44 = arith.constant 0 : index
    %c0_45 = arith.constant 0 : index
    %60 = vector.load %arg4[%c0_42, %c4_43, %c0_44, %c0_45] : memref<3x9x8x24xbf16, #tpu.memory_space<vmem>>, vector<1x1x8x24xbf16>
    %61 = vector.shape_cast %60 : vector<1x1x8x24xbf16> to vector<8x24xbf16>
    %62 = vector.extract_strided_slice %61 {offsets = [0, 0], sizes = [8, 8], strides = [1, 1]} : vector<8x24xbf16> to vector<8x8xbf16>
    %cst_46 = arith.constant dense<0.000000e+00> : vector<8x512xf32>
    %63 = tpu.matmul %62, %59, %cst_46 {dimension_numbers = #tpu.dot_dimension_numbers<[1], [0], [0], [1], [0, 0, 1, 1], [], []>} : vector<8x8xbf16>, vector<8x512xbf16>, vector<8x512xf32> -> vector<8x512xf32>
    %64 = arith.addf %55, %63 : vector<8x512xf32>
    %c511_i32_47 = arith.constant 511 : i32
    %65 = tpu.dynamic_rotate %14 by %c511_i32_47 dim 1 : vector<8x512xf32>, i32 -> vector<8x512xf32>
    %c5 = arith.constant 5 : index
    %c0_48 = arith.constant 0 : index
    %66 = vector.load %arg5[%c5, %c0_48] : memref<9x512xf32, #tpu.memory_space<vmem>>, vector<1x512xf32>
    %67 = vector.broadcast %66 : vector<1x512xf32> to vector<8x512xf32>
    %68 = arith.mulf %65, %67 : vector<8x512xf32>
    %69 = arith.truncf %68 : vector<8x512xf32> to vector<8x512xbf16>
    %c0_49 = arith.constant 0 : index
    %c5_50 = arith.constant 5 : index
    %c0_51 = arith.constant 0 : index
    %c0_52 = arith.constant 0 : index
    %70 = vector.load %arg4[%c0_49, %c5_50, %c0_51, %c0_52] : memref<3x9x8x24xbf16, #tpu.memory_space<vmem>>, vector<1x1x8x24xbf16>
    %71 = vector.shape_cast %70 : vector<1x1x8x24xbf16> to vector<8x24xbf16>
    %72 = vector.extract_strided_slice %71 {offsets = [0, 0], sizes = [8, 8], strides = [1, 1]} : vector<8x24xbf16> to vector<8x8xbf16>
    %cst_53 = arith.constant dense<0.000000e+00> : vector<8x512xf32>
    %73 = tpu.matmul %72, %69, %cst_53 {dimension_numbers = #tpu.dot_dimension_numbers<[1], [0], [0], [1], [0, 0, 1, 1], [], []>} : vector<8x8xbf16>, vector<8x512xbf16>, vector<8x512xf32> -> vector<8x512xf32>
    %74 = arith.addf %64, %73 : vector<8x512xf32>
    %c496_i32 = arith.constant 496 : i32
    %75 = tpu.dynamic_rotate %14 by %c496_i32 dim 1 : vector<8x512xf32>, i32 -> vector<8x512xf32>
    %c1_i32_54 = arith.constant 1 : i32
    %76 = tpu.dynamic_rotate %75 by %c1_i32_54 dim 1 : vector<8x512xf32>, i32 -> vector<8x512xf32>
    %c6 = arith.constant 6 : index
    %c0_55 = arith.constant 0 : index
    %77 = vector.load %arg5[%c6, %c0_55] : memref<9x512xf32, #tpu.memory_space<vmem>>, vector<1x512xf32>
    %78 = vector.broadcast %77 : vector<1x512xf32> to vector<8x512xf32>
    %79 = arith.mulf %76, %78 : vector<8x512xf32>
    %80 = arith.truncf %79 : vector<8x512xf32> to vector<8x512xbf16>
    %c0_56 = arith.constant 0 : index
    %c6_57 = arith.constant 6 : index
    %c0_58 = arith.constant 0 : index
    %c0_59 = arith.constant 0 : index
    %81 = vector.load %arg4[%c0_56, %c6_57, %c0_58, %c0_59] : memref<3x9x8x24xbf16, #tpu.memory_space<vmem>>, vector<1x1x8x24xbf16>
    %82 = vector.shape_cast %81 : vector<1x1x8x24xbf16> to vector<8x24xbf16>
    %83 = vector.extract_strided_slice %82 {offsets = [0, 0], sizes = [8, 8], strides = [1, 1]} : vector<8x24xbf16> to vector<8x8xbf16>
    %cst_60 = arith.constant dense<0.000000e+00> : vector<8x512xf32>
    %84 = tpu.matmul %83, %80, %cst_60 {dimension_numbers = #tpu.dot_dimension_numbers<[1], [0], [0], [1], [0, 0, 1, 1], [], []>} : vector<8x8xbf16>, vector<8x512xbf16>, vector<8x512xf32> -> vector<8x512xf32>
    %85 = arith.addf %74, %84 : vector<8x512xf32>
    %c7 = arith.constant 7 : index
    %c0_61 = arith.constant 0 : index
    %86 = vector.load %arg5[%c7, %c0_61] : memref<9x512xf32, #tpu.memory_space<vmem>>, vector<1x512xf32>
    %87 = vector.broadcast %86 : vector<1x512xf32> to vector<8x512xf32>
    %88 = arith.mulf %75, %87 : vector<8x512xf32>
    %89 = arith.truncf %88 : vector<8x512xf32> to vector<8x512xbf16>
    %c0_62 = arith.constant 0 : index
    %c7_63 = arith.constant 7 : index
    %c0_64 = arith.constant 0 : index
    %c0_65 = arith.constant 0 : index
    %90 = vector.load %arg4[%c0_62, %c7_63, %c0_64, %c0_65] : memref<3x9x8x24xbf16, #tpu.memory_space<vmem>>, vector<1x1x8x24xbf16>
    %91 = vector.shape_cast %90 : vector<1x1x8x24xbf16> to vector<8x24xbf16>
    %92 = vector.extract_strided_slice %91 {offsets = [0, 0], sizes = [8, 8], strides = [1, 1]} : vector<8x24xbf16> to vector<8x8xbf16>
    %cst_66 = arith.constant dense<0.000000e+00> : vector<8x512xf32>
    %93 = tpu.matmul %92, %89, %cst_66 {dimension_numbers = #tpu.dot_dimension_numbers<[1], [0], [0], [1], [0, 0, 1, 1], [], []>} : vector<8x8xbf16>, vector<8x512xbf16>, vector<8x512xf32> -> vector<8x512xf32>
    %94 = arith.addf %85, %93 : vector<8x512xf32>
    %c511_i32_67 = arith.constant 511 : i32
    %95 = tpu.dynamic_rotate %75 by %c511_i32_67 dim 1 : vector<8x512xf32>, i32 -> vector<8x512xf32>
    %c8 = arith.constant 8 : index
    %c0_68 = arith.constant 0 : index
    %96 = vector.load %arg5[%c8, %c0_68] : memref<9x512xf32, #tpu.memory_space<vmem>>, vector<1x512xf32>
    %97 = vector.broadcast %96 : vector<1x512xf32> to vector<8x512xf32>
    %98 = arith.mulf %95, %97 : vector<8x512xf32>
    %99 = arith.truncf %98 : vector<8x512xf32> to vector<8x512xbf16>
    %c0_69 = arith.constant 0 : index
    %c8_70 = arith.constant 8 : index
    %c0_71 = arith.constant 0 : index
    %c0_72 = arith.constant 0 : index
    %100 = vector.load %arg4[%c0_69, %c8_70, %c0_71, %c0_72] : memref<3x9x8x24xbf16, #tpu.memory_space<vmem>>, vector<1x1x8x24xbf16>
    %101 = vector.shape_cast %100 : vector<1x1x8x24xbf16> to vector<8x24xbf16>
    %102 = vector.extract_strided_slice %101 {offsets = [0, 0], sizes = [8, 8], strides = [1, 1]} : vector<8x24xbf16> to vector<8x8xbf16>
    %cst_73 = arith.constant dense<0.000000e+00> : vector<8x512xf32>
    %103 = tpu.matmul %102, %99, %cst_73 {dimension_numbers = #tpu.dot_dimension_numbers<[1], [0], [0], [1], [0, 0, 1, 1], [], []>} : vector<8x8xbf16>, vector<8x512xbf16>, vector<8x512xf32> -> vector<8x512xf32>
    %104 = arith.addf %94, %103 : vector<8x512xf32>
    %c8_74 = arith.constant 8 : index
    %c0_75 = arith.constant 0 : index
    %105 = vector.load %arg7[%c8_74, %c0_75] : memref<32x512xf32, #tpu.memory_space<vmem>>, vector<8x512xf32>
    tpu.vector_store %arg7[%c8_74, %c0_75], %104 {strides = array<i32>} : memref<32x512xf32, #tpu.memory_space<vmem>>, vector<8x512xf32>,
    %c0_76 = arith.constant 0 : index
    %c0_77 = arith.constant 0 : index
    %106 = vector.load %arg7[%c0_76, %c0_77] : memref<32x512xf32, #tpu.memory_space<vmem>>, vector<16x512xf32>
    %c0_78 = arith.constant 0 : index
    %c1_79 = arith.constant 1 : index
    %107 = vector.load %arg2[%c0_78, %c1_79] : memref<24x3xf32, #tpu.memory_space<vmem>>, vector<16x1xf32>
    %c0_80 = arith.constant 0 : index
    %c1_81 = arith.constant 1 : index
    %108 = vector.load %arg3[%c0_80, %c1_81] : memref<24x3xf32, #tpu.memory_space<vmem>>, vector<16x1xf32>
    %109 = vector.broadcast %107 : vector<16x1xf32> to vector<16x512xf32>
    %110 = arith.mulf %106, %109 : vector<16x512xf32>
    %111 = vector.broadcast %108 : vector<16x1xf32> to vector<16x512xf32>
    %112 = arith.addf %110, %111 : vector<16x512xf32>
    %cst_82 = arith.constant 0.000000e+00 : f32
    %113 = vector.broadcast %cst_82 : f32 to vector<16x512xf32>
    %114 = arith.maximumf %112, %113 : vector<16x512xf32>
    %cst_83 = arith.constant 0.000000e+00 : f32
    %115 = vector.broadcast %cst_83 : f32 to vector<8x512xf32>
    %c16_i32_84 = arith.constant 16 : i32
    %116 = tpu.dynamic_rotate %114 by %c16_i32_84 dim 1 : vector<16x512xf32>, i32 -> vector<16x512xf32>
    %c1_i32_85 = arith.constant 1 : i32
    %117 = tpu.dynamic_rotate %116 by %c1_i32_85 dim 1 : vector<16x512xf32>, i32 -> vector<16x512xf32>
    %c0_86 = arith.constant 0 : index
    %c0_87 = arith.constant 0 : index
    %118 = vector.load %arg5[%c0_86, %c0_87] : memref<9x512xf32, #tpu.memory_space<vmem>>, vector<1x512xf32>
    %119 = vector.broadcast %118 : vector<1x512xf32> to vector<16x512xf32>
    %120 = arith.mulf %117, %119 : vector<16x512xf32>
    %121 = arith.truncf %120 : vector<16x512xf32> to vector<16x512xbf16>
    %c1_88 = arith.constant 1 : index
    %c0_89 = arith.constant 0 : index
    %c0_90 = arith.constant 0 : index
    %c0_91 = arith.constant 0 : index
    %122 = vector.load %arg4[%c1_88, %c0_89, %c0_90, %c0_91] : memref<3x9x8x24xbf16, #tpu.memory_space<vmem>>, vector<1x1x8x24xbf16>
    %123 = vector.shape_cast %122 : vector<1x1x8x24xbf16> to vector<8x24xbf16>
    %124 = vector.extract_strided_slice %123 {offsets = [0, 0], sizes = [8, 16], strides = [1, 1]} : vector<8x24xbf16> to vector<8x16xbf16>
    %cst_92 = arith.constant dense<0.000000e+00> : vector<8x512xf32>
    %125 = tpu.matmul %124, %121, %cst_92 {dimension_numbers = #tpu.dot_dimension_numbers<[1], [0], [0], [1], [0, 0, 1, 1], [], []>} : vector<8x16xbf16>, vector<16x512xbf16>, vector<8x512xf32> -> vector<8x512xf32>
    %126 = arith.addf %115, %125 : vector<8x512xf32>
    %c1_93 = arith.constant 1 : index
    %c0_94 = arith.constant 0 : index
    %127 = vector.load %arg5[%c1_93, %c0_94] : memref<9x512xf32, #tpu.memory_space<vmem>>, vector<1x512xf32>
    %128 = vector.broadcast %127 : vector<1x512xf32> to vector<16x512xf32>
    %129 = arith.mulf %116, %128 : vector<16x512xf32>
    %130 = arith.truncf %129 : vector<16x512xf32> to vector<16x512xbf16>
    %c1_95 = arith.constant 1 : index
    %c1_96 = arith.constant 1 : index
    %c0_97 = arith.constant 0 : index
    %c0_98 = arith.constant 0 : index
    %131 = vector.load %arg4[%c1_95, %c1_96, %c0_97, %c0_98] : memref<3x9x8x24xbf16, #tpu.memory_space<vmem>>, vector<1x1x8x24xbf16>
    %132 = vector.shape_cast %131 : vector<1x1x8x24xbf16> to vector<8x24xbf16>
    %133 = vector.extract_strided_slice %132 {offsets = [0, 0], sizes = [8, 16], strides = [1, 1]} : vector<8x24xbf16> to vector<8x16xbf16>
    %cst_99 = arith.constant dense<0.000000e+00> : vector<8x512xf32>
    %134 = tpu.matmul %133, %130, %cst_99 {dimension_numbers = #tpu.dot_dimension_numbers<[1], [0], [0], [1], [0, 0, 1, 1], [], []>} : vector<8x16xbf16>, vector<16x512xbf16>, vector<8x512xf32> -> vector<8x512xf32>
    %135 = arith.addf %126, %134 : vector<8x512xf32>
    %c511_i32_100 = arith.constant 511 : i32
    %136 = tpu.dynamic_rotate %116 by %c511_i32_100 dim 1 : vector<16x512xf32>, i32 -> vector<16x512xf32>
    %c2_101 = arith.constant 2 : index
    %c0_102 = arith.constant 0 : index
    %137 = vector.load %arg5[%c2_101, %c0_102] : memref<9x512xf32, #tpu.memory_space<vmem>>, vector<1x512xf32>
    %138 = vector.broadcast %137 : vector<1x512xf32> to vector<16x512xf32>
    %139 = arith.mulf %136, %138 : vector<16x512xf32>
    %140 = arith.truncf %139 : vector<16x512xf32> to vector<16x512xbf16>
    %c1_103 = arith.constant 1 : index
    %c2_104 = arith.constant 2 : index
    %c0_105 = arith.constant 0 : index
    %c0_106 = arith.constant 0 : index
    %141 = vector.load %arg4[%c1_103, %c2_104, %c0_105, %c0_106] : memref<3x9x8x24xbf16, #tpu.memory_space<vmem>>, vector<1x1x8x24xbf16>
    %142 = vector.shape_cast %141 : vector<1x1x8x24xbf16> to vector<8x24xbf16>
    %143 = vector.extract_strided_slice %142 {offsets = [0, 0], sizes = [8, 16], strides = [1, 1]} : vector<8x24xbf16> to vector<8x16xbf16>
    %cst_107 = arith.constant dense<0.000000e+00> : vector<8x512xf32>
    %144 = tpu.matmul %143, %140, %cst_107 {dimension_numbers = #tpu.dot_dimension_numbers<[1], [0], [0], [1], [0, 0, 1, 1], [], []>} : vector<8x16xbf16>, vector<16x512xbf16>, vector<8x512xf32> -> vector<8x512xf32>
    %145 = arith.addf %135, %144 : vector<8x512xf32>
    %c1_i32_108 = arith.constant 1 : i32
    %146 = tpu.dynamic_rotate %114 by %c1_i32_108 dim 1 : vector<16x512xf32>, i32 -> vector<16x512xf32>
    %c3_109 = arith.constant 3 : index
    %c0_110 = arith.constant 0 : index
    %147 = vector.load %arg5[%c3_109, %c0_110] : memref<9x512xf32, #tpu.memory_space<vmem>>, vector<1x512xf32>
    %148 = vector.broadcast %147 : vector<1x512xf32> to vector<16x512xf32>
    %149 = arith.mulf %146, %148 : vector<16x512xf32>
    %150 = arith.truncf %149 : vector<16x512xf32> to vector<16x512xbf16>
    %c1_111 = arith.constant 1 : index
    %c3_112 = arith.constant 3 : index
    %c0_113 = arith.constant 0 : index
    %c0_114 = arith.constant 0 : index
    %151 = vector.load %arg4[%c1_111, %c3_112, %c0_113, %c0_114] : memref<3x9x8x24xbf16, #tpu.memory_space<vmem>>, vector<1x1x8x24xbf16>
    %152 = vector.shape_cast %151 : vector<1x1x8x24xbf16> to vector<8x24xbf16>
    %153 = vector.extract_strided_slice %152 {offsets = [0, 0], sizes = [8, 16], strides = [1, 1]} : vector<8x24xbf16> to vector<8x16xbf16>
    %cst_115 = arith.constant dense<0.000000e+00> : vector<8x512xf32>
    %154 = tpu.matmul %153, %150, %cst_115 {dimension_numbers = #tpu.dot_dimension_numbers<[1], [0], [0], [1], [0, 0, 1, 1], [], []>} : vector<8x16xbf16>, vector<16x512xbf16>, vector<8x512xf32> -> vector<8x512xf32>
    %155 = arith.addf %145, %154 : vector<8x512xf32>
    %c4_116 = arith.constant 4 : index
    %c0_117 = arith.constant 0 : index
    %156 = vector.load %arg5[%c4_116, %c0_117] : memref<9x512xf32, #tpu.memory_space<vmem>>, vector<1x512xf32>
    %157 = vector.broadcast %156 : vector<1x512xf32> to vector<16x512xf32>
    %158 = arith.mulf %114, %157 : vector<16x512xf32>
    %159 = arith.truncf %158 : vector<16x512xf32> to vector<16x512xbf16>
    %c1_118 = arith.constant 1 : index
    %c4_119 = arith.constant 4 : index
    %c0_120 = arith.constant 0 : index
    %c0_121 = arith.constant 0 : index
    %160 = vector.load %arg4[%c1_118, %c4_119, %c0_120, %c0_121] : memref<3x9x8x24xbf16, #tpu.memory_space<vmem>>, vector<1x1x8x24xbf16>
    %161 = vector.shape_cast %160 : vector<1x1x8x24xbf16> to vector<8x24xbf16>
    %162 = vector.extract_strided_slice %161 {offsets = [0, 0], sizes = [8, 16], strides = [1, 1]} : vector<8x24xbf16> to vector<8x16xbf16>
    %cst_122 = arith.constant dense<0.000000e+00> : vector<8x512xf32>
    %163 = tpu.matmul %162, %159, %cst_122 {dimension_numbers = #tpu.dot_dimension_numbers<[1], [0], [0], [1], [0, 0, 1, 1], [], []>} : vector<8x16xbf16>, vector<16x512xbf16>, vector<8x512xf32> -> vector<8x512xf32>
    %164 = arith.addf %155, %163 : vector<8x512xf32>
    %c511_i32_123 = arith.constant 511 : i32
    %165 = tpu.dynamic_rotate %114 by %c511_i32_123 dim 1 : vector<16x512xf32>, i32 -> vector<16x512xf32>
    %c5_124 = arith.constant 5 : index
    %c0_125 = arith.constant 0 : index
    %166 = vector.load %arg5[%c5_124, %c0_125] : memref<9x512xf32, #tpu.memory_space<vmem>>, vector<1x512xf32>
    %167 = vector.broadcast %166 : vector<1x512xf32> to vector<16x512xf32>
    %168 = arith.mulf %165, %167 : vector<16x512xf32>
    %169 = arith.truncf %168 : vector<16x512xf32> to vector<16x512xbf16>
    %c1_126 = arith.constant 1 : index
    %c5_127 = arith.constant 5 : index
    %c0_128 = arith.constant 0 : index
    %c0_129 = arith.constant 0 : index
    %170 = vector.load %arg4[%c1_126, %c5_127, %c0_128, %c0_129] : memref<3x9x8x24xbf16, #tpu.memory_space<vmem>>, vector<1x1x8x24xbf16>
    %171 = vector.shape_cast %170 : vector<1x1x8x24xbf16> to vector<8x24xbf16>
    %172 = vector.extract_strided_slice %171 {offsets = [0, 0], sizes = [8, 16], strides = [1, 1]} : vector<8x24xbf16> to vector<8x16xbf16>
    %cst_130 = arith.constant dense<0.000000e+00> : vector<8x512xf32>
    %173 = tpu.matmul %172, %169, %cst_130 {dimension_numbers = #tpu.dot_dimension_numbers<[1], [0], [0], [1], [0, 0, 1, 1], [], []>} : vector<8x16xbf16>, vector<16x512xbf16>, vector<8x512xf32> -> vector<8x512xf32>
    %174 = arith.addf %164, %173 : vector<8x512xf32>
    %c496_i32_131 = arith.constant 496 : i32
    %175 = tpu.dynamic_rotate %114 by %c496_i32_131 dim 1 : vector<16x512xf32>, i32 -> vector<16x512xf32>
    %c1_i32_132 = arith.constant 1 : i32
    %176 = tpu.dynamic_rotate %175 by %c1_i32_132 dim 1 : vector<16x512xf32>, i32 -> vector<16x512xf32>
    %c6_133 = arith.constant 6 : index
    %c0_134 = arith.constant 0 : index
    %177 = vector.load %arg5[%c6_133, %c0_134] : memref<9x512xf32, #tpu.memory_space<vmem>>, vector<1x512xf32>
    %178 = vector.broadcast %177 : vector<1x512xf32> to vector<16x512xf32>
    %179 = arith.mulf %176, %178 : vector<16x512xf32>
    %180 = arith.truncf %179 : vector<16x512xf32> to vector<16x512xbf16>
    %c1_135 = arith.constant 1 : index
    %c6_136 = arith.constant 6 : index
    %c0_137 = arith.constant 0 : index
    %c0_138 = arith.constant 0 : index
    %181 = vector.load %arg4[%c1_135, %c6_136, %c0_137, %c0_138] : memref<3x9x8x24xbf16, #tpu.memory_space<vmem>>, vector<1x1x8x24xbf16>
    %182 = vector.shape_cast %181 : vector<1x1x8x24xbf16> to vector<8x24xbf16>
    %183 = vector.extract_strided_slice %182 {offsets = [0, 0], sizes = [8, 16], strides = [1, 1]} : vector<8x24xbf16> to vector<8x16xbf16>
    %cst_139 = arith.constant dense<0.000000e+00> : vector<8x512xf32>
    %184 = tpu.matmul %183, %180, %cst_139 {dimension_numbers = #tpu.dot_dimension_numbers<[1], [0], [0], [1], [0, 0, 1, 1], [], []>} : vector<8x16xbf16>, vector<16x512xbf16>, vector<8x512xf32> -> vector<8x512xf32>
    %185 = arith.addf %174, %184 : vector<8x512xf32>
    %c7_140 = arith.constant 7 : index
    %c0_141 = arith.constant 0 : index
    %186 = vector.load %arg5[%c7_140, %c0_141] : memref<9x512xf32, #tpu.memory_space<vmem>>, vector<1x512xf32>
    %187 = vector.broadcast %186 : vector<1x512xf32> to vector<16x512xf32>
    %188 = arith.mulf %175, %187 : vector<16x512xf32>
    %189 = arith.truncf %188 : vector<16x512xf32> to vector<16x512xbf16>
    %c1_142 = arith.constant 1 : index
    %c7_143 = arith.constant 7 : index
    %c0_144 = arith.constant 0 : index
    %c0_145 = arith.constant 0 : index
    %190 = vector.load %arg4[%c1_142, %c7_143, %c0_144, %c0_145] : memref<3x9x8x24xbf16, #tpu.memory_space<vmem>>, vector<1x1x8x24xbf16>
    %191 = vector.shape_cast %190 : vector<1x1x8x24xbf16> to vector<8x24xbf16>
    %192 = vector.extract_strided_slice %191 {offsets = [0, 0], sizes = [8, 16], strides = [1, 1]} : vector<8x24xbf16> to vector<8x16xbf16>
    %cst_146 = arith.constant dense<0.000000e+00> : vector<8x512xf32>
    %193 = tpu.matmul %192, %189, %cst_146 {dimension_numbers = #tpu.dot_dimension_numbers<[1], [0], [0], [1], [0, 0, 1, 1], [], []>} : vector<8x16xbf16>, vector<16x512xbf16>, vector<8x512xf32> -> vector<8x512xf32>
    %194 = arith.addf %185, %193 : vector<8x512xf32>
    %c511_i32_147 = arith.constant 511 : i32
    %195 = tpu.dynamic_rotate %175 by %c511_i32_147 dim 1 : vector<16x512xf32>, i32 -> vector<16x512xf32>
    %c8_148 = arith.constant 8 : index
    %c0_149 = arith.constant 0 : index
    %196 = vector.load %arg5[%c8_148, %c0_149] : memref<9x512xf32, #tpu.memory_space<vmem>>, vector<1x512xf32>
    %197 = vector.broadcast %196 : vector<1x512xf32> to vector<16x512xf32>
    %198 = arith.mulf %195, %197 : vector<16x512xf32>
    %199 = arith.truncf %198 : vector<16x512xf32> to vector<16x512xbf16>
    %c1_150 = arith.constant 1 : index
    %c8_151 = arith.constant 8 : index
    %c0_152 = arith.constant 0 : index
    %c0_153 = arith.constant 0 : index
    %200 = vector.load %arg4[%c1_150, %c8_151, %c0_152, %c0_153] : memref<3x9x8x24xbf16, #tpu.memory_space<vmem>>, vector<1x1x8x24xbf16>
    %201 = vector.shape_cast %200 : vector<1x1x8x24xbf16> to vector<8x24xbf16>
    %202 = vector.extract_strided_slice %201 {offsets = [0, 0], sizes = [8, 16], strides = [1, 1]} : vector<8x24xbf16> to vector<8x16xbf16>
    %cst_154 = arith.constant dense<0.000000e+00> : vector<8x512xf32>
    %203 = tpu.matmul %202, %199, %cst_154 {dimension_numbers = #tpu.dot_dimension_numbers<[1], [0], [0], [1], [0, 0, 1, 1], [], []>} : vector<8x16xbf16>, vector<16x512xbf16>, vector<8x512xf32> -> vector<8x512xf32>
    %204 = arith.addf %194, %203 : vector<8x512xf32>
    %c16 = arith.constant 16 : index
    %c0_155 = arith.constant 0 : index
    %205 = vector.load %arg7[%c16, %c0_155] : memref<32x512xf32, #tpu.memory_space<vmem>>, vector<8x512xf32>
    tpu.vector_store %arg7[%c16, %c0_155], %204 {strides = array<i32>} : memref<32x512xf32, #tpu.memory_space<vmem>>, vector<8x512xf32>,
    %c0_156 = arith.constant 0 : index
    %c0_157 = arith.constant 0 : index
    %206 = vector.load %arg7[%c0_156, %c0_157] : memref<32x512xf32, #tpu.memory_space<vmem>>, vector<24x512xf32>
    %c0_158 = arith.constant 0 : index
    %c2_159 = arith.constant 2 : index
    %207 = vector.load %arg2[%c0_158, %c2_159] : memref<24x3xf32, #tpu.memory_space<vmem>>, vector<24x1xf32>
    %c0_160 = arith.constant 0 : index
    %c2_161 = arith.constant 2 : index
    %208 = vector.load %arg3[%c0_160, %c2_161] : memref<24x3xf32, #tpu.memory_space<vmem>>, vector<24x1xf32>
    %209 = vector.broadcast %207 : vector<24x1xf32> to vector<24x512xf32>
    %210 = arith.mulf %206, %209 : vector<24x512xf32>
    %211 = vector.broadcast %208 : vector<24x1xf32> to vector<24x512xf32>
    %212 = arith.addf %210, %211 : vector<24x512xf32>
    %cst_162 = arith.constant 0.000000e+00 : f32
    %213 = vector.broadcast %cst_162 : f32 to vector<24x512xf32>
    %214 = arith.maximumf %212, %213 : vector<24x512xf32>
    %cst_163 = arith.constant 0.000000e+00 : f32
    %215 = vector.broadcast %cst_163 : f32 to vector<8x512xf32>
    %c16_i32_164 = arith.constant 16 : i32
    %216 = tpu.dynamic_rotate %214 by %c16_i32_164 dim 1 : vector<24x512xf32>, i32 -> vector<24x512xf32>
    %c1_i32_165 = arith.constant 1 : i32
    %217 = tpu.dynamic_rotate %216 by %c1_i32_165 dim 1 : vector<24x512xf32>, i32 -> vector<24x512xf32>
    %c0_166 = arith.constant 0 : index
    %c0_167 = arith.constant 0 : index
    %218 = vector.load %arg5[%c0_166, %c0_167] : memref<9x512xf32, #tpu.memory_space<vmem>>, vector<1x512xf32>
    %219 = vector.broadcast %218 : vector<1x512xf32> to vector<24x512xf32>
    %220 = arith.mulf %217, %219 : vector<24x512xf32>
    %221 = arith.truncf %220 : vector<24x512xf32> to vector<24x512xbf16>
    %c2_168 = arith.constant 2 : index
    %c0_169 = arith.constant 0 : index
    %c0_170 = arith.constant 0 : index
    %c0_171 = arith.constant 0 : index
    %222 = vector.load %arg4[%c2_168, %c0_169, %c0_170, %c0_171] : memref<3x9x8x24xbf16, #tpu.memory_space<vmem>>, vector<1x1x8x24xbf16>
    %223 = vector.shape_cast %222 : vector<1x1x8x24xbf16> to vector<8x24xbf16>
    %cst_172 = arith.constant dense<0.000000e+00> : vector<8x512xf32>
    %224 = tpu.matmul %223, %221, %cst_172 {dimension_numbers = #tpu.dot_dimension_numbers<[1], [0], [0], [1], [0, 0, 1, 1], [], []>} : vector<8x24xbf16>, vector<24x512xbf16>, vector<8x512xf32> -> vector<8x512xf32>
    %225 = arith.addf %215, %224 : vector<8x512xf32>
    %c1_173 = arith.constant 1 : index
    %c0_174 = arith.constant 0 : index
    %226 = vector.load %arg5[%c1_173, %c0_174] : memref<9x512xf32, #tpu.memory_space<vmem>>, vector<1x512xf32>
    %227 = vector.broadcast %226 : vector<1x512xf32> to vector<24x512xf32>
    %228 = arith.mulf %216, %227 : vector<24x512xf32>
    %229 = arith.truncf %228 : vector<24x512xf32> to vector<24x512xbf16>
    %c2_175 = arith.constant 2 : index
    %c1_176 = arith.constant 1 : index
    %c0_177 = arith.constant 0 : index
    %c0_178 = arith.constant 0 : index
    %230 = vector.load %arg4[%c2_175, %c1_176, %c0_177, %c0_178] : memref<3x9x8x24xbf16, #tpu.memory_space<vmem>>, vector<1x1x8x24xbf16>
    %231 = vector.shape_cast %230 : vector<1x1x8x24xbf16> to vector<8x24xbf16>
    %cst_179 = arith.constant dense<0.000000e+00> : vector<8x512xf32>
    %232 = tpu.matmul %231, %229, %cst_179 {dimension_numbers = #tpu.dot_dimension_numbers<[1], [0], [0], [1], [0, 0, 1, 1], [], []>} : vector<8x24xbf16>, vector<24x512xbf16>, vector<8x512xf32> -> vector<8x512xf32>
    %233 = arith.addf %225, %232 : vector<8x512xf32>
    %c511_i32_180 = arith.constant 511 : i32
    %234 = tpu.dynamic_rotate %216 by %c511_i32_180 dim 1 : vector<24x512xf32>, i32 -> vector<24x512xf32>
    %c2_181 = arith.constant 2 : index
    %c0_182 = arith.constant 0 : index
    %235 = vector.load %arg5[%c2_181, %c0_182] : memref<9x512xf32, #tpu.memory_space<vmem>>, vector<1x512xf32>
    %236 = vector.broadcast %235 : vector<1x512xf32> to vector<24x512xf32>
    %237 = arith.mulf %234, %236 : vector<24x512xf32>
    %238 = arith.truncf %237 : vector<24x512xf32> to vector<24x512xbf16>
    %c2_183 = arith.constant 2 : index
    %c2_184 = arith.constant 2 : index
    %c0_185 = arith.constant 0 : index
    %c0_186 = arith.constant 0 : index
    %239 = vector.load %arg4[%c2_183, %c2_184, %c0_185, %c0_186] : memref<3x9x8x24xbf16, #tpu.memory_space<vmem>>, vector<1x1x8x24xbf16>
    %240 = vector.shape_cast %239 : vector<1x1x8x24xbf16> to vector<8x24xbf16>
    %cst_187 = arith.constant dense<0.000000e+00> : vector<8x512xf32>
    %241 = tpu.matmul %240, %238, %cst_187 {dimension_numbers = #tpu.dot_dimension_numbers<[1], [0], [0], [1], [0, 0, 1, 1], [], []>} : vector<8x24xbf16>, vector<24x512xbf16>, vector<8x512xf32> -> vector<8x512xf32>
    %242 = arith.addf %233, %241 : vector<8x512xf32>
    %c1_i32_188 = arith.constant 1 : i32
    %243 = tpu.dynamic_rotate %214 by %c1_i32_188 dim 1 : vector<24x512xf32>, i32 -> vector<24x512xf32>
    %c3_189 = arith.constant 3 : index
    %c0_190 = arith.constant 0 : index
    %244 = vector.load %arg5[%c3_189, %c0_190] : memref<9x512xf32, #tpu.memory_space<vmem>>, vector<1x512xf32>
    %245 = vector.broadcast %244 : vector<1x512xf32> to vector<24x512xf32>
    %246 = arith.mulf %243, %245 : vector<24x512xf32>
    %247 = arith.truncf %246 : vector<24x512xf32> to vector<24x512xbf16>
    %c2_191 = arith.constant 2 : index
    %c3_192 = arith.constant 3 : index
    %c0_193 = arith.constant 0 : index
    %c0_194 = arith.constant 0 : index
    %248 = vector.load %arg4[%c2_191, %c3_192, %c0_193, %c0_194] : memref<3x9x8x24xbf16, #tpu.memory_space<vmem>>, vector<1x1x8x24xbf16>
    %249 = vector.shape_cast %248 : vector<1x1x8x24xbf16> to vector<8x24xbf16>
    %cst_195 = arith.constant dense<0.000000e+00> : vector<8x512xf32>
    %250 = tpu.matmul %249, %247, %cst_195 {dimension_numbers = #tpu.dot_dimension_numbers<[1], [0], [0], [1], [0, 0, 1, 1], [], []>} : vector<8x24xbf16>, vector<24x512xbf16>, vector<8x512xf32> -> vector<8x512xf32>
    %251 = arith.addf %242, %250 : vector<8x512xf32>
    %c4_196 = arith.constant 4 : index
    %c0_197 = arith.constant 0 : index
    %252 = vector.load %arg5[%c4_196, %c0_197] : memref<9x512xf32, #tpu.memory_space<vmem>>, vector<1x512xf32>
    %253 = vector.broadcast %252 : vector<1x512xf32> to vector<24x512xf32>
    %254 = arith.mulf %214, %253 : vector<24x512xf32>
    %255 = arith.truncf %254 : vector<24x512xf32> to vector<24x512xbf16>
    %c2_198 = arith.constant 2 : index
    %c4_199 = arith.constant 4 : index
    %c0_200 = arith.constant 0 : index
    %c0_201 = arith.constant 0 : index
    %256 = vector.load %arg4[%c2_198, %c4_199, %c0_200, %c0_201] : memref<3x9x8x24xbf16, #tpu.memory_space<vmem>>, vector<1x1x8x24xbf16>
    %257 = vector.shape_cast %256 : vector<1x1x8x24xbf16> to vector<8x24xbf16>
    %cst_202 = arith.constant dense<0.000000e+00> : vector<8x512xf32>
    %258 = tpu.matmul %257, %255, %cst_202 {dimension_numbers = #tpu.dot_dimension_numbers<[1], [0], [0], [1], [0, 0, 1, 1], [], []>} : vector<8x24xbf16>, vector<24x512xbf16>, vector<8x512xf32> -> vector<8x512xf32>
    %259 = arith.addf %251, %258 : vector<8x512xf32>
    %c511_i32_203 = arith.constant 511 : i32
    %260 = tpu.dynamic_rotate %214 by %c511_i32_203 dim 1 : vector<24x512xf32>, i32 -> vector<24x512xf32>
    %c5_204 = arith.constant 5 : index
    %c0_205 = arith.constant 0 : index
    %261 = vector.load %arg5[%c5_204, %c0_205] : memref<9x512xf32, #tpu.memory_space<vmem>>, vector<1x512xf32>
    %262 = vector.broadcast %261 : vector<1x512xf32> to vector<24x512xf32>
    %263 = arith.mulf %260, %262 : vector<24x512xf32>
    %264 = arith.truncf %263 : vector<24x512xf32> to vector<24x512xbf16>
    %c2_206 = arith.constant 2 : index
    %c5_207 = arith.constant 5 : index
    %c0_208 = arith.constant 0 : index
    %c0_209 = arith.constant 0 : index
    %265 = vector.load %arg4[%c2_206, %c5_207, %c0_208, %c0_209] : memref<3x9x8x24xbf16, #tpu.memory_space<vmem>>, vector<1x1x8x24xbf16>
    %266 = vector.shape_cast %265 : vector<1x1x8x24xbf16> to vector<8x24xbf16>
    %cst_210 = arith.constant dense<0.000000e+00> : vector<8x512xf32>
    %267 = tpu.matmul %266, %264, %cst_210 {dimension_numbers = #tpu.dot_dimension_numbers<[1], [0], [0], [1], [0, 0, 1, 1], [], []>} : vector<8x24xbf16>, vector<24x512xbf16>, vector<8x512xf32> -> vector<8x512xf32>
    %268 = arith.addf %259, %267 : vector<8x512xf32>
    %c496_i32_211 = arith.constant 496 : i32
    %269 = tpu.dynamic_rotate %214 by %c496_i32_211 dim 1 : vector<24x512xf32>, i32 -> vector<24x512xf32>
    %c1_i32_212 = arith.constant 1 : i32
    %270 = tpu.dynamic_rotate %269 by %c1_i32_212 dim 1 : vector<24x512xf32>, i32 -> vector<24x512xf32>
    %c6_213 = arith.constant 6 : index
    %c0_214 = arith.constant 0 : index
    %271 = vector.load %arg5[%c6_213, %c0_214] : memref<9x512xf32, #tpu.memory_space<vmem>>, vector<1x512xf32>
    %272 = vector.broadcast %271 : vector<1x512xf32> to vector<24x512xf32>
    %273 = arith.mulf %270, %272 : vector<24x512xf32>
    %274 = arith.truncf %273 : vector<24x512xf32> to vector<24x512xbf16>
    %c2_215 = arith.constant 2 : index
    %c6_216 = arith.constant 6 : index
    %c0_217 = arith.constant 0 : index
    %c0_218 = arith.constant 0 : index
    %275 = vector.load %arg4[%c2_215, %c6_216, %c0_217, %c0_218] : memref<3x9x8x24xbf16, #tpu.memory_space<vmem>>, vector<1x1x8x24xbf16>
    %276 = vector.shape_cast %275 : vector<1x1x8x24xbf16> to vector<8x24xbf16>
    %cst_219 = arith.constant dense<0.000000e+00> : vector<8x512xf32>
    %277 = tpu.matmul %276, %274, %cst_219 {dimension_numbers = #tpu.dot_dimension_numbers<[1], [0], [0], [1], [0, 0, 1, 1], [], []>} : vector<8x24xbf16>, vector<24x512xbf16>, vector<8x512xf32> -> vector<8x512xf32>
    %278 = arith.addf %268, %277 : vector<8x512xf32>
    %c7_220 = arith.constant 7 : index
    %c0_221 = arith.constant 0 : index
    %279 = vector.load %arg5[%c7_220, %c0_221] : memref<9x512xf32, #tpu.memory_space<vmem>>, vector<1x512xf32>
    %280 = vector.broadcast %279 : vector<1x512xf32> to vector<24x512xf32>
    %281 = arith.mulf %269, %280 : vector<24x512xf32>
    %282 = arith.truncf %281 : vector<24x512xf32> to vector<24x512xbf16>
    %c2_222 = arith.constant 2 : index
    %c7_223 = arith.constant 7 : index
    %c0_224 = arith.constant 0 : index
    %c0_225 = arith.constant 0 : index
    %283 = vector.load %arg4[%c2_222, %c7_223, %c0_224, %c0_225] : memref<3x9x8x24xbf16, #tpu.memory_space<vmem>>, vector<1x1x8x24xbf16>
    %284 = vector.shape_cast %283 : vector<1x1x8x24xbf16> to vector<8x24xbf16>
    %cst_226 = arith.constant dense<0.000000e+00> : vector<8x512xf32>
    %285 = tpu.matmul %284, %282, %cst_226 {dimension_numbers = #tpu.dot_dimension_numbers<[1], [0], [0], [1], [0, 0, 1, 1], [], []>} : vector<8x24xbf16>, vector<24x512xbf16>, vector<8x512xf32> -> vector<8x512xf32>
    %286 = arith.addf %278, %285 : vector<8x512xf32>
    %c511_i32_227 = arith.constant 511 : i32
    %287 = tpu.dynamic_rotate %269 by %c511_i32_227 dim 1 : vector<24x512xf32>, i32 -> vector<24x512xf32>
    %c8_228 = arith.constant 8 : index
    %c0_229 = arith.constant 0 : index
    %288 = vector.load %arg5[%c8_228, %c0_229] : memref<9x512xf32, #tpu.memory_space<vmem>>, vector<1x512xf32>
    %289 = vector.broadcast %288 : vector<1x512xf32> to vector<24x512xf32>
    %290 = arith.mulf %287, %289 : vector<24x512xf32>
    %291 = arith.truncf %290 : vector<24x512xf32> to vector<24x512xbf16>
    %c2_230 = arith.constant 2 : index
    %c8_231 = arith.constant 8 : index
    %c0_232 = arith.constant 0 : index
    %c0_233 = arith.constant 0 : index
    %292 = vector.load %arg4[%c2_230, %c8_231, %c0_232, %c0_233] : memref<3x9x8x24xbf16, #tpu.memory_space<vmem>>, vector<1x1x8x24xbf16>
    %293 = vector.shape_cast %292 : vector<1x1x8x24xbf16> to vector<8x24xbf16>
    %cst_234 = arith.constant dense<0.000000e+00> : vector<8x512xf32>
    %294 = tpu.matmul %293, %291, %cst_234 {dimension_numbers = #tpu.dot_dimension_numbers<[1], [0], [0], [1], [0, 0, 1, 1], [], []>} : vector<8x24xbf16>, vector<24x512xbf16>, vector<8x512xf32> -> vector<8x512xf32>
    %295 = arith.addf %286, %294 : vector<8x512xf32>
    %c24 = arith.constant 24 : index
    %c0_235 = arith.constant 0 : index
    %296 = vector.load %arg7[%c24, %c0_235] : memref<32x512xf32, #tpu.memory_space<vmem>>, vector<8x512xf32>
    tpu.vector_store %arg7[%c24, %c0_235], %295 {strides = array<i32>} : memref<32x512xf32, #tpu.memory_space<vmem>>, vector<8x512xf32>,
    %c0_236 = arith.constant 0 : index
    %c0_237 = arith.constant 0 : index
    %297 = vector.load %arg7[%c0_236, %c0_237] : memref<32x512xf32, #tpu.memory_space<vmem>>, vector<4x256xf32>
    %c0_238 = arith.constant 0 : index
    %c0_239 = arith.constant 0 : index
    %c0_240 = arith.constant 0 : index
    %298 = vector.load %arg6[%c0_238, %c0_239, %c0_240] : memref<2x16x256xf32, #tpu.memory_space<vmem>>, vector<1x4x256xf32>
    %299 = vector.shape_cast %298 : vector<1x4x256xf32> to vector<4x256xf32>
    %300 = vector.shape_cast %297 : vector<4x256xf32> to vector<1x4x256xf32>
    tpu.vector_store %arg6[%c0_238, %c0_239, %c0_240], %300 {strides = array<i32>} : memref<2x16x256xf32, #tpu.memory_space<vmem>>, vector<1x4x256xf32>,
    %c8_241 = arith.constant 8 : index
    %c0_242 = arith.constant 0 : index
    %301 = vector.load %arg7[%c8_241, %c0_242] : memref<32x512xf32, #tpu.memory_space<vmem>>, vector<4x256xf32>
    %c0_243 = arith.constant 0 : index
    %c4_244 = arith.constant 4 : index
    %c0_245 = arith.constant 0 : index
    %302 = vector.load %arg6[%c0_243, %c4_244, %c0_245] : memref<2x16x256xf32, #tpu.memory_space<vmem>>, vector<1x4x256xf32>
    %303 = vector.shape_cast %302 : vector<1x4x256xf32> to vector<4x256xf32>
    %304 = vector.shape_cast %301 : vector<4x256xf32> to vector<1x4x256xf32>
    tpu.vector_store %arg6[%c0_243, %c4_244, %c0_245], %304 {strides = array<i32>} : memref<2x16x256xf32, #tpu.memory_space<vmem>>, vector<1x4x256xf32>,
    %c16_246 = arith.constant 16 : index
    %c0_247 = arith.constant 0 : index
    %305 = vector.load %arg7[%c16_246, %c0_247] : memref<32x512xf32, #tpu.memory_space<vmem>>, vector<4x256xf32>
    %c0_248 = arith.constant 0 : index
    %c8_249 = arith.constant 8 : index
    %c0_250 = arith.constant 0 : index
    %306 = vector.load %arg6[%c0_248, %c8_249, %c0_250] : memref<2x16x256xf32, #tpu.memory_space<vmem>>, vector<1x4x256xf32>
    %307 = vector.shape_cast %306 : vector<1x4x256xf32> to vector<4x256xf32>
    %308 = vector.shape_cast %305 : vector<4x256xf32> to vector<1x4x256xf32>
    tpu.vector_store %arg6[%c0_248, %c8_249, %c0_250], %308 {strides = array<i32>} : memref<2x16x256xf32, #tpu.memory_space<vmem>>, vector<1x4x256xf32>,
    %c24_251 = arith.constant 24 : index
    %c0_252 = arith.constant 0 : index
    %309 = vector.load %arg7[%c24_251, %c0_252] : memref<32x512xf32, #tpu.memory_space<vmem>>, vector<4x256xf32>
    %c0_253 = arith.constant 0 : index
    %c12 = arith.constant 12 : index
    %c0_254 = arith.constant 0 : index
    %310 = vector.load %arg6[%c0_253, %c12, %c0_254] : memref<2x16x256xf32, #tpu.memory_space<vmem>>, vector<1x4x256xf32>
    %311 = vector.shape_cast %310 : vector<1x4x256xf32> to vector<4x256xf32>
    %312 = vector.shape_cast %309 : vector<4x256xf32> to vector<1x4x256xf32>
    tpu.vector_store %arg6[%c0_253, %c12, %c0_254], %312 {strides = array<i32>} : memref<2x16x256xf32, #tpu.memory_space<vmem>>, vector<1x4x256xf32>,
    %c0_255 = arith.constant 0 : index
    %c256_256 = arith.constant 256 : index
    %313 = vector.load %arg7[%c0_255, %c256_256] : memref<32x512xf32, #tpu.memory_space<vmem>>, vector<4x256xf32>
    %c1_257 = arith.constant 1 : index
    %c0_258 = arith.constant 0 : index
    %c0_259 = arith.constant 0 : index
    %314 = vector.load %arg6[%c1_257, %c0_258, %c0_259] : memref<2x16x256xf32, #tpu.memory_space<vmem>>, vector<1x4x256xf32>
    %315 = vector.shape_cast %314 : vector<1x4x256xf32> to vector<4x256xf32>
    %316 = vector.shape_cast %313 : vector<4x256xf32> to vector<1x4x256xf32>
    tpu.vector_store %arg6[%c1_257, %c0_258, %c0_259], %316 {strides = array<i32>} : memref<2x16x256xf32, #tpu.memory_space<vmem>>, vector<1x4x256xf32>,
    %c8_260 = arith.constant 8 : index
    %c256_261 = arith.constant 256 : index
    %317 = vector.load %arg7[%c8_260, %c256_261] : memref<32x512xf32, #tpu.memory_space<vmem>>, vector<4x256xf32>
    %c1_262 = arith.constant 1 : index
    %c4_263 = arith.constant 4 : index
    %c0_264 = arith.constant 0 : index
    %318 = vector.load %arg6[%c1_262, %c4_263, %c0_264] : memref<2x16x256xf32, #tpu.memory_space<vmem>>, vector<1x4x256xf32>
    %319 = vector.shape_cast %318 : vector<1x4x256xf32> to vector<4x256xf32>
    %320 = vector.shape_cast %317 : vector<4x256xf32> to vector<1x4x256xf32>
    tpu.vector_store %arg6[%c1_262, %c4_263, %c0_264], %320 {strides = array<i32>} : memref<2x16x256xf32, #tpu.memory_space<vmem>>, vector<1x4x256xf32>,
    %c16_265 = arith.constant 16 : index
    %c256_266 = arith.constant 256 : index
    %321 = vector.load %arg7[%c16_265, %c256_266] : memref<32x512xf32, #tpu.memory_space<vmem>>, vector<4x256xf32>
    %c1_267 = arith.constant 1 : index
    %c8_268 = arith.constant 8 : index
    %c0_269 = arith.constant 0 : index
    %322 = vector.load %arg6[%c1_267, %c8_268, %c0_269] : memref<2x16x256xf32, #tpu.memory_space<vmem>>, vector<1x4x256xf32>
    %323 = vector.shape_cast %322 : vector<1x4x256xf32> to vector<4x256xf32>
    %324 = vector.shape_cast %321 : vector<4x256xf32> to vector<1x4x256xf32>
    tpu.vector_store %arg6[%c1_267, %c8_268, %c0_269], %324 {strides = array<i32>} : memref<2x16x256xf32, #tpu.memory_space<vmem>>, vector<1x4x256xf32>,
    %c24_270 = arith.constant 24 : index
    %c256_271 = arith.constant 256 : index
    %325 = vector.load %arg7[%c24_270, %c256_271] : memref<32x512xf32, #tpu.memory_space<vmem>>, vector<4x256xf32>
    %c1_272 = arith.constant 1 : index
    %c12_273 = arith.constant 12 : index
    %c0_274 = arith.constant 0 : index
    %326 = vector.load %arg6[%c1_272, %c12_273, %c0_274] : memref<2x16x256xf32, #tpu.memory_space<vmem>>, vector<1x4x256xf32>
    %327 = vector.shape_cast %326 : vector<1x4x256xf32> to vector<4x256xf32>
    %328 = vector.shape_cast %325 : vector<4x256xf32> to vector<1x4x256xf32>
    tpu.vector_store %arg6[%c1_272, %c12_273, %c0_274], %328 {strides = array<i32>} : memref<2x16x256xf32, #tpu.memory_space<vmem>>, vector<1x4x256xf32>,
    return
  }
  func.func @transform_0(%arg0: i32) -> (i32, i32, i32) {
    %c0_i32 = arith.constant 0 : i32
    %c0_i32_0 = arith.constant 0 : i32
    %c0_i32_1 = arith.constant 0 : i32
    return %arg0, %c0_i32, %c0_i32_0 : i32, i32, i32
  }
  func.func @transform_1(%arg0: i32) -> (i32, i32) {
    %c0_i32 = arith.constant 0 : i32
    %c0_i32_0 = arith.constant 0 : i32
    %c0_i32_1 = arith.constant 0 : i32
    return %c0_i32, %c0_i32_0 : i32, i32
  }
  func.func @transform_2(%arg0: i32) -> (i32, i32) {
    %c0_i32 = arith.constant 0 : i32
    %c0_i32_0 = arith.constant 0 : i32
    %c0_i32_1 = arith.constant 0 : i32
    return %c0_i32, %c0_i32_0 : i32, i32
  }
  func.func @transform_3(%arg0: i32) -> (i32, i32, i32, i32) {
    %c0_i32 = arith.constant 0 : i32
    %c0_i32_0 = arith.constant 0 : i32
    %c0_i32_1 = arith.constant 0 : i32
    %c0_i32_2 = arith.constant 0 : i32
    %c0_i32_3 = arith.constant 0 : i32
    return %c0_i32, %c0_i32_0, %c0_i32_1, %c0_i32_2 : i32, i32, i32, i32
  }
  func.func @transform_4(%arg0: i32) -> (i32, i32) {
    %c0_i32 = arith.constant 0 : i32
    %c0_i32_0 = arith.constant 0 : i32
    %c0_i32_1 = arith.constant 0 : i32
    return %c0_i32, %c0_i32_0 : i32, i32
  }
  func.func @transform_5(%arg0: i32) -> (i32, i32, i32) {
    %c0_i32 = arith.constant 0 : i32
    %c0_i32_0 = arith.constant 0 : i32
    %c0_i32_1 = arith.constant 0 : i32
    return %arg0, %c0_i32, %c0_i32_0 : i32, i32, i32
  }
}

</mosaic_0001>

<llo_original>
// kernel: dense_block_forward.1
$region0: #{dense_block_forward.1}
  #allocation0 [shape = 'u32[]', space=smem, size = 0x4, offset = 0x4, fixed_abs, tag = 'smem constant byte address 0x4 - core index']
  #allocation1 [shape = 'u32[144,128]{1,0:T(1,128)}', space=vmem, size = 0x12000, scoped, tag = 'internal scratch']
  #allocation2 [shape = 'f32[32,512]{1,0:T(8,128)}', space=vmem, size = 0x10000, scoped, tag = 'scratch operand']
  %s0 = inlined_call_operand.vmem [shape: f32[2,8,256], index: 0, kind: input, shape index: {}]
  %s1 = inlined_call_operand.vmem [shape: f32[24,3], index: 1, kind: input, shape index: {}]
  %s2 = inlined_call_operand.vmem [shape: f32[24,3], index: 2, kind: input, shape index: {}]
  %s3 = inlined_call_operand.vmem [shape: bf16[3,9,8,24], index: 3, kind: input, shape index: {}]
  %s4 = inlined_call_operand.vmem [shape: f32[9,512], index: 4, kind: input, shape index: {}]
  %s5 = inlined_call_operand.vmem [shape: f32[2,16,256], index: 5, kind: output, shape index: {}]
  %s6 = sld [smem:[#allocation0]]
  $region30: #{dense_block_forward.1} parent=0
    _
  %s8 = ssub.s32 1, %s6
  %s9 = scalar_select 0, %s8, %s6
  // Predicated region
  $region2: #{dense_block_forward.1} parent=0 // pred_check
    _
  $region3: #{dense_block_forward.1} parent=0 // pred_check_branch
    %11 = sbr.rel (0) target = $region5
  $region4: #{dense_block_forward.1} parent=0 // pred_region
    _
  $region5: #{dense_block_forward.1} parent=0 // pred_fallthru
    _
  // Predicated region
  $region6: #{dense_block_forward.1} parent=0 // pred_check
    _
  $region7: #{dense_block_forward.1} parent=0 // pred_check_branch
    %13 = sbr.rel (0) target = $region9
  $region8: #{dense_block_forward.1} parent=0 // pred_region
    _
  $region9: #{dense_block_forward.1} parent=0 // pred_fallthru
    _
  // Predicated region
  $region10: #{dense_block_forward.1} parent=0 // pred_check
    _
  $region11: #{dense_block_forward.1} parent=0 // pred_check_branch
    %15 = sbr.rel (0) target = $region13
  $region12: #{dense_block_forward.1} parent=0 // pred_region
    _
  $region13: #{dense_block_forward.1} parent=0 // pred_fallthru
    _
  // Predicated region
  $region14: #{dense_block_forward.1} parent=0 // pred_check
    _
  $region15: #{dense_block_forward.1} parent=0 // pred_check_branch
    %17 = sbr.rel (0) target = $region17
  $region16: #{dense_block_forward.1} parent=0 // pred_region
    _
  $region17: #{dense_block_forward.1} parent=0 // pred_fallthru
    _
  // Predicated region
  $region18: #{dense_block_forward.1} parent=0 // pred_check
    _
  $region19: #{dense_block_forward.1} parent=0 // pred_check_branch
    %19 = sbr.rel (0) target = $region21
  $region20: #{dense_block_forward.1} parent=0 // pred_region
    _
  $region21: #{dense_block_forward.1} parent=0 // pred_fallthru
    _
  %v21 = vld [vmem:[%s0] sm:$0xff]
  %v22 = vld [vmem:[%s0 + $0x8] sm:$0xff]
  %23 = vst [vmem:[#allocation2] sm:$0xff] %v21
  %24 = vst [vmem:[#allocation2 + $0x8] sm:$0xff] %v22
  %s25 = scalar_lea.vmem %s0, 16
  %v26 = vld [vmem:[%s25] sm:$0xff]
  %v27 = vld [vmem:[%s25 + $0x8] sm:$0xff]
  %28 = vst [vmem:[#allocation2 + $0x10] sm:$0xff] %v26
  %29 = vst [vmem:[#allocation2 + $0x18] sm:$0xff] %v27
  %v30 = vld [vmem:[#allocation2] sm:$0xff]
  %v31 = vld [vmem:[#allocation2 + $0x8] sm:$0xff]
  %v32 = vld [vmem:[#allocation2 + $0x10] sm:$0xff]
  %v33 = vld [vmem:[#allocation2 + $0x18] sm:$0xff]
  %v34 = vld [vmem:[%s1] sm:$0xff]
  %v35 = vld [vmem:[%s2] sm:$0xff]
  %37 = vset.pattern.permute.xlu0 0
  %38 = vperm.xlu0 %37, %v34
  %v39 = vpop.permute.xlu0 %38
  %v41 = vmul.f32 %v30, %v39
  %v42 = vmul.f32 %v31, %v39
  %v43 = vmul.f32 %v32, %v39
  %v44 = vmul.f32 %v33, %v39
  %46 = vset.pattern.permute.xlu0 0
  %47 = vperm.xlu0 %46, %v35
  %v48 = vpop.permute.xlu0 %47
  %v50 = vadd.f32 %v41, %v48
  %v51 = vadd.f32 %v42, %v48
  %v52 = vadd.f32 %v43, %v48
  %v53 = vadd.f32 %v44, %v48
  %v54 = vmax.f32 %v50, 0.0
  %v55 = vmax.f32 %v51, 0.0
  %v56 = vmax.f32 %v52, 0.0
  %v57 = vmax.f32 %v53, 0.0
  %58 = vrot.lane.b32.xlu0 %v54, 16
  %v59 = vpop.permute.xlu0 %58
  %60 = vrot.lane.b32.xlu0 %v55, 16
  %v61 = vpop.permute.xlu0 %60
  %62 = vrot.lane.b32.xlu0 %v56, 16
  %v63 = vpop.permute.xlu0 %62
  %64 = vrot.lane.b32.xlu0 %v57, 16
  %v65 = vpop.permute.xlu0 %64
  %v66 = vlaneseq
  %v67 = vand.u32 %v66, 127
  %vm68 = vcmp.lt.s32.totalorder %v67, 16
  %v69 = vsel %vm68, %v63, %v65
  %v70 = vsel %vm68, %v61, %v63
  %v71 = vsel %vm68, %v59, %v61
  %v72 = vsel %vm68, %v65, %v59
  %73 = vrot.lane.b32.xlu0 %v72, 1
  %v74 = vpop.permute.xlu0 %73
  %75 = vrot.lane.b32.xlu0 %v71, 1
  %v76 = vpop.permute.xlu0 %75
  %77 = vrot.lane.b32.xlu0 %v70, 1
  %v78 = vpop.permute.xlu0 %77
  %79 = vrot.lane.b32.xlu0 %v69, 1
  %v80 = vpop.permute.xlu0 %79
  %vm81 = vcmp.lt.s32.totalorder %v67, 1
  %v82 = vsel %vm81, %v78, %v80
  %v83 = vsel %vm81, %v76, %v78
  %v84 = vsel %vm81, %v74, %v76
  %v85 = vsel %vm81, %v80, %v74
  %v86 = vld [vmem:[%s4] ss:$8 sm:$0xf]
  %v88 = vlaneseq
  %v89 = vshrl.u32 %v88, 7
  %v90 = vsub.s32 0, %v89
  %v91 = vrot.slane %v86, %v90
  %v92 = vlaneseq
  %v93 = vshrl.u32 %v92, 7
  %v94 = vsub.s32 1, %v93
  %v95 = vrot.slane %v86, %v94
  %v96 = vlaneseq
  %v97 = vshrl.u32 %v96, 7
  %v98 = vsub.s32 2, %v97
  %v99 = vrot.slane %v86, %v98
  %v100 = vlaneseq
  %v101 = vshrl.u32 %v100, 7
  %v102 = vsub.s32 3, %v101
  %v103 = vrot.slane %v86, %v102
  %v108 = vmul.f32 %v85, %v91
  %v109 = vmul.f32 %v84, %v95
  %v110 = vmul.f32 %v83, %v99
  %v111 = vmul.f32 %v82, %v103
  %v112 = vpack.c.bf16 %v108, %v108
  %v113 = vpack.c.bf16 %v109, %v109
  %v114 = vpack.c.bf16 %v110, %v110
  %v115 = vpack.c.bf16 %v111, %v111
  %v116 = vld [vmem:[%s3] sm:$0xf]
  %s117 = scalar_lea.vmem %s4, 1
  %v118 = vld [vmem:[%s117] ss:$8 sm:$0xf]
  %v120 = vlaneseq
  %v121 = vshrl.u32 %v120, 7
  %v122 = vsub.s32 0, %v121
  %v123 = vrot.slane %v118, %v122
  %v124 = vlaneseq
  %v125 = vshrl.u32 %v124, 7
  %v126 = vsub.s32 1, %v125
  %v127 = vrot.slane %v118, %v126
  %v128 = vlaneseq
  %v129 = vshrl.u32 %v128, 7
  %v130 = vsub.s32 2, %v129
  %v131 = vrot.slane %v118, %v130
  %v132 = vlaneseq
  %v133 = vshrl.u32 %v132, 7
  %v134 = vsub.s32 3, %v133
  %v135 = vrot.slane %v118, %v134
  %v140 = vmul.f32 %v72, %v123
  %v141 = vmul.f32 %v71, %v127
  %v142 = vmul.f32 %v70, %v131
  %v143 = vmul.f32 %v69, %v135
  %v144 = vpack.c.bf16 %v140, %v140
  %v145 = vpack.c.bf16 %v141, %v141
  %v146 = vpack.c.bf16 %v142, %v142
  %v147 = vpack.c.bf16 %v143, %v143
  %s148 = scalar_lea.vmem %s3, 4
  %v149 = vld [vmem:[%s148] sm:$0xf]
  %vm150 = vcmask 64512
  %v152 = vsel %vm150, %v149, 0
  %vm154 = vcmask 1043456
  %v156 = vsel %vm154, %v144, 0
  %v159 = vsel %vm154, %v145, 0
  %v162 = vsel %vm154, %v146, 0
  %v165 = vsel %vm154, %v147, 0
  %167 = vmatprep.subr.bf16.mxu0 %v159
  %168 = vmatpush1.bf16.msra.mxu0 %v156
  %169 = vmatprep.subr.bf16.mxu0 0
  %170 = vmatpush1.bf16.msra.mxu0 0
  %171 = vmatprep.subr.bf16.mxu0 0
  %172 = vmatpush1.bf16.msra.mxu0 0
  %173 = vmatprep.subr.bf16.mxu0 0
  %174 = vmatpush1.bf16.msra.mxu0 0
  %175 = vmatprep.subr.bf16.mxu0 0
  %176 = vmatpush1.bf16.msra.mxu0 0
  %177 = vmatprep.subr.bf16.mxu0 0
  %178 = vmatpush1.bf16.msra.mxu0 0
  %179 = vmatprep.subr.bf16.mxu0 0
  %180 = vmatpush1.bf16.msra.mxu0 0
  %181 = vmatprep.subr.bf16.mxu0 0
  %182 = vmatpush1.bf16.msra.mxu0 0
  %183 = vmatprep.subr.bf16.mxu0 0
  %184 = vmatpush1.bf16.msra.mxu0 0
  %185 = vmatprep.subr.bf16.mxu0 0
  %186 = vmatpush1.bf16.msra.mxu0 0
  %187 = vmatprep.subr.bf16.mxu0 0
  %188 = vmatpush1.bf16.msra.mxu0 0
  %189 = vmatprep.subr.bf16.mxu0 0
  %190 = vmatpush1.bf16.msra.mxu0 0
  %191 = vmatprep.subr.bf16.mxu0 0
  %192 = vmatpush1.bf16.msra.mxu0 0
  %193 = vmatprep.subr.bf16.mxu0 0
  %194 = vmatpush1.bf16.msra.mxu0 0
  %195 = vmatprep.subr.bf16.mxu0 0
  %196 = vmatpush1.bf16.msra.mxu0 0
  %197 = vmatprep.subr.bf16.mxu0 0
  %198 = vmatpush1.bf16.msra.mxu0 0
  %199 = vmatprep.mubr.bf16.mxu0 0
  %200 = vmatmul.mubr.bf16.gmra.mrb[0].mxu0 %v152
  %v201 = vpop.f32.mrb[0].mxu0
  %v202 = vadd.f32 0.0, %v201
  %v203 = vpop.f32.mrb[0].mxu0
  %v204 = vadd.f32 0.0, %v203
  %v205 = vpop.f32.mrb[0].mxu0
  %v206 = vpop.f32.mrb[0].mxu0
  %207 = vdwg.mxu0
  %208 = vmatprep.subr.bf16.mxu0 %v165
  %209 = vmatpush1.bf16.msra.mxu0 %v162
  %210 = vmatprep.subr.bf16.mxu0 0
  %211 = vmatpush1.bf16.msra.mxu0 0
  %212 = vmatprep.subr.bf16.mxu0 0
  %213 = vmatpush1.bf16.msra.mxu0 0
  %214 = vmatprep.subr.bf16.mxu0 0
  %215 = vmatpush1.bf16.msra.mxu0 0
  %216 = vmatprep.subr.bf16.mxu0 0
  %217 = vmatpush1.bf16.msra.mxu0 0
  %218 = vmatprep.subr.bf16.mxu0 0
  %219 = vmatpush1.bf16.msra.mxu0 0
  %220 = vmatprep.subr.bf16.mxu0 0
  %221 = vmatpush1.bf16.msra.mxu0 0
  %222 = vmatprep.subr.bf16.mxu0 0
  %223 = vmatpush1.bf16.msra.mxu0 0
  %224 = vmatprep.subr.bf16.mxu0 0
  %225 = vmatpush1.bf16.msra.mxu0 0
  %226 = vmatprep.subr.bf16.mxu0 0
  %227 = vmatpush1.bf16.msra.mxu0 0
  %228 = vmatprep.subr.bf16.mxu0 0
  %229 = vmatpush1.bf16.msra.mxu0 0
  %230 = vmatprep.subr.bf16.mxu0 0
  %231 = vmatpush1.bf16.msra.mxu0 0
  %232 = vmatprep.subr.bf16.mxu0 0
  %233 = vmatpush1.bf16.msra.mxu0 0
  %234 = vmatprep.subr.bf16.mxu0 0
  %235 = vmatpush1.bf16.msra.mxu0 0
  %236 = vmatprep.subr.bf16.mxu0 0
  %237 = vmatpush1.bf16.msra.mxu0 0
  %238 = vmatprep.subr.bf16.mxu0 0
  %239 = vmatpush1.bf16.msra.mxu0 0
  %240 = vmatprep.mubr.bf16.mxu0 0
  %241 = vmatmul.mubr.bf16.gmra.mrb[0].mxu0 %v152
  %v242 = vpop.f32.mrb[0].mxu0
  %v243 = vadd.f32 0.0, %v242
  %v244 = vpop.f32.mrb[0].mxu0
  %v245 = vadd.f32 0.0, %v244
  %v246 = vpop.f32.mrb[0].mxu0
  %v247 = vpop.f32.mrb[0].mxu0
  %248 = vdwg.mxu0
  %v250 = vsel %vm150, %v116, 0
  %v253 = vsel %vm154, %v112, 0
  %v256 = vsel %vm154, %v113, 0
  %v259 = vsel %vm154, %v114, 0
  %v262 = vsel %vm154, %v115, 0
  %264 = vmatprep.subr.bf16.mxu0 %v256
  %265 = vmatpush1.bf16.msra.mxu0 %v253
  %266 = vmatprep.subr.bf16.mxu0 0
  %267 = vmatpush1.bf16.msra.mxu0 0
  %268 = vmatprep.subr.bf16.mxu0 0
  %269 = vmatpush1.bf16.msra.mxu0 0
  %270 = vmatprep.subr.bf16.mxu0 0
  %271 = vmatpush1.bf16.msra.mxu0 0
  %272 = vmatprep.subr.bf16.mxu0 0
  %273 = vmatpush1.bf16.msra.mxu0 0
  %274 = vmatprep.subr.bf16.mxu0 0
  %275 = vmatpush1.bf16.msra.mxu0 0
  %276 = vmatprep.subr.bf16.mxu0 0
  %277 = vmatpush1.bf16.msra.mxu0 0
  %278 = vmatprep.subr.bf16.mxu0 0
  %279 = vmatpush1.bf16.msra.mxu0 0
  %280 = vmatprep.subr.bf16.mxu0 0
  %281 = vmatpush1.bf16.msra.mxu0 0
  %282 = vmatprep.subr.bf16.mxu0 0
  %283 = vmatpush1.bf16.msra.mxu0 0
  %284 = vmatprep.subr.bf16.mxu0 0
  %285 = vmatpush1.bf16.msra.mxu0 0
  %286 = vmatprep.subr.bf16.mxu0 0
  %287 = vmatpush1.bf16.msra.mxu0 0
  %288 = vmatprep.subr.bf16.mxu0 0
  %289 = vmatpush1.bf16.msra.mxu0 0
  %290 = vmatprep.subr.bf16.mxu0 0
  %291 = vmatpush1.bf16.msra.mxu0 0
  %292 = vmatprep.subr.bf16.mxu0 0
  %293 = vmatpush1.bf16.msra.mxu0 0
  %294 = vmatprep.subr.bf16.mxu0 0
  %295 = vmatpush1.bf16.msra.mxu0 0
  %296 = vmatprep.mubr.bf16.mxu0 0
  %297 = vmatmul.mubr.bf16.gmra.mrb[0].mxu0 %v250
  %v298 = vpop.f32.mrb[0].mxu0
  %v299 = vadd.f32 %v202, %v298
  %v300 = vpop.f32.mrb[0].mxu0
  %v301 = vadd.f32 %v204, %v300
  %v302 = vpop.f32.mrb[0].mxu0
  %v303 = vpop.f32.mrb[0].mxu0
  %304 = vdwg.mxu0
  %305 = vmatprep.subr.bf16.mxu0 %v262
  %306 = vmatpush1.bf16.msra.mxu0 %v259
  %307 = vmatprep.subr.bf16.mxu0 0
  %308 = vmatpush1.bf16.msra.mxu0 0
  %309 = vmatprep.subr.bf16.mxu0 0
  %310 = vmatpush1.bf16.msra.mxu0 0
  %311 = vmatprep.subr.bf16.mxu0 0
  %312 = vmatpush1.bf16.msra.mxu0 0
  %313 = vmatprep.subr.bf16.mxu0 0
  %314 = vmatpush1.bf16.msra.mxu0 0
  %315 = vmatprep.subr.bf16.mxu0 0
  %316 = vmatpush1.bf16.msra.mxu0 0
  %317 = vmatprep.subr.bf16.mxu0 0
  %318 = vmatpush1.bf16.msra.mxu0 0
  %319 = vmatprep.subr.bf16.mxu0 0
  %320 = vmatpush1.bf16.msra.mxu0 0
  %321 = vmatprep.subr.bf16.mxu0 0
  %322 = vmatpush1.bf16.msra.mxu0 0
  %323 = vmatprep.subr.bf16.mxu0 0
  %324 = vmatpush1.bf16.msra.mxu0 0
  %325 = vmatprep.subr.bf16.mxu0 0
  %326 = vmatpush1.bf16.msra.mxu0 0
  %327 = vmatprep.subr.bf16.mxu0 0
  %328 = vmatpush1.bf16.msra.mxu0 0
  %329 = vmatprep.subr.bf16.mxu0 0
  %330 = vmatpush1.bf16.msra.mxu0 0
  %331 = vmatprep.subr.bf16.mxu0 0
  %332 = vmatpush1.bf16.msra.mxu0 0
  %333 = vmatprep.subr.bf16.mxu0 0
  %334 = vmatpush1.bf16.msra.mxu0 0
  %335 = vmatprep.subr.bf16.mxu0 0
  %336 = vmatpush1.bf16.msra.mxu0 0
  %337 = vmatprep.mubr.bf16.mxu0 0
  %338 = vmatmul.mubr.bf16.gmra.mrb[0].mxu0 %v250
  %v339 = vpop.f32.mrb[0].mxu0
  %v340 = vadd.f32 %v243, %v339
  %v341 = vpop.f32.mrb[0].mxu0
  %v342 = vadd.f32 %v245, %v341
  %v343 = vpop.f32.mrb[0].mxu0
  %v344 = vpop.f32.mrb[0].mxu0
  %345 = vdwg.mxu0
  %346 = vrot.lane.b32.xlu0 %v72, 127
  %v347 = vpop.permute.xlu0 %346
  %348 = vrot.lane.b32.xlu0 %v71, 127
  %v349 = vpop.permute.xlu0 %348
  %350 = vrot.lane.b32.xlu0 %v70, 127
  %v351 = vpop.permute.xlu0 %350
  %352 = vrot.lane.b32.xlu0 %v69, 127
  %v353 = vpop.permute.xlu0 %352
  %vm354 = vcmp.lt.s32.totalorder %v67, 127
  %v355 = vsel %vm354, %v351, %v353
  %v356 = vsel %vm354, %v349, %v351
  %v357 = vsel %vm354, %v347, %v349
  %v358 = vsel %vm354, %v353, %v347
  %s359 = scalar_lea.vmem %s4, 2
  %v360 = vld [vmem:[%s359] ss:$8 sm:$0xf]
  %v362 = vlaneseq
  %v363 = vshrl.u32 %v362, 7
  %v364 = vsub.s32 0, %v363
  %v365 = vrot.slane %v360, %v364
  %v366 = vlaneseq
  %v367 = vshrl.u32 %v366, 7
  %v368 = vsub.s32 1, %v367
  %v369 = vrot.slane %v360, %v368
  %v370 = vlaneseq
  %v371 = vshrl.u32 %v370, 7
  %v372 = vsub.s32 2, %v371
  %v373 = vrot.slane %v360, %v372
  %v374 = vlaneseq
  %v375 = vshrl.u32 %v374, 7
  %v376 = vsub.s32 3, %v375
  %v377 = vrot.slane %v360, %v376
  %v382 = vmul.f32 %v357, %v365
  %v383 = vmul.f32 %v356, %v369
  %v384 = vmul.f32 %v355, %v373
  %v385 = vmul.f32 %v358, %v377
  %v386 = vpack.c.bf16 %v382, %v382
  %v387 = vpack.c.bf16 %v383, %v383
  %v388 = vpack.c.bf16 %v384, %v384
  %v389 = vpack.c.bf16 %v385, %v385
  %s390 = scalar_lea.vmem %s3, 8
  %v391 = vld [vmem:[%s390] sm:$0xf]
  %v393 = vsel %vm150, %v391, 0
  %v396 = vsel %vm154, %v386, 0
  %v399 = vsel %vm154, %v387, 0
  %v402 = vsel %vm154, %v388, 0
  %v405 = vsel %vm154, %v389, 0
  %407 = vmatprep.subr.bf16.mxu0 %v399
  %408 = vmatpush1.bf16.msra.mxu0 %v396
  %409 = vmatprep.subr.bf16.mxu0 0
  %410 = vmatpush1.bf16.msra.mxu0 0
  %411 = vmatprep.subr.bf16.mxu0 0
  %412 = vmatpush1.bf16.msra.mxu0 0
  %413 = vmatprep.subr.bf16.mxu0 0
  %414 = vmatpush1.bf16.msra.mxu0 0
  %415 = vmatprep.subr.bf16.mxu0 0
  %416 = vmatpush1.bf16.msra.mxu0 0
  %417 = vmatprep.subr.bf16.mxu0 0
  %418 = vmatpush1.bf16.msra.mxu0 0
  %419 = vmatprep.subr.bf16.mxu0 0
  %420 = vmatpush1.bf16.msra.mxu0 0
  %421 = vmatprep.subr.bf16.mxu0 0
  %422 = vmatpush1.bf16.msra.mxu0 0
  %423 = vmatprep.subr.bf16.mxu0 0
  %424 = vmatpush1.bf16.msra.mxu0 0
  %425 = vmatprep.subr.bf16.mxu0 0
  %426 = vmatpush1.bf16.msra.mxu0 0
  %427 = vmatprep.subr.bf16.mxu0 0
  %428 = vmatpush1.bf16.msra.mxu0 0
  %429 = vmatprep.subr.bf16.mxu0 0
  %430 = vmatpush1.bf16.msra.mxu0 0
  %431 = vmatprep.subr.bf16.mxu0 0
  %432 = vmatpush1.bf16.msra.mxu0 0
  %433 = vmatprep.subr.bf16.mxu0 0
  %434 = vmatpush1.bf16.msra.mxu0 0
  %435 = vmatprep.subr.bf16.mxu0 0
  %436 = vmatpush1.bf16.msra.mxu0 0
  %437 = vmatprep.subr.bf16.mxu0 0
  %438 = vmatpush1.bf16.msra.mxu0 0
  %439 = vmatprep.mubr.bf16.mxu0 0
  %440 = vmatmul.mubr.bf16.gmra.mrb[0].mxu0 %v393
  %v441 = vpop.f32.mrb[0].mxu0
  %v442 = vadd.f32 0.0, %v441
  %v443 = vpop.f32.mrb[0].mxu0
  %v444 = vadd.f32 0.0, %v443
  %v445 = vpop.f32.mrb[0].mxu0
  %v446 = vpop.f32.mrb[0].mxu0
  %447 = vdwg.mxu0
  %448 = vmatprep.subr.bf16.mxu0 %v405
  %449 = vmatpush1.bf16.msra.mxu0 %v402
  %450 = vmatprep.subr.bf16.mxu0 0
  %451 = vmatpush1.bf16.msra.mxu0 0
  %452 = vmatprep.subr.bf16.mxu0 0
  %453 = vmatpush1.bf16.msra.mxu0 0
  %454 = vmatprep.subr.bf16.mxu0 0
  %455 = vmatpush1.bf16.msra.mxu0 0
  %456 = vmatprep.subr.bf16.mxu0 0
  %457 = vmatpush1.bf16.msra.mxu0 0
  %458 = vmatprep.subr.bf16.mxu0 0
  %459 = vmatpush1.bf16.msra.mxu0 0
  %460 = vmatprep.subr.bf16.mxu0 0
  %461 = vmatpush1.bf16.msra.mxu0 0
  %462 = vmatprep.subr.bf16.mxu0 0
  %463 = vmatpush1.bf16.msra.mxu0 0
  %464 = vmatprep.subr.bf16.mxu0 0
  %465 = vmatpush1.bf16.msra.mxu0 0
  %466 = vmatprep.subr.bf16.mxu0 0
  %467 = vmatpush1.bf16.msra.mxu0 0
  %468 = vmatprep.subr.bf16.mxu0 0
  %469 = vmatpush1.bf16.msra.mxu0 0
  %470 = vmatprep.subr.bf16.mxu0 0
  %471 = vmatpush1.bf16.msra.mxu0 0
  %472 = vmatprep.subr.bf16.mxu0 0
  %473 = vmatpush1.bf16.msra.mxu0 0
  %474 = vmatprep.subr.bf16.mxu0 0
  %475 = vmatpush1.bf16.msra.mxu0 0
  %476 = vmatprep.subr.bf16.mxu0 0
  %477 = vmatpush1.bf16.msra.mxu0 0
  %478 = vmatprep.subr.bf16.mxu0 0
  %479 = vmatpush1.bf16.msra.mxu0 0
  %480 = vmatprep.mubr.bf16.mxu0 0
  %481 = vmatmul.mubr.bf16.gmra.mrb[0].mxu0 %v393
  %v482 = vpop.f32.mrb[0].mxu0
  %v483 = vadd.f32 0.0, %v482
  %v484 = vpop.f32.mrb[0].mxu0
  %v485 = vadd.f32 0.0, %v484
  %v486 = vpop.f32.mrb[0].mxu0
  %v487 = vpop.f32.mrb[0].mxu0
  %488 = vdwg.mxu0
  %v489 = vadd.f32 %v299, %v442
  %v490 = vadd.f32 %v301, %v444
  %v491 = vadd.f32 %v340, %v483
  %v492 = vadd.f32 %v342, %v485
  %493 = vrot.lane.b32.xlu0 %v54, 1
  %v494 = vpop.permute.xlu0 %493
  %495 = vrot.lane.b32.xlu0 %v55, 1
  %v496 = vpop.permute.xlu0 %495
  %497 = vrot.lane.b32.xlu0 %v56, 1
  %v498 = vpop.permute.xlu0 %497
  %499 = vrot.lane.b32.xlu0 %v57, 1
  %v500 = vpop.permute.xlu0 %499
  %v501 = vsel %vm81, %v498, %v500
  %v502 = vsel %vm81, %v496, %v498
  %v503 = vsel %vm81, %v494, %v496
  %v504 = vsel %vm81, %v500, %v494
  %s505 = scalar_lea.vmem %s4, 3
  %v506 = vld [vmem:[%s505] ss:$8 sm:$0xf]
  %v508 = vlaneseq
  %v509 = vshrl.u32 %v508, 7
  %v510 = vsub.s32 0, %v509
  %v511 = vrot.slane %v506, %v510
  %v512 = vlaneseq
  %v513 = vshrl.u32 %v512, 7
  %v514 = vsub.s32 1, %v513
  %v515 = vrot.slane %v506, %v514
  %v516 = vlaneseq
  %v517 = vshrl.u32 %v516, 7
  %v518 = vsub.s32 2, %v517
  %v519 = vrot.slane %v506, %v518
  %v520 = vlaneseq
  %v521 = vshrl.u32 %v520, 7
  %v522 = vsub.s32 3, %v521
  %v523 = vrot.slane %v506, %v522
  %v528 = vmul.f32 %v504, %v511
  %v529 = vmul.f32 %v503, %v515
  %v530 = vmul.f32 %v502, %v519
  %v531 = vmul.f32 %v501, %v523
  %v532 = vpack.c.bf16 %v528, %v528
  %v533 = vpack.c.bf16 %v529, %v529
  %v534 = vpack.c.bf16 %v530, %v530
  %v535 = vpack.c.bf16 %v531, %v531
  %s536 = scalar_lea.vmem %s3, 12
  %v537 = vld [vmem:[%s536] sm:$0xf]
  %v539 = vsel %vm150, %v537, 0
  %v542 = vsel %vm154, %v532, 0
  %v545 = vsel %vm154, %v533, 0
  %v548 = vsel %vm154, %v534, 0
  %v551 = vsel %vm154, %v535, 0
  %553 = vmatprep.subr.bf16.mxu0 %v545
  %554 = vmatpush1.bf16.msra.mxu0 %v542
  %555 = vmatprep.subr.bf16.mxu0 0
  %556 = vmatpush1.bf16.msra.mxu0 0
  %557 = vmatprep.subr.bf16.mxu0 0
  %558 = vmatpush1.bf16.msra.mxu0 0
  %559 = vmatprep.subr.bf16.mxu0 0
  %560 = vmatpush1.bf16.msra.mxu0 0
  %561 = vmatprep.subr.bf16.mxu0 0
  %562 = vmatpush1.bf16.msra.mxu0 0
  %563 = vmatprep.subr.bf16.mxu0 0
  %564 = vmatpush1.bf16.msra.mxu0 0
  %565 = vmatprep.subr.bf16.mxu0 0
  %566 = vmatpush1.bf16.msra.mxu0 0
  %567 = vmatprep.subr.bf16.mxu0 0
  %568 = vmatpush1.bf16.msra.mxu0 0
  %569 = vmatprep.subr.bf16.mxu0 0
  %570 = vmatpush1.bf16.msra.mxu0 0
  %571 = vmatprep.subr.bf16.mxu0 0
  %572 = vmatpush1.bf16.msra.mxu0 0
  %573 = vmatprep.subr.bf16.mxu0 0
  %574 = vmatpush1.bf16.msra.mxu0 0
  %575 = vmatprep.subr.bf16.mxu0 0
  %576 = vmatpush1.bf16.msra.mxu0 0
  %577 = vmatprep.subr.bf16.mxu0 0
  %578 = vmatpush1.bf16.msra.mxu0 0
  %579 = vmatprep.subr.bf16.mxu0 0
  %580 = vmatpush1.bf16.msra.mxu0 0
  %581 = vmatprep.subr.bf16.mxu0 0
  %582 = vmatpush1.bf16.msra.mxu0 0
  %583 = vmatprep.subr.bf16.mxu0 0
  %584 = vmatpush1.bf16.msra.mxu0 0
  %585 = vmatprep.mubr.bf16.mxu0 0
  %586 = vmatmul.mubr.bf16.gmra.mrb[0].mxu0 %v539
  %v587 = vpop.f32.mrb[0].mxu0
  %v588 = vadd.f32 0.0, %v587
  %v589 = vpop.f32.mrb[0].mxu0
  %v590 = vadd.f32 0.0, %v589
  %v591 = vpop.f32.mrb[0].mxu0
  %v592 = vpop.f32.mrb[0].mxu0
  %593 = vdwg.mxu0
  %594 = vmatprep.subr.bf16.mxu0 %v551
  %595 = vmatpush1.bf16.msra.mxu0 %v548
  %596 = vmatprep.subr.bf16.mxu0 0
  %597 = vmatpush1.bf16.msra.mxu0 0
  %598 = vmatprep.subr.bf16.mxu0 0
  %599 = vmatpush1.bf16.msra.mxu0 0
  %600 = vmatprep.subr.bf16.mxu0 0
  %601 = vmatpush1.bf16.msra.mxu0 0
  %602 = vmatprep.subr.bf16.mxu0 0
  %603 = vmatpush1.bf16.msra.mxu0 0
  %604 = vmatprep.subr.bf16.mxu0 0
  %605 = vmatpush1.bf16.msra.mxu0 0
  %606 = vmatprep.subr.bf16.mxu0 0
  %607 = vmatpush1.bf16.msra.mxu0 0
  %608 = vmatprep.subr.bf16.mxu0 0
  %609 = vmatpush1.bf16.msra.mxu0 0
  %610 = vmatprep.subr.bf16.mxu0 0
  %611 = vmatpush1.bf16.msra.mxu0 0
  %612 = vmatprep.subr.bf16.mxu0 0
  %613 = vmatpush1.bf16.msra.mxu0 0
  %614 = vmatprep.subr.bf16.mxu0 0
  %615 = vmatpush1.bf16.msra.mxu0 0
  %616 = vmatprep.subr.bf16.mxu0 0
  %617 = vmatpush1.bf16.msra.mxu0 0
  %618 = vmatprep.subr.bf16.mxu0 0
  %619 = vmatpush1.bf16.msra.mxu0 0
  %620 = vmatprep.subr.bf16.mxu0 0
  %621 = vmatpush1.bf16.msra.mxu0 0
  %622 = vmatprep.subr.bf16.mxu0 0
  %623 = vmatpush1.bf16.msra.mxu0 0
  %624 = vmatprep.subr.bf16.mxu0 0
  %625 = vmatpush1.bf16.msra.mxu0 0
  %626 = vmatprep.mubr.bf16.mxu0 0
  %627 = vmatmul.mubr.bf16.gmra.mrb[0].mxu0 %v539
  %v628 = vpop.f32.mrb[0].mxu0
  %v629 = vadd.f32 0.0, %v628
  %v630 = vpop.f32.mrb[0].mxu0
  %v631 = vadd.f32 0.0, %v630
  %v632 = vpop.f32.mrb[0].mxu0
  %v633 = vpop.f32.mrb[0].mxu0
  %634 = vdwg.mxu0
  %v635 = vadd.f32 %v489, %v588
  %v636 = vadd.f32 %v490, %v590
  %v637 = vadd.f32 %v491, %v629
  %v638 = vadd.f32 %v492, %v631
  %s639 = scalar_lea.vmem %s4, 4
  %v640 = vld [vmem:[%s639] ss:$8 sm:$0xf]
  %v642 = vlaneseq
  %v643 = vshrl.u32 %v642, 7
  %v644 = vsub.s32 0, %v643
  %v645 = vrot.slane %v640, %v644
  %v646 = vlaneseq
  %v647 = vshrl.u32 %v646, 7
  %v648 = vsub.s32 1, %v647
  %v649 = vrot.slane %v640, %v648
  %v650 = vlaneseq
  %v651 = vshrl.u32 %v650, 7
  %v652 = vsub.s32 2, %v651
  %v653 = vrot.slane %v640, %v652
  %v654 = vlaneseq
  %v655 = vshrl.u32 %v654, 7
  %v656 = vsub.s32 3, %v655
  %v657 = vrot.slane %v640, %v656
  %v662 = vmul.f32 %v54, %v645
  %v663 = vmul.f32 %v55, %v649
  %v664 = vmul.f32 %v56, %v653
  %v665 = vmul.f32 %v57, %v657
  %v666 = vpack.c.bf16 %v662, %v662
  %v667 = vpack.c.bf16 %v663, %v663
  %v668 = vpack.c.bf16 %v664, %v664
  %v669 = vpack.c.bf16 %v665, %v665
  %s670 = scalar_lea.vmem %s3, 16
  %v671 = vld [vmem:[%s670] sm:$0xf]
  %v673 = vsel %vm150, %v671, 0
  %v676 = vsel %vm154, %v666, 0
  %v679 = vsel %vm154, %v667, 0
  %v682 = vsel %vm154, %v668, 0
  %v685 = vsel %vm154, %v669, 0
  %687 = vmatprep.subr.bf16.mxu0 %v679
  %688 = vmatpush1.bf16.msra.mxu0 %v676
  %689 = vmatprep.subr.bf16.mxu0 0
  %690 = vmatpush1.bf16.msra.mxu0 0
  %691 = vmatprep.subr.bf16.mxu0 0
  %692 = vmatpush1.bf16.msra.mxu0 0
  %693 = vmatprep.subr.bf16.mxu0 0
  %694 = vmatpush1.bf16.msra.mxu0 0
  %695 = vmatprep.subr.bf16.mxu0 0
  %696 = vmatpush1.bf16.msra.mxu0 0
  %697 = vmatprep.subr.bf16.mxu0 0
  %698 = vmatpush1.bf16.msra.mxu0 0
  %699 = vmatprep.subr.bf16.mxu0 0
  %700 = vmatpush1.bf16.msra.mxu0 0
  %701 = vmatprep.subr.bf16.mxu0 0
  %702 = vmatpush1.bf16.msra.mxu0 0
  %703 = vmatprep.subr.bf16.mxu0 0
  %704 = vmatpush1.bf16.msra.mxu0 0
  %705 = vmatprep.subr.bf16.mxu0 0
  %706 = vmatpush1.bf16.msra.mxu0 0
  %707 = vmatprep.subr.bf16.mxu0 0
  %708 = vmatpush1.bf16.msra.mxu0 0
  %709 = vmatprep.subr.bf16.mxu0 0
  %710 = vmatpush1.bf16.msra.mxu0 0
  %711 = vmatprep.subr.bf16.mxu0 0
  %712 = vmatpush1.bf16.msra.mxu0 0
  %713 = vmatprep.subr.bf16.mxu0 0
  %714 = vmatpush1.bf16.msra.mxu0 0
  %715 = vmatprep.subr.bf16.mxu0 0
  %716 = vmatpush1.bf16.msra.mxu0 0
  %717 = vmatprep.subr.bf16.mxu0 0
  %718 = vmatpush1.bf16.msra.mxu0 0
  %719 = vmatprep.mubr.bf16.mxu0 0
  %720 = vmatmul.mubr.bf16.gmra.mrb[0].mxu0 %v673
  %v721 = vpop.f32.mrb[0].mxu0
  %v722 = vadd.f32 0.0, %v721
  %v723 = vpop.f32.mrb[0].mxu0
  %v724 = vadd.f32 0.0, %v723
  %v725 = vpop.f32.mrb[0].mxu0
  %v726 = vpop.f32.mrb[0].mxu0
  %727 = vdwg.mxu0
  %728 = vmatprep.subr.bf16.mxu0 %v685
  %729 = vmatpush1.bf16.msra.mxu0 %v682
  %730 = vmatprep.subr.bf16.mxu0 0
  %731 = vmatpush1.bf16.msra.mxu0 0
  %732 = vmatprep.subr.bf16.mxu0 0
  %733 = vmatpush1.bf16.msra.mxu0 0
  %734 = vmatprep.subr.bf16.mxu0 0
  %735 = vmatpush1.bf16.msra.mxu0 0
  %736 = vmatprep.subr.bf16.mxu0 0
  %737 = vmatpush1.bf16.msra.mxu0 0
  %738 = vmatprep.subr.bf16.mxu0 0
  %739 = vmatpush1.bf16.msra.mxu0 0
  %740 = vmatprep.subr.bf16.mxu0 0
  %741 = vmatpush1.bf16.msra.mxu0 0
  %742 = vmatprep.subr.bf16.mxu0 0
  %743 = vmatpush1.bf16.msra.mxu0 0
  %744 = vmatprep.subr.bf16.mxu0 0
  %745 = vmatpush1.bf16.msra.mxu0 0
  %746 = vmatprep.subr.bf16.mxu0 0
  %747 = vmatpush1.bf16.msra.mxu0 0
  %748 = vmatprep.subr.bf16.mxu0 0
  %749 = vmatpush1.bf16.msra.mxu0 0
  %750 = vmatprep.subr.bf16.mxu0 0
  %751 = vmatpush1.bf16.msra.mxu0 0
  %752 = vmatprep.subr.bf16.mxu0 0
  %753 = vmatpush1.bf16.msra.mxu0 0
  %754 = vmatprep.subr.bf16.mxu0 0
  %755 = vmatpush1.bf16.msra.mxu0 0
  %756 = vmatprep.subr.bf16.mxu0 0
  %757 = vmatpush1.bf16.msra.mxu0 0
  %758 = vmatprep.subr.bf16.mxu0 0
  %759 = vmatpush1.bf16.msra.mxu0 0
  %760 = vmatprep.mubr.bf16.mxu0 0
  %761 = vmatmul.mubr.bf16.gmra.mrb[0].mxu0 %v673
  %v762 = vpop.f32.mrb[0].mxu0
  %v763 = vadd.f32 0.0, %v762
  %v764 = vpop.f32.mrb[0].mxu0
  %v765 = vadd.f32 0.0, %v764
  %v766 = vpop.f32.mrb[0].mxu0
  %v767 = vpop.f32.mrb[0].mxu0
  %768 = vdwg.mxu0
  %v769 = vadd.f32 %v635, %v722
  %v770 = vadd.f32 %v636, %v724
  %v771 = vadd.f32 %v637, %v763
  %v772 = vadd.f32 %v638, %v765
  %773 = vrot.lane.b32.xlu0 %v54, 127
  %v774 = vpop.permute.xlu0 %773
  %775 = vrot.lane.b32.xlu0 %v55, 127
  %v776 = vpop.permute.xlu0 %775
  %777 = vrot.lane.b32.xlu0 %v56, 127
  %v778 = vpop.permute.xlu0 %777
  %779 = vrot.lane.b32.xlu0 %v57, 127
  %v780 = vpop.permute.xlu0 %779
  %v781 = vsel %vm354, %v778, %v780
  %v782 = vsel %vm354, %v776, %v778
  %v783 = vsel %vm354, %v774, %v776
  %v784 = vsel %vm354, %v780, %v774
  %s785 = scalar_lea.vmem %s4, 5
  %v786 = vld [vmem:[%s785] ss:$8 sm:$0xf]
  %v788 = vlaneseq
  %v789 = vshrl.u32 %v788, 7
  %v790 = vsub.s32 0, %v789
  %v791 = vrot.slane %v786, %v790
  %v792 = vlaneseq
  %v793 = vshrl.u32 %v792, 7
  %v794 = vsub.s32 1, %v793
  %v795 = vrot.slane %v786, %v794
  %v796 = vlaneseq
  %v797 = vshrl.u32 %v796, 7
  %v798 = vsub.s32 2, %v797
  %v799 = vrot.slane %v786, %v798
  %v800 = vlaneseq
  %v801 = vshrl.u32 %v800, 7
  %v802 = vsub.s32 3, %v801
  %v803 = vrot.slane %v786, %v802
  %v808 = vmul.f32 %v783, %v791
  %v809 = vmul.f32 %v782, %v795
  %v810 = vmul.f32 %v781, %v799
  %v811 = vmul.f32 %v784, %v803
  %v812 = vpack.c.bf16 %v808, %v808
  %v813 = vpack.c.bf16 %v809, %v809
  %v814 = vpack.c.bf16 %v810, %v810
  %v815 = vpack.c.bf16 %v811, %v811
  %s816 = scalar_lea.vmem %s3, 20
  %v817 = vld [vmem:[%s816] sm:$0xf]
  %v819 = vsel %vm150, %v817, 0
  %v822 = vsel %vm154, %v812, 0
  %v825 = vsel %vm154, %v813, 0
  %v828 = vsel %vm154, %v814, 0
  %v831 = vsel %vm154, %v815, 0
  %833 = vmatprep.subr.bf16.mxu0 %v825
  %834 = vmatpush1.bf16.msra.mxu0 %v822
  %835 = vmatprep.subr.bf16.mxu0 0
  %836 = vmatpush1.bf16.msra.mxu0 0
  %837 = vmatprep.subr.bf16.mxu0 0
  %838 = vmatpush1.bf16.msra.mxu0 0
  %839 = vmatprep.subr.bf16.mxu0 0
  %840 = vmatpush1.bf16.msra.mxu0 0
  %841 = vmatprep.subr.bf16.mxu0 0
  %842 = vmatpush1.bf16.msra.mxu0 0
  %843 = vmatprep.subr.bf16.mxu0 0
  %844 = vmatpush1.bf16.msra.mxu0 0
  %845 = vmatprep.subr.bf16.mxu0 0
  %846 = vmatpush1.bf16.msra.mxu0 0
  %847 = vmatprep.subr.bf16.mxu0 0
  %848 = vmatpush1.bf16.msra.mxu0 0
  %849 = vmatprep.subr.bf16.mxu0 0
  %850 = vmatpush1.bf16.msra.mxu0 0
  %851 = vmatprep.subr.bf16.mxu0 0
  %852 = vmatpush1.bf16.msra.mxu0 0
  %853 = vmatprep.subr.bf16.mxu0 0
  %854 = vmatpush1.bf16.msra.mxu0 0
  %855 = vmatprep.subr.bf16.mxu0 0
  %856 = vmatpush1.bf16.msra.mxu0 0
  %857 = vmatprep.subr.bf16.mxu0 0
  %858 = vmatpush1.bf16.msra.mxu0 0
  %859 = vmatprep.subr.bf16.mxu0 0
  %860 = vmatpush1.bf16.msra.mxu0 0
  %861 = vmatprep.subr.bf16.mxu0 0
  %862 = vmatpush1.bf16.msra.mxu0 0
  %863 = vmatprep.subr.bf16.mxu0 0
  %864 = vmatpush1.bf16.msra.mxu0 0
  %865 = vmatprep.mubr.bf16.mxu0 0
  %866 = vmatmul.mubr.bf16.gmra.mrb[0].mxu0 %v819
  %v867 = vpop.f32.mrb[0].mxu0
  %v868 = vadd.f32 0.0, %v867
  %v869 = vpop.f32.mrb[0].mxu0
  %v870 = vadd.f32 0.0, %v869
  %v871 = vpop.f32.mrb[0].mxu0
  %v872 = vpop.f32.mrb[0].mxu0
  %873 = vdwg.mxu0
  %874 = vmatprep.subr.bf16.mxu0 %v831
  %875 = vmatpush1.bf16.msra.mxu0 %v828
  %876 = vmatprep.subr.bf16.mxu0 0
  %877 = vmatpush1.bf16.msra.mxu0 0
  %878 = vmatprep.subr.bf16.mxu0 0
  %879 = vmatpush1.bf16.msra.mxu0 0
  %880 = vmatprep.subr.bf16.mxu0 0
  %881 = vmatpush1.bf16.msra.mxu0 0
  %882 = vmatprep.subr.bf16.mxu0 0
  %883 = vmatpush1.bf16.msra.mxu0 0
  %884 = vmatprep.subr.bf16.mxu0 0
  %885 = vmatpush1.bf16.msra.mxu0 0
  %886 = vmatprep.subr.bf16.mxu0 0
  %887 = vmatpush1.bf16.msra.mxu0 0
  %888 = vmatprep.subr.bf16.mxu0 0
  %889 = vmatpush1.bf16.msra.mxu0 0
  %890 = vmatprep.subr.bf16.mxu0 0
  %891 = vmatpush1.bf16.msra.mxu0 0
  %892 = vmatprep.subr.bf16.mxu0 0
  %893 = vmatpush1.bf16.msra.mxu0 0
  %894 = vmatprep.subr.bf16.mxu0 0
  %895 = vmatpush1.bf16.msra.mxu0 0
  %896 = vmatprep.subr.bf16.mxu0 0
  %897 = vmatpush1.bf16.msra.mxu0 0
  %898 = vmatprep.subr.bf16.mxu0 0
  %899 = vmatpush1.bf16.msra.mxu0 0
  %900 = vmatprep.subr.bf16.mxu0 0
  %901 = vmatpush1.bf16.msra.mxu0 0
  %902 = vmatprep.subr.bf16.mxu0 0
  %903 = vmatpush1.bf16.msra.mxu0 0
  %904 = vmatprep.subr.bf16.mxu0 0
  %905 = vmatpush1.bf16.msra.mxu0 0
  %906 = vmatprep.mubr.bf16.mxu0 0
  %907 = vmatmul.mubr.bf16.gmra.mrb[0].mxu0 %v819
  %v908 = vpop.f32.mrb[0].mxu0
  %v909 = vadd.f32 0.0, %v908
  %v910 = vpop.f32.mrb[0].mxu0
  %v911 = vadd.f32 0.0, %v910
  %v912 = vpop.f32.mrb[0].mxu0
  %v913 = vpop.f32.mrb[0].mxu0
  %914 = vdwg.mxu0
  %v915 = vadd.f32 %v769, %v868
  %v916 = vadd.f32 %v770, %v870
  %v917 = vadd.f32 %v771, %v909
  %v918 = vadd.f32 %v772, %v911
  %919 = vrot.lane.b32.xlu0 %v54, 112
  %v920 = vpop.permute.xlu0 %919
  %921 = vrot.lane.b32.xlu0 %v55, 112
  %v922 = vpop.permute.xlu0 %921
  %923 = vrot.lane.b32.xlu0 %v56, 112
  %v924 = vpop.permute.xlu0 %923
  %925 = vrot.lane.b32.xlu0 %v57, 112
  %v926 = vpop.permute.xlu0 %925
  %vm927 = vcmp.lt.s32.totalorder %v67, 112
  %v928 = vsel %vm927, %v924, %v926
  %v929 = vsel %vm927, %v922, %v924
  %v930 = vsel %vm927, %v920, %v922
  %v931 = vsel %vm927, %v926, %v920
  %932 = vrot.lane.b32.xlu0 %v930, 1
  %v933 = vpop.permute.xlu0 %932
  %934 = vrot.lane.b32.xlu0 %v929, 1
  %v935 = vpop.permute.xlu0 %934
  %936 = vrot.lane.b32.xlu0 %v928, 1
  %v937 = vpop.permute.xlu0 %936
  %938 = vrot.lane.b32.xlu0 %v931, 1
  %v939 = vpop.permute.xlu0 %938
  %v940 = vsel %vm81, %v937, %v939
  %v941 = vsel %vm81, %v935, %v937
  %v942 = vsel %vm81, %v933, %v935
  %v943 = vsel %vm81, %v939, %v933
  %s944 = scalar_lea.vmem %s4, 6
  %v945 = vld [vmem:[%s944] ss:$8 sm:$0xf]
  %v947 = vlaneseq
  %v948 = vshrl.u32 %v947, 7
  %v949 = vsub.s32 0, %v948
  %v950 = vrot.slane %v945, %v949
  %v951 = vlaneseq
  %v952 = vshrl.u32 %v951, 7
  %v953 = vsub.s32 1, %v952
  %v954 = vrot.slane %v945, %v953
  %v955 = vlaneseq
  %v956 = vshrl.u32 %v955, 7
  %v957 = vsub.s32 2, %v956
  %v958 = vrot.slane %v945, %v957
  %v959 = vlaneseq
  %v960 = vshrl.u32 %v959, 7
  %v961 = vsub.s32 3, %v960
  %v962 = vrot.slane %v945, %v961
  %v967 = vmul.f32 %v943, %v950
  %v968 = vmul.f32 %v942, %v954
  %v969 = vmul.f32 %v941, %v958
  %v970 = vmul.f32 %v940, %v962
  %v971 = vpack.c.bf16 %v967, %v967
  %v972 = vpack.c.bf16 %v968, %v968
  %v973 = vpack.c.bf16 %v969, %v969
  %v974 = vpack.c.bf16 %v970, %v970
  %s975 = scalar_lea.vmem %s3, 24
  %v976 = vld [vmem:[%s975] sm:$0xf]
  %v978 = vsel %vm150, %v976, 0
  %v981 = vsel %vm154, %v971, 0
  %v984 = vsel %vm154, %v972, 0
  %v987 = vsel %vm154, %v973, 0
  %v990 = vsel %vm154, %v974, 0
  %992 = vmatprep.subr.bf16.mxu0 %v984
  %993 = vmatpush1.bf16.msra.mxu0 %v981
  %994 = vmatprep.subr.bf16.mxu0 0
  %995 = vmatpush1.bf16.msra.mxu0 0
  %996 = vmatprep.subr.bf16.mxu0 0
  %997 = vmatpush1.bf16.msra.mxu0 0
  %998 = vmatprep.subr.bf16.mxu0 0
  %999 = vmatpush1.bf16.msra.mxu0 0
  %1000 = vmatprep.subr.bf16.mxu0 0
  %1001 = vmatpush1.bf16.msra.mxu0 0
  %1002 = vmatprep.subr.bf16.mxu0 0
  %1003 = vmatpush1.bf16.msra.mxu0 0
  %1004 = vmatprep.subr.bf16.mxu0 0
  %1005 = vmatpush1.bf16.msra.mxu0 0
  %1006 = vmatprep.subr.bf16.mxu0 0
  %1007 = vmatpush1.bf16.msra.mxu0 0
  %1008 = vmatprep.subr.bf16.mxu0 0
  %1009 = vmatpush1.bf16.msra.mxu0 0
  %1010 = vmatprep.subr.bf16.mxu0 0
  %1011 = vmatpush1.bf16.msra.mxu0 0
  %1012 = vmatprep.subr.bf16.mxu0 0
  %1013 = vmatpush1.bf16.msra.mxu0 0
  %1014 = vmatprep.subr.bf16.mxu0 0
  %1015 = vmatpush1.bf16.msra.mxu0 0
  %1016 = vmatprep.subr.bf16.mxu0 0
  %1017 = vmatpush1.bf16.msra.mxu0 0
  %1018 = vmatprep.subr.bf16.mxu0 0
  %1019 = vmatpush1.bf16.msra.mxu0 0
  %1020 = vmatprep.subr.bf16.mxu0 0
  %1021 = vmatpush1.bf16.msra.mxu0 0
  %1022 = vmatprep.subr.bf16.mxu0 0
  %1023 = vmatpush1.bf16.msra.mxu0 0
  %1024 = vmatprep.mubr.bf16.mxu0 0
  %1025 = vmatmul.mubr.bf16.gmra.mrb[0].mxu0 %v978
  %v1026 = vpop.f32.mrb[0].mxu0
  %v1027 = vadd.f32 0.0, %v1026
  %v1028 = vpop.f32.mrb[0].mxu0
  %v1029 = vadd.f32 0.0, %v1028
  %v1030 = vpop.f32.mrb[0].mxu0
  %v1031 = vpop.f32.mrb[0].mxu0
  %1032 = vdwg.mxu0
  %1033 = vmatprep.subr.bf16.mxu0 %v990
  %1034 = vmatpush1.bf16.msra.mxu0 %v987
  %1035 = vmatprep.subr.bf16.mxu0 0
  %1036 = vmatpush1.bf16.msra.mxu0 0
  %1037 = vmatprep.subr.bf16.mxu0 0
  %1038 = vmatpush1.bf16.msra.mxu0 0
  %1039 = vmatprep.subr.bf16.mxu0 0
  %1040 = vmatpush1.bf16.msra.mxu0 0
  %1041 = vmatprep.subr.bf16.mxu0 0
  %1042 = vmatpush1.bf16.msra.mxu0 0
  %1043 = vmatprep.subr.bf16.mxu0 0
  %1044 = vmatpush1.bf16.msra.mxu0 0
  %1045 = vmatprep.subr.bf16.mxu0 0
  %1046 = vmatpush1.bf16.msra.mxu0 0
  %1047 = vmatprep.subr.bf16.mxu0 0
  %1048 = vmatpush1.bf16.msra.mxu0 0
  %1049 = vmatprep.subr.bf16.mxu0 0
  %1050 = vmatpush1.bf16.msra.mxu0 0
  %1051 = vmatprep.subr.bf16.mxu0 0
  %1052 = vmatpush1.bf16.msra.mxu0 0
  %1053 = vmatprep.subr.bf16.mxu0 0
  %1054 = vmatpush1.bf16.msra.mxu0 0
  %1055 = vmatprep.subr.bf16.mxu0 0
  %1056 = vmatpush1.bf16.msra.mxu0 0
  %1057 = vmatprep.subr.bf16.mxu0 0
  %1058 = vmatpush1.bf16.msra.mxu0 0
  %1059 = vmatprep.subr.bf16.mxu0 0
  %1060 = vmatpush1.bf16.msra.mxu0 0
  %1061 = vmatprep.subr.bf16.mxu0 0
  %1062 = vmatpush1.bf16.msra.mxu0 0
  %1063 = vmatprep.subr.bf16.mxu0 0
  %1064 = vmatpush1.bf16.msra.mxu0 0
  %1065 = vmatprep.mubr.bf16.mxu0 0
  %1066 = vmatmul.mubr.bf16.gmra.mrb[0].mxu0 %v978
  %v1067 = vpop.f32.mrb[0].mxu0
  %v1068 = vadd.f32 0.0, %v1067
  %v1069 = vpop.f32.mrb[0].mxu0
  %v1070 = vadd.f32 0.0, %v1069
  %v1071 = vpop.f32.mrb[0].mxu0
  %v1072 = vpop.f32.mrb[0].mxu0
  %1073 = vdwg.mxu0
  %v1074 = vadd.f32 %v915, %v1027
  %v1075 = vadd.f32 %v916, %v1029
  %v1076 = vadd.f32 %v917, %v1068
  %v1077 = vadd.f32 %v918, %v1070
  %s1078 = scalar_lea.vmem %s4, 7
  %v1079 = vld [vmem:[%s1078] ss:$8 sm:$0xf]
  %v1081 = vlaneseq
  %v1082 = vshrl.u32 %v1081, 7
  %v1083 = vsub.s32 0, %v1082
  %v1084 = vrot.slane %v1079, %v1083
  %v1085 = vlaneseq
  %v1086 = vshrl.u32 %v1085, 7
  %v1087 = vsub.s32 1, %v1086
  %v1088 = vrot.slane %v1079, %v1087
  %v1089 = vlaneseq
  %v1090 = vshrl.u32 %v1089, 7
  %v1091 = vsub.s32 2, %v1090
  %v1092 = vrot.slane %v1079, %v1091
  %v1093 = vlaneseq
  %v1094 = vshrl.u32 %v1093, 7
  %v1095 = vsub.s32 3, %v1094
  %v1096 = vrot.slane %v1079, %v1095
  %v1101 = vmul.f32 %v930, %v1084
  %v1102 = vmul.f32 %v929, %v1088
  %v1103 = vmul.f32 %v928, %v1092
  %v1104 = vmul.f32 %v931, %v1096
  %v1105 = vpack.c.bf16 %v1101, %v1101
  %v1106 = vpack.c.bf16 %v1102, %v1102
  %v1107 = vpack.c.bf16 %v1103, %v1103
  %v1108 = vpack.c.bf16 %v1104, %v1104
  %s1109 = scalar_lea.vmem %s3, 28
  %v1110 = vld [vmem:[%s1109] sm:$0xf]
  %v1112 = vsel %vm150, %v1110, 0
  %v1115 = vsel %vm154, %v1105, 0
  %v1118 = vsel %vm154, %v1106, 0
  %v1121 = vsel %vm154, %v1107, 0
  %v1124 = vsel %vm154, %v1108, 0
  %1126 = vmatprep.subr.bf16.mxu0 %v1118
  %1127 = vmatpush1.bf16.msra.mxu0 %v1115
  %1128 = vmatprep.subr.bf16.mxu0 0
  %1129 = vmatpush1.bf16.msra.mxu0 0
  %1130 = vmatprep.subr.bf16.mxu0 0
  %1131 = vmatpush1.bf16.msra.mxu0 0
  %1132 = vmatprep.subr.bf16.mxu0 0
  %1133 = vmatpush1.bf16.msra.mxu0 0
  %1134 = vmatprep.subr.bf16.mxu0 0
  %1135 = vmatpush1.bf16.msra.mxu0 0
  %1136 = vmatprep.subr.bf16.mxu0 0
  %1137 = vmatpush1.bf16.msra.mxu0 0
  %1138 = vmatprep.subr.bf16.mxu0 0
  %1139 = vmatpush1.bf16.msra.mxu0 0
  %1140 = vmatprep.subr.bf16.mxu0 0
  %1141 = vmatpush1.bf16.msra.mxu0 0
  %1142 = vmatprep.subr.bf16.mxu0 0
  %1143 = vmatpush1.bf16.msra.mxu0 0
  %1144 = vmatprep.subr.bf16.mxu0 0
  %1145 = vmatpush1.bf16.msra.mxu0 0
  %1146 = vmatprep.subr.bf16.mxu0 0
  %1147 = vmatpush1.bf16.msra.mxu0 0
  %1148 = vmatprep.subr.bf16.mxu0 0
  %1149 = vmatpush1.bf16.msra.mxu0 0
  %1150 = vmatprep.subr.bf16.mxu0 0
  %1151 = vmatpush1.bf16.msra.mxu0 0
  %1152 = vmatprep.subr.bf16.mxu0 0
  %1153 = vmatpush1.bf16.msra.mxu0 0
  %1154 = vmatprep.subr.bf16.mxu0 0
  %1155 = vmatpush1.bf16.msra.mxu0 0
  %1156 = vmatprep.subr.bf16.mxu0 0
  %1157 = vmatpush1.bf16.msra.mxu0 0
  %1158 = vmatprep.mubr.bf16.mxu0 0
  %1159 = vmatmul.mubr.bf16.gmra.mrb[0].mxu0 %v1112
  %v1160 = vpop.f32.mrb[0].mxu0
  %v1161 = vadd.f32 0.0, %v1160
  %v1162 = vpop.f32.mrb[0].mxu0
  %v1163 = vadd.f32 0.0, %v1162
  %v1164 = vpop.f32.mrb[0].mxu0
  %v1165 = vpop.f32.mrb[0].mxu0
  %1166 = vdwg.mxu0
  %1167 = vmatprep.subr.bf16.mxu0 %v1124
  %1168 = vmatpush1.bf16.msra.mxu0 %v1121
  %1169 = vmatprep.subr.bf16.mxu0 0
  %1170 = vmatpush1.bf16.msra.mxu0 0
  %1171 = vmatprep.subr.bf16.mxu0 0
  %1172 = vmatpush1.bf16.msra.mxu0 0
  %1173 = vmatprep.subr.bf16.mxu0 0
  %1174 = vmatpush1.bf16.msra.mxu0 0
  %1175 = vmatprep.subr.bf16.mxu0 0
  %1176 = vmatpush1.bf16.msra.mxu0 0
  %1177 = vmatprep.subr.bf16.mxu0 0
  %1178 = vmatpush1.bf16.msra.mxu0 0
  %1179 = vmatprep.subr.bf16.mxu0 0
  %1180 = vmatpush1.bf16.msra.mxu0 0
  %1181 = vmatprep.subr.bf16.mxu0 0
  %1182 = vmatpush1.bf16.msra.mxu0 0
  %1183 = vmatprep.subr.bf16.mxu0 0
  %1184 = vmatpush1.bf16.msra.mxu0 0
  %1185 = vmatprep.subr.bf16.mxu0 0
  %1186 = vmatpush1.bf16.msra.mxu0 0
  %1187 = vmatprep.subr.bf16.mxu0 0
  %1188 = vmatpush1.bf16.msra.mxu0 0
  %1189 = vmatprep.subr.bf16.mxu0 0
  %1190 = vmatpush1.bf16.msra.mxu0 0
  %1191 = vmatprep.subr.bf16.mxu0 0
  %1192 = vmatpush1.bf16.msra.mxu0 0
  %1193 = vmatprep.subr.bf16.mxu0 0
  %1194 = vmatpush1.bf16.msra.mxu0 0
  %1195 = vmatprep.subr.bf16.mxu0 0
  %1196 = vmatpush1.bf16.msra.mxu0 0
  %1197 = vmatprep.subr.bf16.mxu0 0
  %1198 = vmatpush1.bf16.msra.mxu0 0
  %1199 = vmatprep.mubr.bf16.mxu0 0
  %1200 = vmatmul.mubr.bf16.gmra.mrb[0].mxu0 %v1112
  %v1201 = vpop.f32.mrb[0].mxu0
  %v1202 = vadd.f32 0.0, %v1201
  %v1203 = vpop.f32.mrb[0].mxu0
  %v1204 = vadd.f32 0.0, %v1203
  %v1205 = vpop.f32.mrb[0].mxu0
  %v1206 = vpop.f32.mrb[0].mxu0
  %1207 = vdwg.mxu0
  %v1208 = vadd.f32 %v1074, %v1161
  %v1209 = vadd.f32 %v1075, %v1163
  %v1210 = vadd.f32 %v1076, %v1202
  %v1211 = vadd.f32 %v1077, %v1204
  %1212 = vrot.lane.b32.xlu0 %v930, 127
  %v1213 = vpop.permute.xlu0 %1212
  %1214 = vrot.lane.b32.xlu0 %v929, 127
  %v1215 = vpop.permute.xlu0 %1214
  %1216 = vrot.lane.b32.xlu0 %v928, 127
  %v1217 = vpop.permute.xlu0 %1216
  %1218 = vrot.lane.b32.xlu0 %v931, 127
  %v1219 = vpop.permute.xlu0 %1218
  %v1220 = vsel %vm354, %v1217, %v1219
  %v1221 = vsel %vm354, %v1215, %v1217
  %v1222 = vsel %vm354, %v1213, %v1215
  %v1223 = vsel %vm354, %v1219, %v1213
  %s1224 = scalar_lea.vmem %s4, 32
  %v1225 = vld [vmem:[%s1224] ss:$8 sm:$0xf]
  %v1227 = vlaneseq
  %v1228 = vshrl.u32 %v1227, 7
  %v1229 = vsub.s32 0, %v1228
  %v1230 = vrot.slane %v1225, %v1229
  %v1231 = vlaneseq
  %v1232 = vshrl.u32 %v1231, 7
  %v1233 = vsub.s32 1, %v1232
  %v1234 = vrot.slane %v1225, %v1233
  %v1235 = vlaneseq
  %v1236 = vshrl.u32 %v1235, 7
  %v1237 = vsub.s32 2, %v1236
  %v1238 = vrot.slane %v1225, %v1237
  %v1239 = vlaneseq
  %v1240 = vshrl.u32 %v1239, 7
  %v1241 = vsub.s32 3, %v1240
  %v1242 = vrot.slane %v1225, %v1241
  %v1247 = vmul.f32 %v1222, %v1230
  %v1248 = vmul.f32 %v1221, %v1234
  %v1249 = vmul.f32 %v1220, %v1238
  %v1250 = vmul.f32 %v1223, %v1242
  %v1251 = vpack.c.bf16 %v1247, %v1247
  %v1252 = vpack.c.bf16 %v1248, %v1248
  %v1253 = vpack.c.bf16 %v1249, %v1249
  %v1254 = vpack.c.bf16 %v1250, %v1250
  %s1255 = scalar_lea.vmem %s3, 32
  %v1256 = vld [vmem:[%s1255] sm:$0xf]
  %v1258 = vsel %vm150, %v1256, 0
  %v1261 = vsel %vm154, %v1251, 0
  %v1264 = vsel %vm154, %v1252, 0
  %v1267 = vsel %vm154, %v1253, 0
  %v1270 = vsel %vm154, %v1254, 0
  %1272 = vmatprep.subr.bf16.mxu0 %v1264
  %1273 = vmatpush1.bf16.msra.mxu0 %v1261
  %1274 = vmatprep.subr.bf16.mxu0 0
  %1275 = vmatpush1.bf16.msra.mxu0 0
  %1276 = vmatprep.subr.bf16.mxu0 0
  %1277 = vmatpush1.bf16.msra.mxu0 0
  %1278 = vmatprep.subr.bf16.mxu0 0
  %1279 = vmatpush1.bf16.msra.mxu0 0
  %1280 = vmatprep.subr.bf16.mxu0 0
  %1281 = vmatpush1.bf16.msra.mxu0 0
  %1282 = vmatprep.subr.bf16.mxu0 0
  %1283 = vmatpush1.bf16.msra.mxu0 0
  %1284 = vmatprep.subr.bf16.mxu0 0
  %1285 = vmatpush1.bf16.msra.mxu0 0
  %1286 = vmatprep.subr.bf16.mxu0 0
  %1287 = vmatpush1.bf16.msra.mxu0 0
  %1288 = vmatprep.subr.bf16.mxu0 0
  %1289 = vmatpush1.bf16.msra.mxu0 0
  %1290 = vmatprep.subr.bf16.mxu0 0
  %1291 = vmatpush1.bf16.msra.mxu0 0
  %1292 = vmatprep.subr.bf16.mxu0 0
  %1293 = vmatpush1.bf16.msra.mxu0 0
  %1294 = vmatprep.subr.bf16.mxu0 0
  %1295 = vmatpush1.bf16.msra.mxu0 0
  %1296 = vmatprep.subr.bf16.mxu0 0
  %1297 = vmatpush1.bf16.msra.mxu0 0
  %1298 = vmatprep.subr.bf16.mxu0 0
  %1299 = vmatpush1.bf16.msra.mxu0 0
  %1300 = vmatprep.subr.bf16.mxu0 0
  %1301 = vmatpush1.bf16.msra.mxu0 0
  %1302 = vmatprep.subr.bf16.mxu0 0
  %1303 = vmatpush1.bf16.msra.mxu0 0
  %1304 = vmatprep.mubr.bf16.mxu0 0
  %1305 = vmatmul.mubr.bf16.gmra.mrb[0].mxu0 %v1258
  %v1306 = vpop.f32.mrb[0].mxu0
  %v1307 = vadd.f32 0.0, %v1306
  %v1308 = vpop.f32.mrb[0].mxu0
  %v1309 = vadd.f32 0.0, %v1308
  %v1310 = vpop.f32.mrb[0].mxu0
  %v1311 = vpop.f32.mrb[0].mxu0
  %1312 = vdwg.mxu0
  %1313 = vmatprep.subr.bf16.mxu0 %v1270
  %1314 = vmatpush1.bf16.msra.mxu0 %v1267
  %1315 = vmatprep.subr.bf16.mxu0 0
  %1316 = vmatpush1.bf16.msra.mxu0 0
  %1317 = vmatprep.subr.bf16.mxu0 0
  %1318 = vmatpush1.bf16.msra.mxu0 0
  %1319 = vmatprep.subr.bf16.mxu0 0
  %1320 = vmatpush1.bf16.msra.mxu0 0
  %1321 = vmatprep.subr.bf16.mxu0 0
  %1322 = vmatpush1.bf16.msra.mxu0 0
  %1323 = vmatprep.subr.bf16.mxu0 0
  %1324 = vmatpush1.bf16.msra.mxu0 0
  %1325 = vmatprep.subr.bf16.mxu0 0
  %1326 = vmatpush1.bf16.msra.mxu0 0
  %1327 = vmatprep.subr.bf16.mxu0 0
  %1328 = vmatpush1.bf16.msra.mxu0 0
  %1329 = vmatprep.subr.bf16.mxu0 0
  %1330 = vmatpush1.bf16.msra.mxu0 0
  %1331 = vmatprep.subr.bf16.mxu0 0
  %1332 = vmatpush1.bf16.msra.mxu0 0
  %1333 = vmatprep.subr.bf16.mxu0 0
  %1334 = vmatpush1.bf16.msra.mxu0 0
  %1335 = vmatprep.subr.bf16.mxu0 0
  %1336 = vmatpush1.bf16.msra.mxu0 0
  %1337 = vmatprep.subr.bf16.mxu0 0
  %1338 = vmatpush1.bf16.msra.mxu0 0
  %1339 = vmatprep.subr.bf16.mxu0 0
  %1340 = vmatpush1.bf16.msra.mxu0 0
  %1341 = vmatprep.subr.bf16.mxu0 0
  %1342 = vmatpush1.bf16.msra.mxu0 0
  %1343 = vmatprep.subr.bf16.mxu0 0
  %1344 = vmatpush1.bf16.msra.mxu0 0
  %1345 = vmatprep.mubr.bf16.mxu0 0
  %1346 = vmatmul.mubr.bf16.gmra.mrb[0].mxu0 %v1258
  %v1347 = vpop.f32.mrb[0].mxu0
  %v1348 = vadd.f32 0.0, %v1347
  %v1349 = vpop.f32.mrb[0].mxu0
  %v1350 = vadd.f32 0.0, %v1349
  %v1351 = vpop.f32.mrb[0].mxu0
  %v1352 = vpop.f32.mrb[0].mxu0
  %1353 = vdwg.mxu0
  %v1354 = vadd.f32 %v1208, %v1307
  %v1355 = vadd.f32 %v1209, %v1309
  %v1356 = vadd.f32 %v1210, %v1348
  %v1357 = vadd.f32 %v1211, %v1350
  %1358 = vst [vmem:[#allocation2 + $0x20] sm:$0xff] %v1354
  %1359 = vst [vmem:[#allocation2 + $0x28] sm:$0xff] %v1355
  %1360 = vst [vmem:[#allocation2 + $0x30] sm:$0xff] %v1356
  %1361 = vst [vmem:[#allocation2 + $0x38] sm:$0xff] %v1357
  %v1362 = vld [vmem:[#allocation2] sm:$0xff]
  %v1363 = vld [vmem:[#allocation2 + $0x8] sm:$0xff]
  %v1364 = vld [vmem:[#allocation2 + $0x10] sm:$0xff]
  %v1365 = vld [vmem:[#allocation2 + $0x18] sm:$0xff]
  %v1366 = vld [vmem:[#allocation2 + $0x20] sm:$0xff]
  %v1367 = vld [vmem:[#allocation2 + $0x28] sm:$0xff]
  %v1368 = vld [vmem:[#allocation2 + $0x30] sm:$0xff]
  %v1369 = vld [vmem:[#allocation2 + $0x38] sm:$0xff]
  %v1370 = vld [vmem:[%s1] sm:$0xff]
  %v1371 = vld [vmem:[%s1 + $0x8] sm:$0xff]
  %v1372 = vld [vmem:[%s2] sm:$0xff]
  %v1373 = vld [vmem:[%s2 + $0x8] sm:$0xff]
  %1375 = vset.pattern.permute.xlu0 1
  %1376 = vperm.xlu0 %1375, %v1370
  %v1377 = vpop.permute.xlu0 %1376
  %1380 = vset.pattern.permute.xlu0 1
  %1381 = vperm.xlu0 %1380, %v1371
  %v1382 = vpop.permute.xlu0 %1381
  %v1384 = vmul.f32 %v1362, %v1377
  %v1385 = vmul.f32 %v1363, %v1377
  %v1386 = vmul.f32 %v1364, %v1377
  %v1387 = vmul.f32 %v1365, %v1377
  %v1388 = vmul.f32 %v1366, %v1382
  %v1389 = vmul.f32 %v1367, %v1382
  %v1390 = vmul.f32 %v1368, %v1382
  %v1391 = vmul.f32 %v1369, %v1382
  %1393 = vset.pattern.permute.xlu0 1
  %1394 = vperm.xlu0 %1393, %v1372
  %v1395 = vpop.permute.xlu0 %1394
  %1398 = vset.pattern.permute.xlu0 1
  %1399 = vperm.xlu0 %1398, %v1373
  %v1400 = vpop.permute.xlu0 %1399
  %v1402 = vadd.f32 %v1384, %v1395
  %v1403 = vadd.f32 %v1385, %v1395
  %v1404 = vadd.f32 %v1386, %v1395
  %v1405 = vadd.f32 %v1387, %v1395
  %v1406 = vadd.f32 %v1388, %v1400
  %v1407 = vadd.f32 %v1389, %v1400
  %v1408 = vadd.f32 %v1390, %v1400
  %v1409 = vadd.f32 %v1391, %v1400
  %v1410 = vmax.f32 %v1402, 0.0
  %v1411 = vmax.f32 %v1403, 0.0
  %v1412 = vmax.f32 %v1404, 0.0
  %v1413 = vmax.f32 %v1405, 0.0
  %v1414 = vmax.f32 %v1406, 0.0
  %v1415 = vmax.f32 %v1407, 0.0
  %v1416 = vmax.f32 %v1408, 0.0
  %v1417 = vmax.f32 %v1409, 0.0
  %1418 = vrot.lane.b32.xlu0 %v1410, 16
  %v1419 = vpop.permute.xlu0 %1418
  %1420 = vrot.lane.b32.xlu0 %v1414, 16
  %v1421 = vpop.permute.xlu0 %1420
  %1422 = vrot.lane.b32.xlu0 %v1411, 16
  %v1423 = vpop.permute.xlu0 %1422
  %1424 = vrot.lane.b32.xlu0 %v1415, 16
  %v1425 = vpop.permute.xlu0 %1424
  %1426 = vrot.lane.b32.xlu0 %v1412, 16
  %v1427 = vpop.permute.xlu0 %1426
  %1428 = vrot.lane.b32.xlu0 %v1416, 16
  %v1429 = vpop.permute.xlu0 %1428
  %1430 = vrot.lane.b32.xlu0 %v1413, 16
  %v1431 = vpop.permute.xlu0 %1430
  %1432 = vrot.lane.b32.xlu0 %v1417, 16
  %v1433 = vpop.permute.xlu0 %1432
  %v1434 = vsel %vm68, %v1427, %v1431
  %v1435 = vsel %vm68, %v1429, %v1433
  %v1436 = vsel %vm68, %v1423, %v1427
  %v1437 = vsel %vm68, %v1425, %v1429
  %v1438 = vsel %vm68, %v1419, %v1423
  %v1439 = vsel %vm68, %v1421, %v1425
  %v1440 = vsel %vm68, %v1431, %v1419
  %v1441 = vsel %vm68, %v1433, %v1421
  %1442 = vrot.lane.b32.xlu0 %v1440, 1
  %v1443 = vpop.permute.xlu0 %1442
  %1444 = vrot.lane.b32.xlu0 %v1441, 1
  %v1445 = vpop.permute.xlu0 %1444
  %1446 = vrot.lane.b32.xlu0 %v1438, 1
  %v1447 = vpop.permute.xlu0 %1446
  %1448 = vrot.lane.b32.xlu0 %v1439, 1
  %v1449 = vpop.permute.xlu0 %1448
  %1450 = vrot.lane.b32.xlu0 %v1436, 1
  %v1451 = vpop.permute.xlu0 %1450
  %1452 = vrot.lane.b32.xlu0 %v1437, 1
  %v1453 = vpop.permute.xlu0 %1452
  %1454 = vrot.lane.b32.xlu0 %v1434, 1
  %v1455 = vpop.permute.xlu0 %1454
  %1456 = vrot.lane.b32.xlu0 %v1435, 1
  %v1457 = vpop.permute.xlu0 %1456
  %v1458 = vsel %vm81, %v1451, %v1455
  %v1459 = vsel %vm81, %v1453, %v1457
  %v1460 = vsel %vm81, %v1447, %v1451
  %v1461 = vsel %vm81, %v1449, %v1453
  %v1462 = vsel %vm81, %v1443, %v1447
  %v1463 = vsel %vm81, %v1445, %v1449
  %v1464 = vsel %vm81, %v1455, %v1443
  %v1465 = vsel %vm81, %v1457, %v1445
  %v1466 = vld [vmem:[%s4] ss:$8 sm:$0xf]
  %v1468 = vlaneseq
  %v1469 = vshrl.u32 %v1468, 7
  %v1470 = vsub.s32 0, %v1469
  %v1471 = vrot.slane %v1466, %v1470
  %v1472 = vlaneseq
  %v1473 = vshrl.u32 %v1472, 7
  %v1474 = vsub.s32 1, %v1473
  %v1475 = vrot.slane %v1466, %v1474
  %v1476 = vlaneseq
  %v1477 = vshrl.u32 %v1476, 7
  %v1478 = vsub.s32 2, %v1477
  %v1479 = vrot.slane %v1466, %v1478
  %v1480 = vlaneseq
  %v1481 = vshrl.u32 %v1480, 7
  %v1482 = vsub.s32 3, %v1481
  %v1483 = vrot.slane %v1466, %v1482
  %v1488 = vmul.f32 %v1464, %v1471
  %v1489 = vmul.f32 %v1462, %v1475
  %v1490 = vmul.f32 %v1460, %v1479
  %v1491 = vmul.f32 %v1458, %v1483
  %v1492 = vmul.f32 %v1465, %v1471
  %v1493 = vmul.f32 %v1463, %v1475
  %v1494 = vmul.f32 %v1461, %v1479
  %v1495 = vmul.f32 %v1459, %v1483
  %v1496 = vpack.c.bf16 %v1492, %v1488
  %v1497 = vpack.c.bf16 %v1493, %v1489
  %v1498 = vpack.c.bf16 %v1494, %v1490
  %v1499 = vpack.c.bf16 %v1495, %v1491
  %s1500 = scalar_lea.vmem %s3, 36
  %v1501 = vld [vmem:[%s1500] sm:$0xf]
  %v1502 = vld [vmem:[%s117] ss:$8 sm:$0xf]
  %v1504 = vlaneseq
  %v1505 = vshrl.u32 %v1504, 7
  %v1506 = vsub.s32 0, %v1505
  %v1507 = vrot.slane %v1502, %v1506
  %v1508 = vlaneseq
  %v1509 = vshrl.u32 %v1508, 7
  %v1510 = vsub.s32 1, %v1509
  %v1511 = vrot.slane %v1502, %v1510
  %v1512 = vlaneseq
  %v1513 = vshrl.u32 %v1512, 7
  %v1514 = vsub.s32 2, %v1513
  %v1515 = vrot.slane %v1502, %v1514
  %v1516 = vlaneseq
  %v1517 = vshrl.u32 %v1516, 7
  %v1518 = vsub.s32 3, %v1517
  %v1519 = vrot.slane %v1502, %v1518
  %v1524 = vmul.f32 %v1440, %v1507
  %v1525 = vmul.f32 %v1438, %v1511
  %v1526 = vmul.f32 %v1436, %v1515
  %v1527 = vmul.f32 %v1434, %v1519
  %v1528 = vmul.f32 %v1441, %v1507
  %v1529 = vmul.f32 %v1439, %v1511
  %v1530 = vmul.f32 %v1437, %v1515
  %v1531 = vmul.f32 %v1435, %v1519
  %v1532 = vpack.c.bf16 %v1528, %v1524
  %v1533 = vpack.c.bf16 %v1529, %v1525
  %v1534 = vpack.c.bf16 %v1530, %v1526
  %v1535 = vpack.c.bf16 %v1531, %v1527
  %s1536 = scalar_lea.vmem %s3, 40
  %v1537 = vld [vmem:[%s1536] sm:$0xf]
  %vm1538 = vcmask 130048
  %v1540 = vsel %vm1538, %v1537, 0
  %1542 = vmatprep.subr.bf16.mxu0 %v1533
  %1543 = vmatpush1.bf16.msra.mxu0 %v1532
  %1544 = vmatprep.subr.bf16.mxu0 0
  %1545 = vmatpush1.bf16.msra.mxu0 0
  %1546 = vmatprep.subr.bf16.mxu0 0
  %1547 = vmatpush1.bf16.msra.mxu0 0
  %1548 = vmatprep.subr.bf16.mxu0 0
  %1549 = vmatpush1.bf16.msra.mxu0 0
  %1550 = vmatprep.subr.bf16.mxu0 0
  %1551 = vmatpush1.bf16.msra.mxu0 0
  %1552 = vmatprep.subr.bf16.mxu0 0
  %1553 = vmatpush1.bf16.msra.mxu0 0
  %1554 = vmatprep.subr.bf16.mxu0 0
  %1555 = vmatpush1.bf16.msra.mxu0 0
  %1556 = vmatprep.subr.bf16.mxu0 0
  %1557 = vmatpush1.bf16.msra.mxu0 0
  %1558 = vmatprep.subr.bf16.mxu0 0
  %1559 = vmatpush1.bf16.msra.mxu0 0
  %1560 = vmatprep.subr.bf16.mxu0 0
  %1561 = vmatpush1.bf16.msra.mxu0 0
  %1562 = vmatprep.subr.bf16.mxu0 0
  %1563 = vmatpush1.bf16.msra.mxu0 0
  %1564 = vmatprep.subr.bf16.mxu0 0
  %1565 = vmatpush1.bf16.msra.mxu0 0
  %1566 = vmatprep.subr.bf16.mxu0 0
  %1567 = vmatpush1.bf16.msra.mxu0 0
  %1568 = vmatprep.subr.bf16.mxu0 0
  %1569 = vmatpush1.bf16.msra.mxu0 0
  %1570 = vmatprep.subr.bf16.mxu0 0
  %1571 = vmatpush1.bf16.msra.mxu0 0
  %1572 = vmatprep.subr.bf16.mxu0 0
  %1573 = vmatpush1.bf16.msra.mxu0 0
  %1574 = vmatprep.mubr.bf16.mxu0 0
  %1575 = vmatmul.mubr.bf16.gmra.mrb[0].mxu0 %v1540
  %v1576 = vpop.f32.mrb[0].mxu0
  %v1577 = vadd.f32 0.0, %v1576
  %v1578 = vpop.f32.mrb[0].mxu0
  %v1579 = vadd.f32 0.0, %v1578
  %v1580 = vpop.f32.mrb[0].mxu0
  %v1581 = vpop.f32.mrb[0].mxu0
  %1582 = vdwg.mxu0
  %1583 = vmatprep.subr.bf16.mxu0 %v1535
  %1584 = vmatpush1.bf16.msra.mxu0 %v1534
  %1585 = vmatprep.subr.bf16.mxu0 0
  %1586 = vmatpush1.bf16.msra.mxu0 0
  %1587 = vmatprep.subr.bf16.mxu0 0
  %1588 = vmatpush1.bf16.msra.mxu0 0
  %1589 = vmatprep.subr.bf16.mxu0 0
  %1590 = vmatpush1.bf16.msra.mxu0 0
  %1591 = vmatprep.subr.bf16.mxu0 0
  %1592 = vmatpush1.bf16.msra.mxu0 0
  %1593 = vmatprep.subr.bf16.mxu0 0
  %1594 = vmatpush1.bf16.msra.mxu0 0
  %1595 = vmatprep.subr.bf16.mxu0 0
  %1596 = vmatpush1.bf16.msra.mxu0 0
  %1597 = vmatprep.subr.bf16.mxu0 0
  %1598 = vmatpush1.bf16.msra.mxu0 0
  %1599 = vmatprep.subr.bf16.mxu0 0
  %1600 = vmatpush1.bf16.msra.mxu0 0
  %1601 = vmatprep.subr.bf16.mxu0 0
  %1602 = vmatpush1.bf16.msra.mxu0 0
  %1603 = vmatprep.subr.bf16.mxu0 0
  %1604 = vmatpush1.bf16.msra.mxu0 0
  %1605 = vmatprep.subr.bf16.mxu0 0
  %1606 = vmatpush1.bf16.msra.mxu0 0
  %1607 = vmatprep.subr.bf16.mxu0 0
  %1608 = vmatpush1.bf16.msra.mxu0 0
  %1609 = vmatprep.subr.bf16.mxu0 0
  %1610 = vmatpush1.bf16.msra.mxu0 0
  %1611 = vmatprep.subr.bf16.mxu0 0
  %1612 = vmatpush1.bf16.msra.mxu0 0
  %1613 = vmatprep.subr.bf16.mxu0 0
  %1614 = vmatpush1.bf16.msra.mxu0 0
  %1615 = vmatprep.mubr.bf16.mxu0 0
  %1616 = vmatmul.mubr.bf16.gmra.mrb[0].mxu0 %v1540
  %v1617 = vpop.f32.mrb[0].mxu0
  %v1618 = vadd.f32 0.0, %v1617
  %v1619 = vpop.f32.mrb[0].mxu0
  %v1620 = vadd.f32 0.0, %v1619
  %v1621 = vpop.f32.mrb[0].mxu0
  %v1622 = vpop.f32.mrb[0].mxu0
  %1623 = vdwg.mxu0
  %v1625 = vsel %vm1538, %v1501, 0
  %1627 = vmatprep.subr.bf16.mxu0 %v1497
  %1628 = vmatpush1.bf16.msra.mxu0 %v1496
  %1629 = vmatprep.subr.bf16.mxu0 0
  %1630 = vmatpush1.bf16.msra.mxu0 0
  %1631 = vmatprep.subr.bf16.mxu0 0
  %1632 = vmatpush1.bf16.msra.mxu0 0
  %1633 = vmatprep.subr.bf16.mxu0 0
  %1634 = vmatpush1.bf16.msra.mxu0 0
  %1635 = vmatprep.subr.bf16.mxu0 0
  %1636 = vmatpush1.bf16.msra.mxu0 0
  %1637 = vmatprep.subr.bf16.mxu0 0
  %1638 = vmatpush1.bf16.msra.mxu0 0
  %1639 = vmatprep.subr.bf16.mxu0 0
  %1640 = vmatpush1.bf16.msra.mxu0 0
  %1641 = vmatprep.subr.bf16.mxu0 0
  %1642 = vmatpush1.bf16.msra.mxu0 0
  %1643 = vmatprep.subr.bf16.mxu0 0
  %1644 = vmatpush1.bf16.msra.mxu0 0
  %1645 = vmatprep.subr.bf16.mxu0 0
  %1646 = vmatpush1.bf16.msra.mxu0 0
  %1647 = vmatprep.subr.bf16.mxu0 0
  %1648 = vmatpush1.bf16.msra.mxu0 0
  %1649 = vmatprep.subr.bf16.mxu0 0
  %1650 = vmatpush1.bf16.msra.mxu0 0
  %1651 = vmatprep.subr.bf16.mxu0 0
  %1652 = vmatpush1.bf16.msra.mxu0 0
  %1653 = vmatprep.subr.bf16.mxu0 0
  %1654 = vmatpush1.bf16.msra.mxu0 0
  %1655 = vmatprep.subr.bf16.mxu0 0
  %1656 = vmatpush1.bf16.msra.mxu0 0
  %1657 = vmatprep.subr.bf16.mxu0 0
  %1658 = vmatpush1.bf16.msra.mxu0 0
  %1659 = vmatprep.mubr.bf16.mxu0 0
  %1660 = vmatmul.mubr.bf16.gmra.mrb[0].mxu0 %v1625
  %v1661 = vpop.f32.mrb[0].mxu0
  %v1662 = vadd.f32 %v1577, %v1661
  %v1663 = vpop.f32.mrb[0].mxu0
  %v1664 = vadd.f32 %v1579, %v1663
  %v1665 = vpop.f32.mrb[0].mxu0
  %v1666 = vpop.f32.mrb[0].mxu0
  %1667 = vdwg.mxu0
  %1668 = vmatprep.subr.bf16.mxu0 %v1499
  %1669 = vmatpush1.bf16.msra.mxu0 %v1498
  %1670 = vmatprep.subr.bf16.mxu0 0
  %1671 = vmatpush1.bf16.msra.mxu0 0
  %1672 = vmatprep.subr.bf16.mxu0 0
  %1673 = vmatpush1.bf16.msra.mxu0 0
  %1674 = vmatprep.subr.bf16.mxu0 0
  %1675 = vmatpush1.bf16.msra.mxu0 0
  %1676 = vmatprep.subr.bf16.mxu0 0
  %1677 = vmatpush1.bf16.msra.mxu0 0
  %1678 = vmatprep.subr.bf16.mxu0 0
  %1679 = vmatpush1.bf16.msra.mxu0 0
  %1680 = vmatprep.subr.bf16.mxu0 0
  %1681 = vmatpush1.bf16.msra.mxu0 0
  %1682 = vmatprep.subr.bf16.mxu0 0
  %1683 = vmatpush1.bf16.msra.mxu0 0
  %1684 = vmatprep.subr.bf16.mxu0 0
  %1685 = vmatpush1.bf16.msra.mxu0 0
  %1686 = vmatprep.subr.bf16.mxu0 0
  %1687 = vmatpush1.bf16.msra.mxu0 0
  %1688 = vmatprep.subr.bf16.mxu0 0
  %1689 = vmatpush1.bf16.msra.mxu0 0
  %1690 = vmatprep.subr.bf16.mxu0 0
  %1691 = vmatpush1.bf16.msra.mxu0 0
  %1692 = vmatprep.subr.bf16.mxu0 0
  %1693 = vmatpush1.bf16.msra.mxu0 0
  %1694 = vmatprep.subr.bf16.mxu0 0
  %1695 = vmatpush1.bf16.msra.mxu0 0
  %1696 = vmatprep.subr.bf16.mxu0 0
  %1697 = vmatpush1.bf16.msra.mxu0 0
  %1698 = vmatprep.subr.bf16.mxu0 0
  %1699 = vmatpush1.bf16.msra.mxu0 0
  %1700 = vmatprep.mubr.bf16.mxu0 0
  %1701 = vmatmul.mubr.bf16.gmra.mrb[0].mxu0 %v1625
  %v1702 = vpop.f32.mrb[0].mxu0
  %v1703 = vadd.f32 %v1618, %v1702
  %v1704 = vpop.f32.mrb[0].mxu0
  %v1705 = vadd.f32 %v1620, %v1704
  %v1706 = vpop.f32.mrb[0].mxu0
  %v1707 = vpop.f32.mrb[0].mxu0
  %1708 = vdwg.mxu0
  %1709 = vrot.lane.b32.xlu0 %v1440, 127
  %v1710 = vpop.permute.xlu0 %1709
  %1711 = vrot.lane.b32.xlu0 %v1441, 127
  %v1712 = vpop.permute.xlu0 %1711
  %1713 = vrot.lane.b32.xlu0 %v1438, 127
  %v1714 = vpop.permute.xlu0 %1713
  %1715 = vrot.lane.b32.xlu0 %v1439, 127
  %v1716 = vpop.permute.xlu0 %1715
  %1717 = vrot.lane.b32.xlu0 %v1436, 127
  %v1718 = vpop.permute.xlu0 %1717
  %1719 = vrot.lane.b32.xlu0 %v1437, 127
  %v1720 = vpop.permute.xlu0 %1719
  %1721 = vrot.lane.b32.xlu0 %v1434, 127
  %v1722 = vpop.permute.xlu0 %1721
  %1723 = vrot.lane.b32.xlu0 %v1435, 127
  %v1724 = vpop.permute.xlu0 %1723
  %v1725 = vsel %vm354, %v1718, %v1722
  %v1726 = vsel %vm354, %v1720, %v1724
  %v1727 = vsel %vm354, %v1714, %v1718
  %v1728 = vsel %vm354, %v1716, %v1720
  %v1729 = vsel %vm354, %v1710, %v1714
  %v1730 = vsel %vm354, %v1712, %v1716
  %v1731 = vsel %vm354, %v1722, %v1710
  %v1732 = vsel %vm354, %v1724, %v1712
  %v1733 = vld [vmem:[%s359] ss:$8 sm:$0xf]
  %v1735 = vlaneseq
  %v1736 = vshrl.u32 %v1735, 7
  %v1737 = vsub.s32 0, %v1736
  %v1738 = vrot.slane %v1733, %v1737
  %v1739 = vlaneseq
  %v1740 = vshrl.u32 %v1739, 7
  %v1741 = vsub.s32 1, %v1740
  %v1742 = vrot.slane %v1733, %v1741
  %v1743 = vlaneseq
  %v1744 = vshrl.u32 %v1743, 7
  %v1745 = vsub.s32 2, %v1744
  %v1746 = vrot.slane %v1733, %v1745
  %v1747 = vlaneseq
  %v1748 = vshrl.u32 %v1747, 7
  %v1749 = vsub.s32 3, %v1748
  %v1750 = vrot.slane %v1733, %v1749
  %v1755 = vmul.f32 %v1729, %v1738
  %v1756 = vmul.f32 %v1727, %v1742
  %v1757 = vmul.f32 %v1725, %v1746
  %v1758 = vmul.f32 %v1731, %v1750
  %v1759 = vmul.f32 %v1730, %v1738
  %v1760 = vmul.f32 %v1728, %v1742
  %v1761 = vmul.f32 %v1726, %v1746
  %v1762 = vmul.f32 %v1732, %v1750
  %v1763 = vpack.c.bf16 %v1759, %v1755
  %v1764 = vpack.c.bf16 %v1760, %v1756
  %v1765 = vpack.c.bf16 %v1761, %v1757
  %v1766 = vpack.c.bf16 %v1762, %v1758
  %s1767 = scalar_lea.vmem %s3, 44
  %v1768 = vld [vmem:[%s1767] sm:$0xf]
  %v1770 = vsel %vm1538, %v1768, 0
  %1772 = vmatprep.subr.bf16.mxu0 %v1764
  %1773 = vmatpush1.bf16.msra.mxu0 %v1763
  %1774 = vmatprep.subr.bf16.mxu0 0
  %1775 = vmatpush1.bf16.msra.mxu0 0
  %1776 = vmatprep.subr.bf16.mxu0 0
  %1777 = vmatpush1.bf16.msra.mxu0 0
  %1778 = vmatprep.subr.bf16.mxu0 0
  %1779 = vmatpush1.bf16.msra.mxu0 0
  %1780 = vmatprep.subr.bf16.mxu0 0
  %1781 = vmatpush1.bf16.msra.mxu0 0
  %1782 = vmatprep.subr.bf16.mxu0 0
  %1783 = vmatpush1.bf16.msra.mxu0 0
  %1784 = vmatprep.subr.bf16.mxu0 0
  %1785 = vmatpush1.bf16.msra.mxu0 0
  %1786 = vmatprep.subr.bf16.mxu0 0
  %1787 = vmatpush1.bf16.msra.mxu0 0
  %1788 = vmatprep.subr.bf16.mxu0 0
  %1789 = vmatpush1.bf16.msra.mxu0 0
  %1790 = vmatprep.subr.bf16.mxu0 0
  %1791 = vmatpush1.bf16.msra.mxu0 0
  %1792 = vmatprep.subr.bf16.mxu0 0
  %1793 = vmatpush1.bf16.msra.mxu0 0
  %1794 = vmatprep.subr.bf16.mxu0 0
  %1795 = vmatpush1.bf16.msra.mxu0 0
  %1796 = vmatprep.subr.bf16.mxu0 0
  %1797 = vmatpush1.bf16.msra.mxu0 0
  %1798 = vmatprep.subr.bf16.mxu0 0
  %1799 = vmatpush1.bf16.msra.mxu0 0
  %1800 = vmatprep.subr.bf16.mxu0 0
  %1801 = vmatpush1.bf16.msra.mxu0 0
  %1802 = vmatprep.subr.bf16.mxu0 0
  %1803 = vmatpush1.bf16.msra.mxu0 0
  %1804 = vmatprep.mubr.bf16.mxu0 0
  %1805 = vmatmul.mubr.bf16.gmra.mrb[0].mxu0 %v1770
  %v1806 = vpop.f32.mrb[0].mxu0
  %v1807 = vadd.f32 0.0, %v1806
  %v1808 = vpop.f32.mrb[0].mxu0
  %v1809 = vadd.f32 0.0, %v1808
  %v1810 = vpop.f32.mrb[0].mxu0
  %v1811 = vpop.f32.mrb[0].mxu0
  %1812 = vdwg.mxu0
  %1813 = vmatprep.subr.bf16.mxu0 %v1766
  %1814 = vmatpush1.bf16.msra.mxu0 %v1765
  %1815 = vmatprep.subr.bf16.mxu0 0
  %1816 = vmatpush1.bf16.msra.mxu0 0
  %1817 = vmatprep.subr.bf16.mxu0 0
  %1818 = vmatpush1.bf16.msra.mxu0 0
  %1819 = vmatprep.subr.bf16.mxu0 0
  %1820 = vmatpush1.bf16.msra.mxu0 0
  %1821 = vmatprep.subr.bf16.mxu0 0
  %1822 = vmatpush1.bf16.msra.mxu0 0
  %1823 = vmatprep.subr.bf16.mxu0 0
  %1824 = vmatpush1.bf16.msra.mxu0 0
  %1825 = vmatprep.subr.bf16.mxu0 0
  %1826 = vmatpush1.bf16.msra.mxu0 0
  %1827 = vmatprep.subr.bf16.mxu0 0
  %1828 = vmatpush1.bf16.msra.mxu0 0
  %1829 = vmatprep.subr.bf16.mxu0 0
  %1830 = vmatpush1.bf16.msra.mxu0 0
  %1831 = vmatprep.subr.bf16.mxu0 0
  %1832 = vmatpush1.bf16.msra.mxu0 0
  %1833 = vmatprep.subr.bf16.mxu0 0
  %1834 = vmatpush1.bf16.msra.mxu0 0
  %1835 = vmatprep.subr.bf16.mxu0 0
  %1836 = vmatpush1.bf16.msra.mxu0 0
  %1837 = vmatprep.subr.bf16.mxu0 0
  %1838 = vmatpush1.bf16.msra.mxu0 0
  %1839 = vmatprep.subr.bf16.mxu0 0
  %1840 = vmatpush1.bf16.msra.mxu0 0
  %1841 = vmatprep.subr.bf16.mxu0 0
  %1842 = vmatpush1.bf16.msra.mxu0 0
  %1843 = vmatprep.subr.bf16.mxu0 0
  %1844 = vmatpush1.bf16.msra.mxu0 0
  %1845 = vmatprep.mubr.bf16.mxu0 0
  %1846 = vmatmul.mubr.bf16.gmra.mrb[0].mxu0 %v1770
  %v1847 = vpop.f32.mrb[0].mxu0
  %v1848 = vadd.f32 0.0, %v1847
  %v1849 = vpop.f32.mrb[0].mxu0
  %v1850 = vadd.f32 0.0, %v1849
  %v1851 = vpop.f32.mrb[0].mxu0
  %v1852 = vpop.f32.mrb[0].mxu0
  %1853 = vdwg.mxu0
  %v1854 = vadd.f32 %v1662, %v1807
  %v1855 = vadd.f32 %v1664, %v1809
  %v1856 = vadd.f32 %v1703, %v1848
  %v1857 = vadd.f32 %v1705, %v1850
  %1858 = vrot.lane.b32.xlu0 %v1410, 1
  %v1859 = vpop.permute.xlu0 %1858
  %1860 = vrot.lane.b32.xlu0 %v1414, 1
  %v1861 = vpop.permute.xlu0 %1860
  %1862 = vrot.lane.b32.xlu0 %v1411, 1
  %v1863 = vpop.permute.xlu0 %1862
  %1864 = vrot.lane.b32.xlu0 %v1415, 1
  %v1865 = vpop.permute.xlu0 %1864
  %1866 = vrot.lane.b32.xlu0 %v1412, 1
  %v1867 = vpop.permute.xlu0 %1866
  %1868 = vrot.lane.b32.xlu0 %v1416, 1
  %v1869 = vpop.permute.xlu0 %1868
  %1870 = vrot.lane.b32.xlu0 %v1413, 1
  %v1871 = vpop.permute.xlu0 %1870
  %1872 = vrot.lane.b32.xlu0 %v1417, 1
  %v1873 = vpop.permute.xlu0 %1872
  %v1874 = vsel %vm81, %v1867, %v1871
  %v1875 = vsel %vm81, %v1869, %v1873
  %v1876 = vsel %vm81, %v1863, %v1867
  %v1877 = vsel %vm81, %v1865, %v1869
  %v1878 = vsel %vm81, %v1859, %v1863
  %v1879 = vsel %vm81, %v1861, %v1865
  %v1880 = vsel %vm81, %v1871, %v1859
  %v1881 = vsel %vm81, %v1873, %v1861
  %v1882 = vld [vmem:[%s505] ss:$8 sm:$0xf]
  %v1884 = vlaneseq
  %v1885 = vshrl.u32 %v1884, 7
  %v1886 = vsub.s32 0, %v1885
  %v1887 = vrot.slane %v1882, %v1886
  %v1888 = vlaneseq
  %v1889 = vshrl.u32 %v1888, 7
  %v1890 = vsub.s32 1, %v1889
  %v1891 = vrot.slane %v1882, %v1890
  %v1892 = vlaneseq
  %v1893 = vshrl.u32 %v1892, 7
  %v1894 = vsub.s32 2, %v1893
  %v1895 = vrot.slane %v1882, %v1894
  %v1896 = vlaneseq
  %v1897 = vshrl.u32 %v1896, 7
  %v1898 = vsub.s32 3, %v1897
  %v1899 = vrot.slane %v1882, %v1898
  %v1904 = vmul.f32 %v1880, %v1887
  %v1905 = vmul.f32 %v1878, %v1891
  %v1906 = vmul.f32 %v1876, %v1895
  %v1907 = vmul.f32 %v1874, %v1899
  %v1908 = vmul.f32 %v1881, %v1887
  %v1909 = vmul.f32 %v1879, %v1891
  %v1910 = vmul.f32 %v1877, %v1895
  %v1911 = vmul.f32 %v1875, %v1899
  %v1912 = vpack.c.bf16 %v1908, %v1904
  %v1913 = vpack.c.bf16 %v1909, %v1905
  %v1914 = vpack.c.bf16 %v1910, %v1906
  %v1915 = vpack.c.bf16 %v1911, %v1907
  %s1916 = scalar_lea.vmem %s3, 48
  %v1917 = vld [vmem:[%s1916] sm:$0xf]
  %v1919 = vsel %vm1538, %v1917, 0
  %1921 = vmatprep.subr.bf16.mxu0 %v1913
  %1922 = vmatpush1.bf16.msra.mxu0 %v1912
  %1923 = vmatprep.subr.bf16.mxu0 0
  %1924 = vmatpush1.bf16.msra.mxu0 0
  %1925 = vmatprep.subr.bf16.mxu0 0
  %1926 = vmatpush1.bf16.msra.mxu0 0
  %1927 = vmatprep.subr.bf16.mxu0 0
  %1928 = vmatpush1.bf16.msra.mxu0 0
  %1929 = vmatprep.subr.bf16.mxu0 0
  %1930 = vmatpush1.bf16.msra.mxu0 0
  %1931 = vmatprep.subr.bf16.mxu0 0
  %1932 = vmatpush1.bf16.msra.mxu0 0
  %1933 = vmatprep.subr.bf16.mxu0 0
  %1934 = vmatpush1.bf16.msra.mxu0 0
  %1935 = vmatprep.subr.bf16.mxu0 0
  %1936 = vmatpush1.bf16.msra.mxu0 0
  %1937 = vmatprep.subr.bf16.mxu0 0
  %1938 = vmatpush1.bf16.msra.mxu0 0
  %1939 = vmatprep.subr.bf16.mxu0 0
  %1940 = vmatpush1.bf16.msra.mxu0 0
  %1941 = vmatprep.subr.bf16.mxu0 0
  %1942 = vmatpush1.bf16.msra.mxu0 0
  %1943 = vmatprep.subr.bf16.mxu0 0
  %1944 = vmatpush1.bf16.msra.mxu0 0
  %1945 = vmatprep.subr.bf16.mxu0 0
  %1946 = vmatpush1.bf16.msra.mxu0 0
  %1947 = vmatprep.subr.bf16.mxu0 0
  %1948 = vmatpush1.bf16.msra.mxu0 0
  %1949 = vmatprep.subr.bf16.mxu0 0
  %1950 = vmatpush1.bf16.msra.mxu0 0
  %1951 = vmatprep.subr.bf16.mxu0 0
  %1952 = vmatpush1.bf16.msra.mxu0 0
  %1953 = vmatprep.mubr.bf16.mxu0 0
  %1954 = vmatmul.mubr.bf16.gmra.mrb[0].mxu0 %v1919
  %v1955 = vpop.f32.mrb[0].mxu0
  %v1956 = vadd.f32 0.0, %v1955
  %v1957 = vpop.f32.mrb[0].mxu0
  %v1958 = vadd.f32 0.0, %v1957
  %v1959 = vpop.f32.mrb[0].mxu0
  %v1960 = vpop.f32.mrb[0].mxu0
  %1961 = vdwg.mxu0
  %1962 = vmatprep.subr.bf16.mxu0 %v1915
  %1963 = vmatpush1.bf16.msra.mxu0 %v1914
  %1964 = vmatprep.subr.bf16.mxu0 0
  %1965 = vmatpush1.bf16.msra.mxu0 0
  %1966 = vmatprep.subr.bf16.mxu0 0
  %1967 = vmatpush1.bf16.msra.mxu0 0
  %1968 = vmatprep.subr.bf16.mxu0 0
  %1969 = vmatpush1.bf16.msra.mxu0 0
  %1970 = vmatprep.subr.bf16.mxu0 0
  %1971 = vmatpush1.bf16.msra.mxu0 0
  %1972 = vmatprep.subr.bf16.mxu0 0
  %1973 = vmatpush1.bf16.msra.mxu0 0
  %1974 = vmatprep.subr.bf16.mxu0 0
  %1975 = vmatpush1.bf16.msra.mxu0 0
  %1976 = vmatprep.subr.bf16.mxu0 0
  %1977 = vmatpush1.bf16.msra.mxu0 0
  %1978 = vmatprep.subr.bf16.mxu0 0
  %1979 = vmatpush1.bf16.msra.mxu0 0
  %1980 = vmatprep.subr.bf16.mxu0 0
  %1981 = vmatpush1.bf16.msra.mxu0 0
  %1982 = vmatprep.subr.bf16.mxu0 0
  %1983 = vmatpush1.bf16.msra.mxu0 0
  %1984 = vmatprep.subr.bf16.mxu0 0
  %1985 = vmatpush1.bf16.msra.mxu0 0
  %1986 = vmatprep.subr.bf16.mxu0 0
  %1987 = vmatpush1.bf16.msra.mxu0 0
  %1988 = vmatprep.subr.bf16.mxu0 0
  %1989 = vmatpush1.bf16.msra.mxu0 0
  %1990 = vmatprep.subr.bf16.mxu0 0
  %1991 = vmatpush1.bf16.msra.mxu0 0
  %1992 = vmatprep.subr.bf16.mxu0 0
  %1993 = vmatpush1.bf16.msra.mxu0 0
  %1994 = vmatprep.mubr.bf16.mxu0 0
  %1995 = vmatmul.mubr.bf16.gmra.mrb[0].mxu0 %v1919
  %v1996 = vpop.f32.mrb[0].mxu0
  %v1997 = vadd.f32 0.0, %v1996
  %v1998 = vpop.f32.mrb[0].mxu0
  %v1999 = vadd.f32 0.0, %v1998
  %v2000 = vpop.f32.mrb[0].mxu0
  %v2001 = vpop.f32.mrb[0].mxu0
  %2002 = vdwg.mxu0
  %v2003 = vadd.f32 %v1854, %v1956
  %v2004 = vadd.f32 %v1855, %v1958
  %v2005 = vadd.f32 %v1856, %v1997
  %v2006 = vadd.f32 %v1857, %v1999
  %v2007 = vld [vmem:[%s639] ss:$8 sm:$0xf]
  %v2009 = vlaneseq
  %v2010 = vshrl.u32 %v2009, 7
  %v2011 = vsub.s32 0, %v2010
  %v2012 = vrot.slane %v2007, %v2011
  %v2013 = vlaneseq
  %v2014 = vshrl.u32 %v2013, 7
  %v2015 = vsub.s32 1, %v2014
  %v2016 = vrot.slane %v2007, %v2015
  %v2017 = vlaneseq
  %v2018 = vshrl.u32 %v2017, 7
  %v2019 = vsub.s32 2, %v2018
  %v2020 = vrot.slane %v2007, %v2019
  %v2021 = vlaneseq
  %v2022 = vshrl.u32 %v2021, 7
  %v2023 = vsub.s32 3, %v2022
  %v2024 = vrot.slane %v2007, %v2023
  %v2029 = vmul.f32 %v1410, %v2012
  %v2030 = vmul.f32 %v1411, %v2016
  %v2031 = vmul.f32 %v1412, %v2020
  %v2032 = vmul.f32 %v1413, %v2024
  %v2033 = vmul.f32 %v1414, %v2012
  %v2034 = vmul.f32 %v1415, %v2016
  %v2035 = vmul.f32 %v1416, %v2020
  %v2036 = vmul.f32 %v1417, %v2024
  %v2037 = vpack.c.bf16 %v2033, %v2029
  %v2038 = vpack.c.bf16 %v2034, %v2030
  %v2039 = vpack.c.bf16 %v2035, %v2031
  %v2040 = vpack.c.bf16 %v2036, %v2032
  %s2041 = scalar_lea.vmem %s3, 52
  %v2042 = vld [vmem:[%s2041] sm:$0xf]
  %v2044 = vsel %vm1538, %v2042, 0
  %2046 = vmatprep.subr.bf16.mxu0 %v2038
  %2047 = vmatpush1.bf16.msra.mxu0 %v2037
  %2048 = vmatprep.subr.bf16.mxu0 0
  %2049 = vmatpush1.bf16.msra.mxu0 0
  %2050 = vmatprep.subr.bf16.mxu0 0
  %2051 = vmatpush1.bf16.msra.mxu0 0
  %2052 = vmatprep.subr.bf16.mxu0 0
  %2053 = vmatpush1.bf16.msra.mxu0 0
  %2054 = vmatprep.subr.bf16.mxu0 0
  %2055 = vmatpush1.bf16.msra.mxu0 0
  %2056 = vmatprep.subr.bf16.mxu0 0
  %2057 = vmatpush1.bf16.msra.mxu0 0
  %2058 = vmatprep.subr.bf16.mxu0 0
  %2059 = vmatpush1.bf16.msra.mxu0 0
  %2060 = vmatprep.subr.bf16.mxu0 0
  %2061 = vmatpush1.bf16.msra.mxu0 0
  %2062 = vmatprep.subr.bf16.mxu0 0
  %2063 = vmatpush1.bf16.msra.mxu0 0
  %2064 = vmatprep.subr.bf16.mxu0 0
  %2065 = vmatpush1.bf16.msra.mxu0 0
  %2066 = vmatprep.subr.bf16.mxu0 0
  %2067 = vmatpush1.bf16.msra.mxu0 0
  %2068 = vmatprep.subr.bf16.mxu0 0
  %2069 = vmatpush1.bf16.msra.mxu0 0
  %2070 = vmatprep.subr.bf16.mxu0 0
  %2071 = vmatpush1.bf16.msra.mxu0 0
  %2072 = vmatprep.subr.bf16.mxu0 0
  %2073 = vmatpush1.bf16.msra.mxu0 0
  %2074 = vmatprep.subr.bf16.mxu0 0
  %2075 = vmatpush1.bf16.msra.mxu0 0
  %2076 = vmatprep.subr.bf16.mxu0 0
  %2077 = vmatpush1.bf16.msra.mxu0 0
  %2078 = vmatprep.mubr.bf16.mxu0 0
  %2079 = vmatmul.mubr.bf16.gmra.mrb[0].mxu0 %v2044
  %v2080 = vpop.f32.mrb[0].mxu0
  %v2081 = vadd.f32 0.0, %v2080
  %v2082 = vpop.f32.mrb[0].mxu0
  %v2083 = vadd.f32 0.0, %v2082
  %v2084 = vpop.f32.mrb[0].mxu0
  %v2085 = vpop.f32.mrb[0].mxu0
  %2086 = vdwg.mxu0
  %2087 = vmatprep.subr.bf16.mxu0 %v2040
  %2088 = vmatpush1.bf16.msra.mxu0 %v2039
  %2089 = vmatprep.subr.bf16.mxu0 0
  %2090 = vmatpush1.bf16.msra.mxu0 0
  %2091 = vmatprep.subr.bf16.mxu0 0
  %2092 = vmatpush1.bf16.msra.mxu0 0
  %2093 = vmatprep.subr.bf16.mxu0 0
  %2094 = vmatpush1.bf16.msra.mxu0 0
  %2095 = vmatprep.subr.bf16.mxu0 0
  %2096 = vmatpush1.bf16.msra.mxu0 0
  %2097 = vmatprep.subr.bf16.mxu0 0
  %2098 = vmatpush1.bf16.msra.mxu0 0
  %2099 = vmatprep.subr.bf16.mxu0 0
  %2100 = vmatpush1.bf16.msra.mxu0 0
  %2101 = vmatprep.subr.bf16.mxu0 0
  %2102 = vmatpush1.bf16.msra.mxu0 0
  %2103 = vmatprep.subr.bf16.mxu0 0
  %2104 = vmatpush1.bf16.msra.mxu0 0
  %2105 = vmatprep.subr.bf16.mxu0 0
  %2106 = vmatpush1.bf16.msra.mxu0 0
  %2107 = vmatprep.subr.bf16.mxu0 0
  %2108 = vmatpush1.bf16.msra.mxu0 0
  %2109 = vmatprep.subr.bf16.mxu0 0
  %2110 = vmatpush1.bf16.msra.mxu0 0
  %2111 = vmatprep.subr.bf16.mxu0 0
  %2112 = vmatpush1.bf16.msra.mxu0 0
  %2113 = vmatprep.subr.bf16.mxu0 0
  %2114 = vmatpush1.bf16.msra.mxu0 0
  %2115 = vmatprep.subr.bf16.mxu0 0
  %2116 = vmatpush1.bf16.msra.mxu0 0
  %2117 = vmatprep.subr.bf16.mxu0 0
  %2118 = vmatpush1.bf16.msra.mxu0 0
  %2119 = vmatprep.mubr.bf16.mxu0 0
  %2120 = vmatmul.mubr.bf16.gmra.mrb[0].mxu0 %v2044
  %v2121 = vpop.f32.mrb[0].mxu0
  %v2122 = vadd.f32 0.0, %v2121
  %v2123 = vpop.f32.mrb[0].mxu0
  %v2124 = vadd.f32 0.0, %v2123
  %v2125 = vpop.f32.mrb[0].mxu0
  %v2126 = vpop.f32.mrb[0].mxu0
  %2127 = vdwg.mxu0
  %v2128 = vadd.f32 %v2003, %v2081
  %v2129 = vadd.f32 %v2004, %v2083
  %v2130 = vadd.f32 %v2005, %v2122
  %v2131 = vadd.f32 %v2006, %v2124
  %2132 = vrot.lane.b32.xlu0 %v1410, 127
  %v2133 = vpop.permute.xlu0 %2132
  %2134 = vrot.lane.b32.xlu0 %v1414, 127
  %v2135 = vpop.permute.xlu0 %2134
  %2136 = vrot.lane.b32.xlu0 %v1411, 127
  %v2137 = vpop.permute.xlu0 %2136
  %2138 = vrot.lane.b32.xlu0 %v1415, 127
  %v2139 = vpop.permute.xlu0 %2138
  %2140 = vrot.lane.b32.xlu0 %v1412, 127
  %v2141 = vpop.permute.xlu0 %2140
  %2142 = vrot.lane.b32.xlu0 %v1416, 127
  %v2143 = vpop.permute.xlu0 %2142
  %2144 = vrot.lane.b32.xlu0 %v1413, 127
  %v2145 = vpop.permute.xlu0 %2144
  %2146 = vrot.lane.b32.xlu0 %v1417, 127
  %v2147 = vpop.permute.xlu0 %2146
  %v2148 = vsel %vm354, %v2141, %v2145
  %v2149 = vsel %vm354, %v2143, %v2147
  %v2150 = vsel %vm354, %v2137, %v2141
  %v2151 = vsel %vm354, %v2139, %v2143
  %v2152 = vsel %vm354, %v2133, %v2137
  %v2153 = vsel %vm354, %v2135, %v2139
  %v2154 = vsel %vm354, %v2145, %v2133
  %v2155 = vsel %vm354, %v2147, %v2135
  %v2156 = vld [vmem:[%s785] ss:$8 sm:$0xf]
  %v2158 = vlaneseq
  %v2159 = vshrl.u32 %v2158, 7
  %v2160 = vsub.s32 0, %v2159
  %v2161 = vrot.slane %v2156, %v2160
  %v2162 = vlaneseq
  %v2163 = vshrl.u32 %v2162, 7
  %v2164 = vsub.s32 1, %v2163
  %v2165 = vrot.slane %v2156, %v2164
  %v2166 = vlaneseq
  %v2167 = vshrl.u32 %v2166, 7
  %v2168 = vsub.s32 2, %v2167
  %v2169 = vrot.slane %v2156, %v2168
  %v2170 = vlaneseq
  %v2171 = vshrl.u32 %v2170, 7
  %v2172 = vsub.s32 3, %v2171
  %v2173 = vrot.slane %v2156, %v2172
  %v2178 = vmul.f32 %v2152, %v2161
  %v2179 = vmul.f32 %v2150, %v2165
  %v2180 = vmul.f32 %v2148, %v2169
  %v2181 = vmul.f32 %v2154, %v2173
  %v2182 = vmul.f32 %v2153, %v2161
  %v2183 = vmul.f32 %v2151, %v2165
  %v2184 = vmul.f32 %v2149, %v2169
  %v2185 = vmul.f32 %v2155, %v2173
  %v2186 = vpack.c.bf16 %v2182, %v2178
  %v2187 = vpack.c.bf16 %v2183, %v2179
  %v2188 = vpack.c.bf16 %v2184, %v2180
  %v2189 = vpack.c.bf16 %v2185, %v2181
  %s2190 = scalar_lea.vmem %s3, 56
  %v2191 = vld [vmem:[%s2190] sm:$0xf]
  %v2193 = vsel %vm1538, %v2191, 0
  %2195 = vmatprep.subr.bf16.mxu0 %v2187
  %2196 = vmatpush1.bf16.msra.mxu0 %v2186
  %2197 = vmatprep.subr.bf16.mxu0 0
  %2198 = vmatpush1.bf16.msra.mxu0 0
  %2199 = vmatprep.subr.bf16.mxu0 0
  %2200 = vmatpush1.bf16.msra.mxu0 0
  %2201 = vmatprep.subr.bf16.mxu0 0
  %2202 = vmatpush1.bf16.msra.mxu0 0
  %2203 = vmatprep.subr.bf16.mxu0 0
  %2204 = vmatpush1.bf16.msra.mxu0 0
  %2205 = vmatprep.subr.bf16.mxu0 0
  %2206 = vmatpush1.bf16.msra.mxu0 0
  %2207 = vmatprep.subr.bf16.mxu0 0
  %2208 = vmatpush1.bf16.msra.mxu0 0
  %2209 = vmatprep.subr.bf16.mxu0 0
  %2210 = vmatpush1.bf16.msra.mxu0 0
  %2211 = vmatprep.subr.bf16.mxu0 0
  %2212 = vmatpush1.bf16.msra.mxu0 0
  %2213 = vmatprep.subr.bf16.mxu0 0
  %2214 = vmatpush1.bf16.msra.mxu0 0
  %2215 = vmatprep.subr.bf16.mxu0 0
  %2216 = vmatpush1.bf16.msra.mxu0 0
  %2217 = vmatprep.subr.bf16.mxu0 0
  %2218 = vmatpush1.bf16.msra.mxu0 0
  %2219 = vmatprep.subr.bf16.mxu0 0
  %2220 = vmatpush1.bf16.msra.mxu0 0
  %2221 = vmatprep.subr.bf16.mxu0 0
  %2222 = vmatpush1.bf16.msra.mxu0 0
  %2223 = vmatprep.subr.bf16.mxu0 0
  %2224 = vmatpush1.bf16.msra.mxu0 0
  %2225 = vmatprep.subr.bf16.mxu0 0
  %2226 = vmatpush1.bf16.msra.mxu0 0
  %2227 = vmatprep.mubr.bf16.mxu0 0
  %2228 = vmatmul.mubr.bf16.gmra.mrb[0].mxu0 %v2193
  %v2229 = vpop.f32.mrb[0].mxu0
  %v2230 = vadd.f32 0.0, %v2229
  %v2231 = vpop.f32.mrb[0].mxu0
  %v2232 = vadd.f32 0.0, %v2231
  %v2233 = vpop.f32.mrb[0].mxu0
  %v2234 = vpop.f32.mrb[0].mxu0
  %2235 = vdwg.mxu0
  %2236 = vmatprep.subr.bf16.mxu0 %v2189
  %2237 = vmatpush1.bf16.msra.mxu0 %v2188
  %2238 = vmatprep.subr.bf16.mxu0 0
  %2239 = vmatpush1.bf16.msra.mxu0 0
  %2240 = vmatprep.subr.bf16.mxu0 0
  %2241 = vmatpush1.bf16.msra.mxu0 0
  %2242 = vmatprep.subr.bf16.mxu0 0
  %2243 = vmatpush1.bf16.msra.mxu0 0
  %2244 = vmatprep.subr.bf16.mxu0 0
  %2245 = vmatpush1.bf16.msra.mxu0 0
  %2246 = vmatprep.subr.bf16.mxu0 0
  %2247 = vmatpush1.bf16.msra.mxu0 0
  %2248 = vmatprep.subr.bf16.mxu0 0
  %2249 = vmatpush1.bf16.msra.mxu0 0
  %2250 = vmatprep.subr.bf16.mxu0 0
  %2251 = vmatpush1.bf16.msra.mxu0 0
  %2252 = vmatprep.subr.bf16.mxu0 0
  %2253 = vmatpush1.bf16.msra.mxu0 0
  %2254 = vmatprep.subr.bf16.mxu0 0
  %2255 = vmatpush1.bf16.msra.mxu0 0
  %2256 = vmatprep.subr.bf16.mxu0 0
  %2257 = vmatpush1.bf16.msra.mxu0 0
  %2258 = vmatprep.subr.bf16.mxu0 0
  %2259 = vmatpush1.bf16.msra.mxu0 0
  %2260 = vmatprep.subr.bf16.mxu0 0
  %2261 = vmatpush1.bf16.msra.mxu0 0
  %2262 = vmatprep.subr.bf16.mxu0 0
  %2263 = vmatpush1.bf16.msra.mxu0 0
  %2264 = vmatprep.subr.bf16.mxu0 0
  %2265 = vmatpush1.bf16.msra.mxu0 0
  %2266 = vmatprep.subr.bf16.mxu0 0
  %2267 = vmatpush1.bf16.msra.mxu0 0
  %2268 = vmatprep.mubr.bf16.mxu0 0
  %2269 = vmatmul.mubr.bf16.gmra.mrb[0].mxu0 %v2193
  %v2270 = vpop.f32.mrb[0].mxu0
  %v2271 = vadd.f32 0.0, %v2270
  %v2272 = vpop.f32.mrb[0].mxu0
  %v2273 = vadd.f32 0.0, %v2272
  %v2274 = vpop.f32.mrb[0].mxu0
  %v2275 = vpop.f32.mrb[0].mxu0
  %2276 = vdwg.mxu0
  %v2277 = vadd.f32 %v2128, %v2230
  %v2278 = vadd.f32 %v2129, %v2232
  %v2279 = vadd.f32 %v2130, %v2271
  %v2280 = vadd.f32 %v2131, %v2273
  %2281 = vrot.lane.b32.xlu0 %v1410, 112
  %v2282 = vpop.permute.xlu0 %2281
  %2283 = vrot.lane.b32.xlu0 %v1414, 112
  %v2284 = vpop.permute.xlu0 %2283
  %2285 = vrot.lane.b32.xlu0 %v1411, 112
  %v2286 = vpop.permute.xlu0 %2285
  %2287 = vrot.lane.b32.xlu0 %v1415, 112
  %v2288 = vpop.permute.xlu0 %2287
  %2289 = vrot.lane.b32.xlu0 %v1412, 112
  %v2290 = vpop.permute.xlu0 %2289
  %2291 = vrot.lane.b32.xlu0 %v1416, 112
  %v2292 = vpop.permute.xlu0 %2291
  %2293 = vrot.lane.b32.xlu0 %v1413, 112
  %v2294 = vpop.permute.xlu0 %2293
  %2295 = vrot.lane.b32.xlu0 %v1417, 112
  %v2296 = vpop.permute.xlu0 %2295
  %v2297 = vsel %vm927, %v2290, %v2294
  %v2298 = vsel %vm927, %v2292, %v2296
  %v2299 = vsel %vm927, %v2286, %v2290
  %v2300 = vsel %vm927, %v2288, %v2292
  %v2301 = vsel %vm927, %v2282, %v2286
  %v2302 = vsel %vm927, %v2284, %v2288
  %v2303 = vsel %vm927, %v2294, %v2282
  %v2304 = vsel %vm927, %v2296, %v2284
  %2305 = vrot.lane.b32.xlu0 %v2301, 1
  %v2306 = vpop.permute.xlu0 %2305
  %2307 = vrot.lane.b32.xlu0 %v2302, 1
  %v2308 = vpop.permute.xlu0 %2307
  %2309 = vrot.lane.b32.xlu0 %v2299, 1
  %v2310 = vpop.permute.xlu0 %2309
  %2311 = vrot.lane.b32.xlu0 %v2300, 1
  %v2312 = vpop.permute.xlu0 %2311
  %2313 = vrot.lane.b32.xlu0 %v2297, 1
  %v2314 = vpop.permute.xlu0 %2313
  %2315 = vrot.lane.b32.xlu0 %v2298, 1
  %v2316 = vpop.permute.xlu0 %2315
  %2317 = vrot.lane.b32.xlu0 %v2303, 1
  %v2318 = vpop.permute.xlu0 %2317
  %2319 = vrot.lane.b32.xlu0 %v2304, 1
  %v2320 = vpop.permute.xlu0 %2319
  %v2321 = vsel %vm81, %v2314, %v2318
  %v2322 = vsel %vm81, %v2316, %v2320
  %v2323 = vsel %vm81, %v2310, %v2314
  %v2324 = vsel %vm81, %v2312, %v2316
  %v2325 = vsel %vm81, %v2306, %v2310
  %v2326 = vsel %vm81, %v2308, %v2312
  %v2327 = vsel %vm81, %v2318, %v2306
  %v2328 = vsel %vm81, %v2320, %v2308
  %v2329 = vld [vmem:[%s944] ss:$8 sm:$0xf]
  %v2331 = vlaneseq
  %v2332 = vshrl.u32 %v2331, 7
  %v2333 = vsub.s32 0, %v2332
  %v2334 = vrot.slane %v2329, %v2333
  %v2335 = vlaneseq
  %v2336 = vshrl.u32 %v2335, 7
  %v2337 = vsub.s32 1, %v2336
  %v2338 = vrot.slane %v2329, %v2337
  %v2339 = vlaneseq
  %v2340 = vshrl.u32 %v2339, 7
  %v2341 = vsub.s32 2, %v2340
  %v2342 = vrot.slane %v2329, %v2341
  %v2343 = vlaneseq
  %v2344 = vshrl.u32 %v2343, 7
  %v2345 = vsub.s32 3, %v2344
  %v2346 = vrot.slane %v2329, %v2345
  %v2351 = vmul.f32 %v2327, %v2334
  %v2352 = vmul.f32 %v2325, %v2338
  %v2353 = vmul.f32 %v2323, %v2342
  %v2354 = vmul.f32 %v2321, %v2346
  %v2355 = vmul.f32 %v2328, %v2334
  %v2356 = vmul.f32 %v2326, %v2338
  %v2357 = vmul.f32 %v2324, %v2342
  %v2358 = vmul.f32 %v2322, %v2346
  %v2359 = vpack.c.bf16 %v2355, %v2351
  %v2360 = vpack.c.bf16 %v2356, %v2352
  %v2361 = vpack.c.bf16 %v2357, %v2353
  %v2362 = vpack.c.bf16 %v2358, %v2354
  %s2363 = scalar_lea.vmem %s3, 60
  %v2364 = vld [vmem:[%s2363] sm:$0xf]
  %v2366 = vsel %vm1538, %v2364, 0
  %2368 = vmatprep.subr.bf16.mxu0 %v2360
  %2369 = vmatpush1.bf16.msra.mxu0 %v2359
  %2370 = vmatprep.subr.bf16.mxu0 0
  %2371 = vmatpush1.bf16.msra.mxu0 0
  %2372 = vmatprep.subr.bf16.mxu0 0
  %2373 = vmatpush1.bf16.msra.mxu0 0
  %2374 = vmatprep.subr.bf16.mxu0 0
  %2375 = vmatpush1.bf16.msra.mxu0 0
  %2376 = vmatprep.subr.bf16.mxu0 0
  %2377 = vmatpush1.bf16.msra.mxu0 0
  %2378 = vmatprep.subr.bf16.mxu0 0
  %2379 = vmatpush1.bf16.msra.mxu0 0
  %2380 = vmatprep.subr.bf16.mxu0 0
  %2381 = vmatpush1.bf16.msra.mxu0 0
  %2382 = vmatprep.subr.bf16.mxu0 0
  %2383 = vmatpush1.bf16.msra.mxu0 0
  %2384 = vmatprep.subr.bf16.mxu0 0
  %2385 = vmatpush1.bf16.msra.mxu0 0
  %2386 = vmatprep.subr.bf16.mxu0 0
  %2387 = vmatpush1.bf16.msra.mxu0 0
  %2388 = vmatprep.subr.bf16.mxu0 0
  %2389 = vmatpush1.bf16.msra.mxu0 0
  %2390 = vmatprep.subr.bf16.mxu0 0
  %2391 = vmatpush1.bf16.msra.mxu0 0
  %2392 = vmatprep.subr.bf16.mxu0 0
  %2393 = vmatpush1.bf16.msra.mxu0 0
  %2394 = vmatprep.subr.bf16.mxu0 0
  %2395 = vmatpush1.bf16.msra.mxu0 0
  %2396 = vmatprep.subr.bf16.mxu0 0
  %2397 = vmatpush1.bf16.msra.mxu0 0
  %2398 = vmatprep.subr.bf16.mxu0 0
  %2399 = vmatpush1.bf16.msra.mxu0 0
  %2400 = vmatprep.mubr.bf16.mxu0 0
  %2401 = vmatmul.mubr.bf16.gmra.mrb[0].mxu0 %v2366
  %v2402 = vpop.f32.mrb[0].mxu0
  %v2403 = vadd.f32 0.0, %v2402
  %v2404 = vpop.f32.mrb[0].mxu0
  %v2405 = vadd.f32 0.0, %v2404
  %v2406 = vpop.f32.mrb[0].mxu0
  %v2407 = vpop.f32.mrb[0].mxu0
  %2408 = vdwg.mxu0
  %2409 = vmatprep.subr.bf16.mxu0 %v2362
  %2410 = vmatpush1.bf16.msra.mxu0 %v2361
  %2411 = vmatprep.subr.bf16.mxu0 0
  %2412 = vmatpush1.bf16.msra.mxu0 0
  %2413 = vmatprep.subr.bf16.mxu0 0
  %2414 = vmatpush1.bf16.msra.mxu0 0
  %2415 = vmatprep.subr.bf16.mxu0 0
  %2416 = vmatpush1.bf16.msra.mxu0 0
  %2417 = vmatprep.subr.bf16.mxu0 0
  %2418 = vmatpush1.bf16.msra.mxu0 0
  %2419 = vmatprep.subr.bf16.mxu0 0
  %2420 = vmatpush1.bf16.msra.mxu0 0
  %2421 = vmatprep.subr.bf16.mxu0 0
  %2422 = vmatpush1.bf16.msra.mxu0 0
  %2423 = vmatprep.subr.bf16.mxu0 0
  %2424 = vmatpush1.bf16.msra.mxu0 0
  %2425 = vmatprep.subr.bf16.mxu0 0
  %2426 = vmatpush1.bf16.msra.mxu0 0
  %2427 = vmatprep.subr.bf16.mxu0 0
  %2428 = vmatpush1.bf16.msra.mxu0 0
  %2429 = vmatprep.subr.bf16.mxu0 0
  %2430 = vmatpush1.bf16.msra.mxu0 0
  %2431 = vmatprep.subr.bf16.mxu0 0
  %2432 = vmatpush1.bf16.msra.mxu0 0
  %2433 = vmatprep.subr.bf16.mxu0 0
  %2434 = vmatpush1.bf16.msra.mxu0 0
  %2435 = vmatprep.subr.bf16.mxu0 0
  %2436 = vmatpush1.bf16.msra.mxu0 0
  %2437 = vmatprep.subr.bf16.mxu0 0
  %2438 = vmatpush1.bf16.msra.mxu0 0
  %2439 = vmatprep.subr.bf16.mxu0 0
  %2440 = vmatpush1.bf16.msra.mxu0 0
  %2441 = vmatprep.mubr.bf16.mxu0 0
  %2442 = vmatmul.mubr.bf16.gmra.mrb[0].mxu0 %v2366
  %v2443 = vpop.f32.mrb[0].mxu0
  %v2444 = vadd.f32 0.0, %v2443
  %v2445 = vpop.f32.mrb[0].mxu0
  %v2446 = vadd.f32 0.0, %v2445
  %v2447 = vpop.f32.mrb[0].mxu0
  %v2448 = vpop.f32.mrb[0].mxu0
  %2449 = vdwg.mxu0
  %v2450 = vadd.f32 %v2277, %v2403
  %v2451 = vadd.f32 %v2278, %v2405
  %v2452 = vadd.f32 %v2279, %v2444
  %v2453 = vadd.f32 %v2280, %v2446
  %v2454 = vld [vmem:[%s1078] ss:$8 sm:$0xf]
  %v2456 = vlaneseq
  %v2457 = vshrl.u32 %v2456, 7
  %v2458 = vsub.s32 0, %v2457
  %v2459 = vrot.slane %v2454, %v2458
  %v2460 = vlaneseq
  %v2461 = vshrl.u32 %v2460, 7
  %v2462 = vsub.s32 1, %v2461
  %v2463 = vrot.slane %v2454, %v2462
  %v2464 = vlaneseq
  %v2465 = vshrl.u32 %v2464, 7
  %v2466 = vsub.s32 2, %v2465
  %v2467 = vrot.slane %v2454, %v2466
  %v2468 = vlaneseq
  %v2469 = vshrl.u32 %v2468, 7
  %v2470 = vsub.s32 3, %v2469
  %v2471 = vrot.slane %v2454, %v2470
  %v2476 = vmul.f32 %v2301, %v2459
  %v2477 = vmul.f32 %v2299, %v2463
  %v2478 = vmul.f32 %v2297, %v2467
  %v2479 = vmul.f32 %v2303, %v2471
  %v2480 = vmul.f32 %v2302, %v2459
  %v2481 = vmul.f32 %v2300, %v2463
  %v2482 = vmul.f32 %v2298, %v2467
  %v2483 = vmul.f32 %v2304, %v2471
  %v2484 = vpack.c.bf16 %v2480, %v2476
  %v2485 = vpack.c.bf16 %v2481, %v2477
  %v2486 = vpack.c.bf16 %v2482, %v2478
  %v2487 = vpack.c.bf16 %v2483, %v2479
  %s2488 = scalar_lea.vmem %s3, 64
  %v2489 = vld [vmem:[%s2488] sm:$0xf]
  %v2491 = vsel %vm1538, %v2489, 0
  %2493 = vmatprep.subr.bf16.mxu0 %v2485
  %2494 = vmatpush1.bf16.msra.mxu0 %v2484
  %2495 = vmatprep.subr.bf16.mxu0 0
  %2496 = vmatpush1.bf16.msra.mxu0 0
  %2497 = vmatprep.subr.bf16.mxu0 0
  %2498 = vmatpush1.bf16.msra.mxu0 0
  %2499 = vmatprep.subr.bf16.mxu0 0
  %2500 = vmatpush1.bf16.msra.mxu0 0
  %2501 = vmatprep.subr.bf16.mxu0 0
  %2502 = vmatpush1.bf16.msra.mxu0 0
  %2503 = vmatprep.subr.bf16.mxu0 0
  %2504 = vmatpush1.bf16.msra.mxu0 0
  %2505 = vmatprep.subr.bf16.mxu0 0
  %2506 = vmatpush1.bf16.msra.mxu0 0
  %2507 = vmatprep.subr.bf16.mxu0 0
  %2508 = vmatpush1.bf16.msra.mxu0 0
  %2509 = vmatprep.subr.bf16.mxu0 0
  %2510 = vmatpush1.bf16.msra.mxu0 0
  %2511 = vmatprep.subr.bf16.mxu0 0
  %2512 = vmatpush1.bf16.msra.mxu0 0
  %2513 = vmatprep.subr.bf16.mxu0 0
  %2514 = vmatpush1.bf16.msra.mxu0 0
  %2515 = vmatprep.subr.bf16.mxu0 0
  %2516 = vmatpush1.bf16.msra.mxu0 0
  %2517 = vmatprep.subr.bf16.mxu0 0
  %2518 = vmatpush1.bf16.msra.mxu0 0
  %2519 = vmatprep.subr.bf16.mxu0 0
  %2520 = vmatpush1.bf16.msra.mxu0 0
  %2521 = vmatprep.subr.bf16.mxu0 0
  %2522 = vmatpush1.bf16.msra.mxu0 0
  %2523 = vmatprep.subr.bf16.mxu0 0
  %2524 = vmatpush1.bf16.msra.mxu0 0
  %2525 = vmatprep.mubr.bf16.mxu0 0
  %2526 = vmatmul.mubr.bf16.gmra.mrb[0].mxu0 %v2491
  %v2527 = vpop.f32.mrb[0].mxu0
  %v2528 = vadd.f32 0.0, %v2527
  %v2529 = vpop.f32.mrb[0].mxu0
  %v2530 = vadd.f32 0.0, %v2529
  %v2531 = vpop.f32.mrb[0].mxu0
  %v2532 = vpop.f32.mrb[0].mxu0
  %2533 = vdwg.mxu0
  %2534 = vmatprep.subr.bf16.mxu0 %v2487
  %2535 = vmatpush1.bf16.msra.mxu0 %v2486
  %2536 = vmatprep.subr.bf16.mxu0 0
  %2537 = vmatpush1.bf16.msra.mxu0 0
  %2538 = vmatprep.subr.bf16.mxu0 0
  %2539 = vmatpush1.bf16.msra.mxu0 0
  %2540 = vmatprep.subr.bf16.mxu0 0
  %2541 = vmatpush1.bf16.msra.mxu0 0
  %2542 = vmatprep.subr.bf16.mxu0 0
  %2543 = vmatpush1.bf16.msra.mxu0 0
  %2544 = vmatprep.subr.bf16.mxu0 0
  %2545 = vmatpush1.bf16.msra.mxu0 0
  %2546 = vmatprep.subr.bf16.mxu0 0
  %2547 = vmatpush1.bf16.msra.mxu0 0
  %2548 = vmatprep.subr.bf16.mxu0 0
  %2549 = vmatpush1.bf16.msra.mxu0 0
  %2550 = vmatprep.subr.bf16.mxu0 0
  %2551 = vmatpush1.bf16.msra.mxu0 0
  %2552 = vmatprep.subr.bf16.mxu0 0
  %2553 = vmatpush1.bf16.msra.mxu0 0
  %2554 = vmatprep.subr.bf16.mxu0 0
  %2555 = vmatpush1.bf16.msra.mxu0 0
  %2556 = vmatprep.subr.bf16.mxu0 0
  %2557 = vmatpush1.bf16.msra.mxu0 0
  %2558 = vmatprep.subr.bf16.mxu0 0
  %2559 = vmatpush1.bf16.msra.mxu0 0
  %2560 = vmatprep.subr.bf16.mxu0 0
  %2561 = vmatpush1.bf16.msra.mxu0 0
  %2562 = vmatprep.subr.bf16.mxu0 0
  %2563 = vmatpush1.bf16.msra.mxu0 0
  %2564 = vmatprep.subr.bf16.mxu0 0
  %2565 = vmatpush1.bf16.msra.mxu0 0
  %2566 = vmatprep.mubr.bf16.mxu0 0
  %2567 = vmatmul.mubr.bf16.gmra.mrb[0].mxu0 %v2491
  %v2568 = vpop.f32.mrb[0].mxu0
  %v2569 = vadd.f32 0.0, %v2568
  %v2570 = vpop.f32.mrb[0].mxu0
  %v2571 = vadd.f32 0.0, %v2570
  %v2572 = vpop.f32.mrb[0].mxu0
  %v2573 = vpop.f32.mrb[0].mxu0
  %2574 = vdwg.mxu0
  %v2575 = vadd.f32 %v2450, %v2528
  %v2576 = vadd.f32 %v2451, %v2530
  %v2577 = vadd.f32 %v2452, %v2569
  %v2578 = vadd.f32 %v2453, %v2571
  %2579 = vrot.lane.b32.xlu0 %v2301, 127
  %v2580 = vpop.permute.xlu0 %2579
  %2581 = vrot.lane.b32.xlu0 %v2302, 127
  %v2582 = vpop.permute.xlu0 %2581
  %2583 = vrot.lane.b32.xlu0 %v2299, 127
  %v2584 = vpop.permute.xlu0 %2583
  %2585 = vrot.lane.b32.xlu0 %v2300, 127
  %v2586 = vpop.permute.xlu0 %2585
  %2587 = vrot.lane.b32.xlu0 %v2297, 127
  %v2588 = vpop.permute.xlu0 %2587
  %2589 = vrot.lane.b32.xlu0 %v2298, 127
  %v2590 = vpop.permute.xlu0 %2589
  %2591 = vrot.lane.b32.xlu0 %v2303, 127
  %v2592 = vpop.permute.xlu0 %2591
  %2593 = vrot.lane.b32.xlu0 %v2304, 127
  %v2594 = vpop.permute.xlu0 %2593
  %v2595 = vsel %vm354, %v2588, %v2592
  %v2596 = vsel %vm354, %v2590, %v2594
  %v2597 = vsel %vm354, %v2584, %v2588
  %v2598 = vsel %vm354, %v2586, %v2590
  %v2599 = vsel %vm354, %v2580, %v2584
  %v2600 = vsel %vm354, %v2582, %v2586
  %v2601 = vsel %vm354, %v2592, %v2580
  %v2602 = vsel %vm354, %v2594, %v2582
  %v2603 = vld [vmem:[%s1224] ss:$8 sm:$0xf]
  %v2605 = vlaneseq
  %v2606 = vshrl.u32 %v2605, 7
  %v2607 = vsub.s32 0, %v2606
  %v2608 = vrot.slane %v2603, %v2607
  %v2609 = vlaneseq
  %v2610 = vshrl.u32 %v2609, 7
  %v2611 = vsub.s32 1, %v2610
  %v2612 = vrot.slane %v2603, %v2611
  %v2613 = vlaneseq
  %v2614 = vshrl.u32 %v2613, 7
  %v2615 = vsub.s32 2, %v2614
  %v2616 = vrot.slane %v2603, %v2615
  %v2617 = vlaneseq
  %v2618 = vshrl.u32 %v2617, 7
  %v2619 = vsub.s32 3, %v2618
  %v2620 = vrot.slane %v2603, %v2619
  %v2625 = vmul.f32 %v2599, %v2608
  %v2626 = vmul.f32 %v2597, %v2612
  %v2627 = vmul.f32 %v2595, %v2616
  %v2628 = vmul.f32 %v2601, %v2620
  %v2629 = vmul.f32 %v2600, %v2608
  %v2630 = vmul.f32 %v2598, %v2612
  %v2631 = vmul.f32 %v2596, %v2616
  %v2632 = vmul.f32 %v2602, %v2620
  %v2633 = vpack.c.bf16 %v2629, %v2625
  %v2634 = vpack.c.bf16 %v2630, %v2626
  %v2635 = vpack.c.bf16 %v2631, %v2627
  %v2636 = vpack.c.bf16 %v2632, %v2628
  %s2637 = scalar_lea.vmem %s3, 68
  %v2638 = vld [vmem:[%s2637] sm:$0xf]
  %v2640 = vsel %vm1538, %v2638, 0
  %2642 = vmatprep.subr.bf16.mxu0 %v2634
  %2643 = vmatpush1.bf16.msra.mxu0 %v2633
  %2644 = vmatprep.subr.bf16.mxu0 0
  %2645 = vmatpush1.bf16.msra.mxu0 0
  %2646 = vmatprep.subr.bf16.mxu0 0
  %2647 = vmatpush1.bf16.msra.mxu0 0
  %2648 = vmatprep.subr.bf16.mxu0 0
  %2649 = vmatpush1.bf16.msra.mxu0 0
  %2650 = vmatprep.subr.bf16.mxu0 0
  %2651 = vmatpush1.bf16.msra.mxu0 0
  %2652 = vmatprep.subr.bf16.mxu0 0
  %2653 = vmatpush1.bf16.msra.mxu0 0
  %2654 = vmatprep.subr.bf16.mxu0 0
  %2655 = vmatpush1.bf16.msra.mxu0 0
  %2656 = vmatprep.subr.bf16.mxu0 0
  %2657 = vmatpush1.bf16.msra.mxu0 0
  %2658 = vmatprep.subr.bf16.mxu0 0
  %2659 = vmatpush1.bf16.msra.mxu0 0
  %2660 = vmatprep.subr.bf16.mxu0 0
  %2661 = vmatpush1.bf16.msra.mxu0 0
  %2662 = vmatprep.subr.bf16.mxu0 0
  %2663 = vmatpush1.bf16.msra.mxu0 0
  %2664 = vmatprep.subr.bf16.mxu0 0
  %2665 = vmatpush1.bf16.msra.mxu0 0
  %2666 = vmatprep.subr.bf16.mxu0 0
  %2667 = vmatpush1.bf16.msra.mxu0 0
  %2668 = vmatprep.subr.bf16.mxu0 0
  %2669 = vmatpush1.bf16.msra.mxu0 0
  %2670 = vmatprep.subr.bf16.mxu0 0
  %2671 = vmatpush1.bf16.msra.mxu0 0
  %2672 = vmatprep.subr.bf16.mxu0 0
  %2673 = vmatpush1.bf16.msra.mxu0 0
  %2674 = vmatprep.mubr.bf16.mxu0 0
  %2675 = vmatmul.mubr.bf16.gmra.mrb[0].mxu0 %v2640
  %v2676 = vpop.f32.mrb[0].mxu0
  %v2677 = vadd.f32 0.0, %v2676
  %v2678 = vpop.f32.mrb[0].mxu0
  %v2679 = vadd.f32 0.0, %v2678
  %v2680 = vpop.f32.mrb[0].mxu0
  %v2681 = vpop.f32.mrb[0].mxu0
  %2682 = vdwg.mxu0
  %2683 = vmatprep.subr.bf16.mxu0 %v2636
  %2684 = vmatpush1.bf16.msra.mxu0 %v2635
  %2685 = vmatprep.subr.bf16.mxu0 0
  %2686 = vmatpush1.bf16.msra.mxu0 0
  %2687 = vmatprep.subr.bf16.mxu0 0
  %2688 = vmatpush1.bf16.msra.mxu0 0
  %2689 = vmatprep.subr.bf16.mxu0 0
  %2690 = vmatpush1.bf16.msra.mxu0 0
  %2691 = vmatprep.subr.bf16.mxu0 0
  %2692 = vmatpush1.bf16.msra.mxu0 0
  %2693 = vmatprep.subr.bf16.mxu0 0
  %2694 = vmatpush1.bf16.msra.mxu0 0
  %2695 = vmatprep.subr.bf16.mxu0 0
  %2696 = vmatpush1.bf16.msra.mxu0 0
  %2697 = vmatprep.subr.bf16.mxu0 0
  %2698 = vmatpush1.bf16.msra.mxu0 0
  %2699 = vmatprep.subr.bf16.mxu0 0
  %2700 = vmatpush1.bf16.msra.mxu0 0
  %2701 = vmatprep.subr.bf16.mxu0 0
  %2702 = vmatpush1.bf16.msra.mxu0 0
  %2703 = vmatprep.subr.bf16.mxu0 0
  %2704 = vmatpush1.bf16.msra.mxu0 0
  %2705 = vmatprep.subr.bf16.mxu0 0
  %2706 = vmatpush1.bf16.msra.mxu0 0
  %2707 = vmatprep.subr.bf16.mxu0 0
  %2708 = vmatpush1.bf16.msra.mxu0 0
  %2709 = vmatprep.subr.bf16.mxu0 0
  %2710 = vmatpush1.bf16.msra.mxu0 0
  %2711 = vmatprep.subr.bf16.mxu0 0
  %2712 = vmatpush1.bf16.msra.mxu0 0
  %2713 = vmatprep.subr.bf16.mxu0 0
  %2714 = vmatpush1.bf16.msra.mxu0 0
  %2715 = vmatprep.mubr.bf16.mxu0 0
  %2716 = vmatmul.mubr.bf16.gmra.mrb[0].mxu0 %v2640
  %v2717 = vpop.f32.mrb[0].mxu0
  %v2718 = vadd.f32 0.0, %v2717
  %v2719 = vpop.f32.mrb[0].mxu0
  %v2720 = vadd.f32 0.0, %v2719
  %v2721 = vpop.f32.mrb[0].mxu0
  %v2722 = vpop.f32.mrb[0].mxu0
  %2723 = vdwg.mxu0
  %v2724 = vadd.f32 %v2575, %v2677
  %v2725 = vadd.f32 %v2576, %v2679
  %v2726 = vadd.f32 %v2577, %v2718
  %v2727 = vadd.f32 %v2578, %v2720
  %2728 = vst [vmem:[#allocation2 + $0x40] sm:$0xff] %v2724
  %2729 = vst [vmem:[#allocation2 + $0x48] sm:$0xff] %v2725
  %2730 = vst [vmem:[#allocation2 + $0x50] sm:$0xff] %v2726
  %2731 = vst [vmem:[#allocation2 + $0x58] sm:$0xff] %v2727
  %v2732 = vld [vmem:[#allocation2] sm:$0xff]
  %v2733 = vld [vmem:[#allocation2 + $0x8] sm:$0xff]
  %v2734 = vld [vmem:[#allocation2 + $0x10] sm:$0xff]
  %v2735 = vld [vmem:[#allocation2 + $0x18] sm:$0xff]
  %v2736 = vld [vmem:[#allocation2 + $0x20] sm:$0xff]
  %v2737 = vld [vmem:[#allocation2 + $0x28] sm:$0xff]
  %v2738 = vld [vmem:[#allocation2 + $0x30] sm:$0xff]
  %v2739 = vld [vmem:[#allocation2 + $0x38] sm:$0xff]
  %v2740 = vld [vmem:[#allocation2 + $0x40] sm:$0xff]
  %v2741 = vld [vmem:[#allocation2 + $0x48] sm:$0xff]
  %v2742 = vld [vmem:[#allocation2 + $0x50] sm:$0xff]
  %v2743 = vld [vmem:[#allocation2 + $0x58] sm:$0xff]
  %v2744 = vld [vmem:[%s1] sm:$0xff]
  %v2745 = vld [vmem:[%s1 + $0x8] sm:$0xff]
  %v2746 = vld [vmem:[%s1 + $0x10] sm:$0xff]
  %v2747 = vld [vmem:[%s2] sm:$0xff]
  %v2748 = vld [vmem:[%s2 + $0x8] sm:$0xff]
  %v2749 = vld [vmem:[%s2 + $0x10] sm:$0xff]
  %2751 = vset.pattern.permute.xlu0 2
  %2752 = vperm.xlu0 %2751, %v2744
  %v2753 = vpop.permute.xlu0 %2752
  %2756 = vset.pattern.permute.xlu0 2
  %2757 = vperm.xlu0 %2756, %v2745
  %v2758 = vpop.permute.xlu0 %2757
  %2761 = vset.pattern.permute.xlu0 2
  %2762 = vperm.xlu0 %2761, %v2746
  %v2763 = vpop.permute.xlu0 %2762
  %v2765 = vmul.f32 %v2732, %v2753
  %v2766 = vmul.f32 %v2733, %v2753
  %v2767 = vmul.f32 %v2734, %v2753
  %v2768 = vmul.f32 %v2735, %v2753
  %v2769 = vmul.f32 %v2736, %v2758
  %v2770 = vmul.f32 %v2737, %v2758
  %v2771 = vmul.f32 %v2738, %v2758
  %v2772 = vmul.f32 %v2739, %v2758
  %v2773 = vmul.f32 %v2740, %v2763
  %v2774 = vmul.f32 %v2741, %v2763
  %v2775 = vmul.f32 %v2742, %v2763
  %v2776 = vmul.f32 %v2743, %v2763
  %2778 = vset.pattern.permute.xlu0 2
  %2779 = vperm.xlu0 %2778, %v2747
  %v2780 = vpop.permute.xlu0 %2779
  %2783 = vset.pattern.permute.xlu0 2
  %2784 = vperm.xlu0 %2783, %v2748
  %v2785 = vpop.permute.xlu0 %2784
  %2788 = vset.pattern.permute.xlu0 2
  %2789 = vperm.xlu0 %2788, %v2749
  %v2790 = vpop.permute.xlu0 %2789
  %v2792 = vadd.f32 %v2765, %v2780
  %v2793 = vadd.f32 %v2766, %v2780
  %v2794 = vadd.f32 %v2767, %v2780
  %v2795 = vadd.f32 %v2768, %v2780
  %v2796 = vadd.f32 %v2769, %v2785
  %v2797 = vadd.f32 %v2770, %v2785
  %v2798 = vadd.f32 %v2771, %v2785
  %v2799 = vadd.f32 %v2772, %v2785
  %v2800 = vadd.f32 %v2773, %v2790
  %v2801 = vadd.f32 %v2774, %v2790
  %v2802 = vadd.f32 %v2775, %v2790
  %v2803 = vadd.f32 %v2776, %v2790
  %v2804 = vmax.f32 %v2792, 0.0
  %v2805 = vmax.f32 %v2793, 0.0
  %v2806 = vmax.f32 %v2794, 0.0
  %v2807 = vmax.f32 %v2795, 0.0
  %v2808 = vmax.f32 %v2796, 0.0
  %v2809 = vmax.f32 %v2797, 0.0
  %v2810 = vmax.f32 %v2798, 0.0
  %v2811 = vmax.f32 %v2799, 0.0
  %v2812 = vmax.f32 %v2800, 0.0
  %v2813 = vmax.f32 %v2801, 0.0
  %v2814 = vmax.f32 %v2802, 0.0
  %v2815 = vmax.f32 %v2803, 0.0
  %2816 = vrot.lane.b32.xlu0 %v2804, 16
  %v2817 = vpop.permute.xlu0 %2816
  %2818 = vrot.lane.b32.xlu0 %v2808, 16
  %v2819 = vpop.permute.xlu0 %2818
  %2820 = vrot.lane.b32.xlu0 %v2812, 16
  %v2821 = vpop.permute.xlu0 %2820
  %2822 = vrot.lane.b32.xlu0 %v2805, 16
  %v2823 = vpop.permute.xlu0 %2822
  %2824 = vrot.lane.b32.xlu0 %v2809, 16
  %v2825 = vpop.permute.xlu0 %2824
  %2826 = vrot.lane.b32.xlu0 %v2813, 16
  %v2827 = vpop.permute.xlu0 %2826
  %2828 = vrot.lane.b32.xlu0 %v2806, 16
  %v2829 = vpop.permute.xlu0 %2828
  %2830 = vrot.lane.b32.xlu0 %v2810, 16
  %v2831 = vpop.permute.xlu0 %2830
  %2832 = vrot.lane.b32.xlu0 %v2814, 16
  %v2833 = vpop.permute.xlu0 %2832
  %2834 = vrot.lane.b32.xlu0 %v2807, 16
  %v2835 = vpop.permute.xlu0 %2834
  %2836 = vrot.lane.b32.xlu0 %v2811, 16
  %v2837 = vpop.permute.xlu0 %2836
  %2838 = vrot.lane.b32.xlu0 %v2815, 16
  %v2839 = vpop.permute.xlu0 %2838
  %v2840 = vsel %vm68, %v2829, %v2835
  %v2841 = vsel %vm68, %v2831, %v2837
  %v2842 = vsel %vm68, %v2833, %v2839
  %v2843 = vsel %vm68, %v2823, %v2829
  %v2844 = vsel %vm68, %v2825, %v2831
  %v2845 = vsel %vm68, %v2827, %v2833
  %v2846 = vsel %vm68, %v2817, %v2823
  %v2847 = vsel %vm68, %v2819, %v2825
  %v2848 = vsel %vm68, %v2821, %v2827
  %v2849 = vsel %vm68, %v2835, %v2817
  %v2850 = vsel %vm68, %v2837, %v2819
  %v2851 = vsel %vm68, %v2839, %v2821
  %2852 = vrot.lane.b32.xlu0 %v2849, 1
  %v2853 = vpop.permute.xlu0 %2852
  %2854 = vrot.lane.b32.xlu0 %v2850, 1
  %v2855 = vpop.permute.xlu0 %2854
  %2856 = vrot.lane.b32.xlu0 %v2851, 1
  %v2857 = vpop.permute.xlu0 %2856
  %2858 = vrot.lane.b32.xlu0 %v2846, 1
  %v2859 = vpop.permute.xlu0 %2858
  %2860 = vrot.lane.b32.xlu0 %v2847, 1
  %v2861 = vpop.permute.xlu0 %2860
  %2862 = vrot.lane.b32.xlu0 %v2848, 1
  %v2863 = vpop.permute.xlu0 %2862
  %2864 = vrot.lane.b32.xlu0 %v2843, 1
  %v2865 = vpop.permute.xlu0 %2864
  %2866 = vrot.lane.b32.xlu0 %v2844, 1
  %v2867 = vpop.permute.xlu0 %2866
  %2868 = vrot.lane.b32.xlu0 %v2845, 1
  %v2869 = vpop.permute.xlu0 %2868
  %2870 = vrot.lane.b32.xlu0 %v2840, 1
  %v2871 = vpop.permute.xlu0 %2870
  %2872 = vrot.lane.b32.xlu0 %v2841, 1
  %v2873 = vpop.permute.xlu0 %2872
  %2874 = vrot.lane.b32.xlu0 %v2842, 1
  %v2875 = vpop.permute.xlu0 %2874
  %v2876 = vsel %vm81, %v2865, %v2871
  %v2877 = vsel %vm81, %v2867, %v2873
  %v2878 = vsel %vm81, %v2869, %v2875
  %v2879 = vsel %vm81, %v2859, %v2865
  %v2880 = vsel %vm81, %v2861, %v2867
  %v2881 = vsel %vm81, %v2863, %v2869
  %v2882 = vsel %vm81, %v2853, %v2859
  %v2883 = vsel %vm81, %v2855, %v2861
  %v2884 = vsel %vm81, %v2857, %v2863
  %v2885 = vsel %vm81, %v2871, %v2853
  %v2886 = vsel %vm81, %v2873, %v2855
  %v2887 = vsel %vm81, %v2875, %v2857
  %v2888 = vld [vmem:[%s4] ss:$8 sm:$0xf]
  %v2890 = vlaneseq
  %v2891 = vshrl.u32 %v2890, 7
  %v2892 = vsub.s32 0, %v2891
  %v2893 = vrot.slane %v2888, %v2892
  %v2894 = vlaneseq
  %v2895 = vshrl.u32 %v2894, 7
  %v2896 = vsub.s32 1, %v2895
  %v2897 = vrot.slane %v2888, %v2896
  %v2898 = vlaneseq
  %v2899 = vshrl.u32 %v2898, 7
  %v2900 = vsub.s32 2, %v2899
  %v2901 = vrot.slane %v2888, %v2900
  %v2902 = vlaneseq
  %v2903 = vshrl.u32 %v2902, 7
  %v2904 = vsub.s32 3, %v2903
  %v2905 = vrot.slane %v2888, %v2904
  %v2910 = vmul.f32 %v2885, %v2893
  %v2911 = vmul.f32 %v2882, %v2897
  %v2912 = vmul.f32 %v2879, %v2901
  %v2913 = vmul.f32 %v2876, %v2905
  %v2914 = vmul.f32 %v2886, %v2893
  %v2915 = vmul.f32 %v2883, %v2897
  %v2916 = vmul.f32 %v2880, %v2901
  %v2917 = vmul.f32 %v2877, %v2905
  %v2918 = vmul.f32 %v2887, %v2893
  %v2919 = vmul.f32 %v2884, %v2897
  %v2920 = vmul.f32 %v2881, %v2901
  %v2921 = vmul.f32 %v2878, %v2905
  %v2922 = vpack.c.bf16 %v2914, %v2910
  %v2923 = vpack.c.bf16 %v2915, %v2911
  %v2924 = vpack.c.bf16 %v2916, %v2912
  %v2925 = vpack.c.bf16 %v2917, %v2913
  %v2926 = vpack.c.bf16 %v2918, %v2918
  %v2927 = vpack.c.bf16 %v2919, %v2919
  %v2928 = vpack.c.bf16 %v2920, %v2920
  %v2929 = vpack.c.bf16 %v2921, %v2921
  %s2930 = scalar_lea.vmem %s3, 72
  %v2931 = vld [vmem:[%s2930] sm:$0xf]
  %v2932 = vld [vmem:[%s117] ss:$8 sm:$0xf]
  %v2934 = vlaneseq
  %v2935 = vshrl.u32 %v2934, 7
  %v2936 = vsub.s32 0, %v2935
  %v2937 = vrot.slane %v2932, %v2936
  %v2938 = vlaneseq
  %v2939 = vshrl.u32 %v2938, 7
  %v2940 = vsub.s32 1, %v2939
  %v2941 = vrot.slane %v2932, %v2940
  %v2942 = vlaneseq
  %v2943 = vshrl.u32 %v2942, 7
  %v2944 = vsub.s32 2, %v2943
  %v2945 = vrot.slane %v2932, %v2944
  %v2946 = vlaneseq
  %v2947 = vshrl.u32 %v2946, 7
  %v2948 = vsub.s32 3, %v2947
  %v2949 = vrot.slane %v2932, %v2948
  %v2954 = vmul.f32 %v2849, %v2937
  %v2955 = vmul.f32 %v2846, %v2941
  %v2956 = vmul.f32 %v2843, %v2945
  %v2957 = vmul.f32 %v2840, %v2949
  %v2958 = vmul.f32 %v2850, %v2937
  %v2959 = vmul.f32 %v2847, %v2941
  %v2960 = vmul.f32 %v2844, %v2945
  %v2961 = vmul.f32 %v2841, %v2949
  %v2962 = vmul.f32 %v2851, %v2937
  %v2963 = vmul.f32 %v2848, %v2941
  %v2964 = vmul.f32 %v2845, %v2945
  %v2965 = vmul.f32 %v2842, %v2949
  %v2966 = vpack.c.bf16 %v2958, %v2954
  %v2967 = vpack.c.bf16 %v2959, %v2955
  %v2968 = vpack.c.bf16 %v2960, %v2956
  %v2969 = vpack.c.bf16 %v2961, %v2957
  %v2970 = vpack.c.bf16 %v2962, %v2962
  %v2971 = vpack.c.bf16 %v2963, %v2963
  %v2972 = vpack.c.bf16 %v2964, %v2964
  %v2973 = vpack.c.bf16 %v2965, %v2965
  %s2974 = scalar_lea.vmem %s3, 76
  %v2975 = vld [vmem:[%s2974] sm:$0xf]
  %vm2976 = vcmask 195584
  %v2978 = vsel %vm2976, %v2975, 0
  %v2981 = vsel %vm154, %v2970, 0
  %v2984 = vsel %vm154, %v2971, 0
  %v2987 = vsel %vm154, %v2972, 0
  %v2990 = vsel %vm154, %v2973, 0
  %2992 = vmatprep.subr.bf16.mxu0 %v2967
  %2993 = vmatpush1.bf16.msra.mxu0 %v2966
  %2994 = vmatprep.subr.bf16.mxu0 %v2984
  %2995 = vmatpush1.bf16.msra.mxu0 %v2981
  %2996 = vmatprep.subr.bf16.mxu0 0
  %2997 = vmatpush1.bf16.msra.mxu0 0
  %2998 = vmatprep.subr.bf16.mxu0 0
  %2999 = vmatpush1.bf16.msra.mxu0 0
  %3000 = vmatprep.subr.bf16.mxu0 0
  %3001 = vmatpush1.bf16.msra.mxu0 0
  %3002 = vmatprep.subr.bf16.mxu0 0
  %3003 = vmatpush1.bf16.msra.mxu0 0
  %3004 = vmatprep.subr.bf16.mxu0 0
  %3005 = vmatpush1.bf16.msra.mxu0 0
  %3006 = vmatprep.subr.bf16.mxu0 0
  %3007 = vmatpush1.bf16.msra.mxu0 0
  %3008 = vmatprep.subr.bf16.mxu0 0
  %3009 = vmatpush1.bf16.msra.mxu0 0
  %3010 = vmatprep.subr.bf16.mxu0 0
  %3011 = vmatpush1.bf16.msra.mxu0 0
  %3012 = vmatprep.subr.bf16.mxu0 0
  %3013 = vmatpush1.bf16.msra.mxu0 0
  %3014 = vmatprep.subr.bf16.mxu0 0
  %3015 = vmatpush1.bf16.msra.mxu0 0
  %3016 = vmatprep.subr.bf16.mxu0 0
  %3017 = vmatpush1.bf16.msra.mxu0 0
  %3018 = vmatprep.subr.bf16.mxu0 0
  %3019 = vmatpush1.bf16.msra.mxu0 0
  %3020 = vmatprep.subr.bf16.mxu0 0
  %3021 = vmatpush1.bf16.msra.mxu0 0
  %3022 = vmatprep.subr.bf16.mxu0 0
  %3023 = vmatpush1.bf16.msra.mxu0 0
  %3024 = vmatprep.mubr.bf16.mxu0 0
  %3025 = vmatmul.mubr.bf16.gmra.mrb[0].mxu0 %v2978
  %v3026 = vpop.f32.mrb[0].mxu0
  %v3027 = vadd.f32 0.0, %v3026
  %v3028 = vpop.f32.mrb[0].mxu0
  %v3029 = vadd.f32 0.0, %v3028
  %v3030 = vpop.f32.mrb[0].mxu0
  %v3031 = vpop.f32.mrb[0].mxu0
  %3032 = vdwg.mxu0
  %3033 = vmatprep.subr.bf16.mxu0 %v2969
  %3034 = vmatpush1.bf16.msra.mxu0 %v2968
  %3035 = vmatprep.subr.bf16.mxu0 %v2990
  %3036 = vmatpush1.bf16.msra.mxu0 %v2987
  %3037 = vmatprep.subr.bf16.mxu0 0
  %3038 = vmatpush1.bf16.msra.mxu0 0
  %3039 = vmatprep.subr.bf16.mxu0 0
  %3040 = vmatpush1.bf16.msra.mxu0 0
  %3041 = vmatprep.subr.bf16.mxu0 0
  %3042 = vmatpush1.bf16.msra.mxu0 0
  %3043 = vmatprep.subr.bf16.mxu0 0
  %3044 = vmatpush1.bf16.msra.mxu0 0
  %3045 = vmatprep.subr.bf16.mxu0 0
  %3046 = vmatpush1.bf16.msra.mxu0 0
  %3047 = vmatprep.subr.bf16.mxu0 0
  %3048 = vmatpush1.bf16.msra.mxu0 0
  %3049 = vmatprep.subr.bf16.mxu0 0
  %3050 = vmatpush1.bf16.msra.mxu0 0
  %3051 = vmatprep.subr.bf16.mxu0 0
  %3052 = vmatpush1.bf16.msra.mxu0 0
  %3053 = vmatprep.subr.bf16.mxu0 0
  %3054 = vmatpush1.bf16.msra.mxu0 0
  %3055 = vmatprep.subr.bf16.mxu0 0
  %3056 = vmatpush1.bf16.msra.mxu0 0
  %3057 = vmatprep.subr.bf16.mxu0 0
  %3058 = vmatpush1.bf16.msra.mxu0 0
  %3059 = vmatprep.subr.bf16.mxu0 0
  %3060 = vmatpush1.bf16.msra.mxu0 0
  %3061 = vmatprep.subr.bf16.mxu0 0
  %3062 = vmatpush1.bf16.msra.mxu0 0
  %3063 = vmatprep.subr.bf16.mxu0 0
  %3064 = vmatpush1.bf16.msra.mxu0 0
  %3065 = vmatprep.mubr.bf16.mxu0 0
  %3066 = vmatmul.mubr.bf16.gmra.mrb[0].mxu0 %v2978
  %v3067 = vpop.f32.mrb[0].mxu0
  %v3068 = vadd.f32 0.0, %v3067
  %v3069 = vpop.f32.mrb[0].mxu0
  %v3070 = vadd.f32 0.0, %v3069
  %v3071 = vpop.f32.mrb[0].mxu0
  %v3072 = vpop.f32.mrb[0].mxu0
  %3073 = vdwg.mxu0
  %v3075 = vsel %vm2976, %v2931, 0
  %v3078 = vsel %vm154, %v2926, 0
  %v3081 = vsel %vm154, %v2927, 0
  %v3084 = vsel %vm154, %v2928, 0
  %v3087 = vsel %vm154, %v2929, 0
  %3089 = vmatprep.subr.bf16.mxu0 %v2923
  %3090 = vmatpush1.bf16.msra.mxu0 %v2922
  %3091 = vmatprep.subr.bf16.mxu0 %v3081
  %3092 = vmatpush1.bf16.msra.mxu0 %v3078
  %3093 = vmatprep.subr.bf16.mxu0 0
  %3094 = vmatpush1.bf16.msra.mxu0 0
  %3095 = vmatprep.subr.bf16.mxu0 0
  %3096 = vmatpush1.bf16.msra.mxu0 0
  %3097 = vmatprep.subr.bf16.mxu0 0
  %3098 = vmatpush1.bf16.msra.mxu0 0
  %3099 = vmatprep.subr.bf16.mxu0 0
  %3100 = vmatpush1.bf16.msra.mxu0 0
  %3101 = vmatprep.subr.bf16.mxu0 0
  %3102 = vmatpush1.bf16.msra.mxu0 0
  %3103 = vmatprep.subr.bf16.mxu0 0
  %3104 = vmatpush1.bf16.msra.mxu0 0
  %3105 = vmatprep.subr.bf16.mxu0 0
  %3106 = vmatpush1.bf16.msra.mxu0 0
  %3107 = vmatprep.subr.bf16.mxu0 0
  %3108 = vmatpush1.bf16.msra.mxu0 0
  %3109 = vmatprep.subr.bf16.mxu0 0
  %3110 = vmatpush1.bf16.msra.mxu0 0
  %3111 = vmatprep.subr.bf16.mxu0 0
  %3112 = vmatpush1.bf16.msra.mxu0 0
  %3113 = vmatprep.subr.bf16.mxu0 0
  %3114 = vmatpush1.bf16.msra.mxu0 0
  %3115 = vmatprep.subr.bf16.mxu0 0
  %3116 = vmatpush1.bf16.msra.mxu0 0
  %3117 = vmatprep.subr.bf16.mxu0 0
  %3118 = vmatpush1.bf16.msra.mxu0 0
  %3119 = vmatprep.subr.bf16.mxu0 0
  %3120 = vmatpush1.bf16.msra.mxu0 0
  %3121 = vmatprep.mubr.bf16.mxu0 0
  %3122 = vmatmul.mubr.bf16.gmra.mrb[0].mxu0 %v3075
  %v3123 = vpop.f32.mrb[0].mxu0
  %v3124 = vadd.f32 %v3027, %v3123
  %v3125 = vpop.f32.mrb[0].mxu0
  %v3126 = vadd.f32 %v3029, %v3125
  %v3127 = vpop.f32.mrb[0].mxu0
  %v3128 = vpop.f32.mrb[0].mxu0
  %3129 = vdwg.mxu0
  %3130 = vmatprep.subr.bf16.mxu0 %v2925
  %3131 = vmatpush1.bf16.msra.mxu0 %v2924
  %3132 = vmatprep.subr.bf16.mxu0 %v3087
  %3133 = vmatpush1.bf16.msra.mxu0 %v3084
  %3134 = vmatprep.subr.bf16.mxu0 0
  %3135 = vmatpush1.bf16.msra.mxu0 0
  %3136 = vmatprep.subr.bf16.mxu0 0
  %3137 = vmatpush1.bf16.msra.mxu0 0
  %3138 = vmatprep.subr.bf16.mxu0 0
  %3139 = vmatpush1.bf16.msra.mxu0 0
  %3140 = vmatprep.subr.bf16.mxu0 0
  %3141 = vmatpush1.bf16.msra.mxu0 0
  %3142 = vmatprep.subr.bf16.mxu0 0
  %3143 = vmatpush1.bf16.msra.mxu0 0
  %3144 = vmatprep.subr.bf16.mxu0 0
  %3145 = vmatpush1.bf16.msra.mxu0 0
  %3146 = vmatprep.subr.bf16.mxu0 0
  %3147 = vmatpush1.bf16.msra.mxu0 0
  %3148 = vmatprep.subr.bf16.mxu0 0
  %3149 = vmatpush1.bf16.msra.mxu0 0
  %3150 = vmatprep.subr.bf16.mxu0 0
  %3151 = vmatpush1.bf16.msra.mxu0 0
  %3152 = vmatprep.subr.bf16.mxu0 0
  %3153 = vmatpush1.bf16.msra.mxu0 0
  %3154 = vmatprep.subr.bf16.mxu0 0
  %3155 = vmatpush1.bf16.msra.mxu0 0
  %3156 = vmatprep.subr.bf16.mxu0 0
  %3157 = vmatpush1.bf16.msra.mxu0 0
  %3158 = vmatprep.subr.bf16.mxu0 0
  %3159 = vmatpush1.bf16.msra.mxu0 0
  %3160 = vmatprep.subr.bf16.mxu0 0
  %3161 = vmatpush1.bf16.msra.mxu0 0
  %3162 = vmatprep.mubr.bf16.mxu0 0
  %3163 = vmatmul.mubr.bf16.gmra.mrb[0].mxu0 %v3075
  %v3164 = vpop.f32.mrb[0].mxu0
  %v3165 = vadd.f32 %v3068, %v3164
  %v3166 = vpop.f32.mrb[0].mxu0
  %v3167 = vadd.f32 %v3070, %v3166
  %v3168 = vpop.f32.mrb[0].mxu0
  %v3169 = vpop.f32.mrb[0].mxu0
  %3170 = vdwg.mxu0
  %3171 = vrot.lane.b32.xlu0 %v2849, 127
  %v3172 = vpop.permute.xlu0 %3171
  %3173 = vrot.lane.b32.xlu0 %v2850, 127
  %v3174 = vpop.permute.xlu0 %3173
  %3175 = vrot.lane.b32.xlu0 %v2851, 127
  %v3176 = vpop.permute.xlu0 %3175
  %3177 = vrot.lane.b32.xlu0 %v2846, 127
  %v3178 = vpop.permute.xlu0 %3177
  %3179 = vrot.lane.b32.xlu0 %v2847, 127
  %v3180 = vpop.permute.xlu0 %3179
  %3181 = vrot.lane.b32.xlu0 %v2848, 127
  %v3182 = vpop.permute.xlu0 %3181
  %3183 = vrot.lane.b32.xlu0 %v2843, 127
  %v3184 = vpop.permute.xlu0 %3183
  %3185 = vrot.lane.b32.xlu0 %v2844, 127
  %v3186 = vpop.permute.xlu0 %3185
  %3187 = vrot.lane.b32.xlu0 %v2845, 127
  %v3188 = vpop.permute.xlu0 %3187
  %3189 = vrot.lane.b32.xlu0 %v2840, 127
  %v3190 = vpop.permute.xlu0 %3189
  %3191 = vrot.lane.b32.xlu0 %v2841, 127
  %v3192 = vpop.permute.xlu0 %3191
  %3193 = vrot.lane.b32.xlu0 %v2842, 127
  %v3194 = vpop.permute.xlu0 %3193
  %v3195 = vsel %vm354, %v3184, %v3190
  %v3196 = vsel %vm354, %v3186, %v3192
  %v3197 = vsel %vm354, %v3188, %v3194
  %v3198 = vsel %vm354, %v3178, %v3184
  %v3199 = vsel %vm354, %v3180, %v3186
  %v3200 = vsel %vm354, %v3182, %v3188
  %v3201 = vsel %vm354, %v3172, %v3178
  %v3202 = vsel %vm354, %v3174, %v3180
  %v3203 = vsel %vm354, %v3176, %v3182
  %v3204 = vsel %vm354, %v3190, %v3172
  %v3205 = vsel %vm354, %v3192, %v3174
  %v3206 = vsel %vm354, %v3194, %v3176
  %v3207 = vld [vmem:[%s359] ss:$8 sm:$0xf]
  %v3209 = vlaneseq
  %v3210 = vshrl.u32 %v3209, 7
  %v3211 = vsub.s32 0, %v3210
  %v3212 = vrot.slane %v3207, %v3211
  %v3213 = vlaneseq
  %v3214 = vshrl.u32 %v3213, 7
  %v3215 = vsub.s32 1, %v3214
  %v3216 = vrot.slane %v3207, %v3215
  %v3217 = vlaneseq
  %v3218 = vshrl.u32 %v3217, 7
  %v3219 = vsub.s32 2, %v3218
  %v3220 = vrot.slane %v3207, %v3219
  %v3221 = vlaneseq
  %v3222 = vshrl.u32 %v3221, 7
  %v3223 = vsub.s32 3, %v3222
  %v3224 = vrot.slane %v3207, %v3223
  %v3229 = vmul.f32 %v3201, %v3212
  %v3230 = vmul.f32 %v3198, %v3216
  %v3231 = vmul.f32 %v3195, %v3220
  %v3232 = vmul.f32 %v3204, %v3224
  %v3233 = vmul.f32 %v3202, %v3212
  %v3234 = vmul.f32 %v3199, %v3216
  %v3235 = vmul.f32 %v3196, %v3220
  %v3236 = vmul.f32 %v3205, %v3224
  %v3237 = vmul.f32 %v3203, %v3212
  %v3238 = vmul.f32 %v3200, %v3216
  %v3239 = vmul.f32 %v3197, %v3220
  %v3240 = vmul.f32 %v3206, %v3224
  %v3241 = vpack.c.bf16 %v3233, %v3229
  %v3242 = vpack.c.bf16 %v3234, %v3230
  %v3243 = vpack.c.bf16 %v3235, %v3231
  %v3244 = vpack.c.bf16 %v3236, %v3232
  %v3245 = vpack.c.bf16 %v3237, %v3237
  %v3246 = vpack.c.bf16 %v3238, %v3238
  %v3247 = vpack.c.bf16 %v3239, %v3239
  %v3248 = vpack.c.bf16 %v3240, %v3240
  %s3249 = scalar_lea.vmem %s3, 80
  %v3250 = vld [vmem:[%s3249] sm:$0xf]
  %v3252 = vsel %vm2976, %v3250, 0
  %v3255 = vsel %vm154, %v3245, 0
  %v3258 = vsel %vm154, %v3246, 0
  %v3261 = vsel %vm154, %v3247, 0
  %v3264 = vsel %vm154, %v3248, 0
  %3266 = vmatprep.subr.bf16.mxu0 %v3242
  %3267 = vmatpush1.bf16.msra.mxu0 %v3241
  %3268 = vmatprep.subr.bf16.mxu0 %v3258
  %3269 = vmatpush1.bf16.msra.mxu0 %v3255
  %3270 = vmatprep.subr.bf16.mxu0 0
  %3271 = vmatpush1.bf16.msra.mxu0 0
  %3272 = vmatprep.subr.bf16.mxu0 0
  %3273 = vmatpush1.bf16.msra.mxu0 0
  %3274 = vmatprep.subr.bf16.mxu0 0
  %3275 = vmatpush1.bf16.msra.mxu0 0
  %3276 = vmatprep.subr.bf16.mxu0 0
  %3277 = vmatpush1.bf16.msra.mxu0 0
  %3278 = vmatprep.subr.bf16.mxu0 0
  %3279 = vmatpush1.bf16.msra.mxu0 0
  %3280 = vmatprep.subr.bf16.mxu0 0
  %3281 = vmatpush1.bf16.msra.mxu0 0
  %3282 = vmatprep.subr.bf16.mxu0 0
  %3283 = vmatpush1.bf16.msra.mxu0 0
  %3284 = vmatprep.subr.bf16.mxu0 0
  %3285 = vmatpush1.bf16.msra.mxu0 0
  %3286 = vmatprep.subr.bf16.mxu0 0
  %3287 = vmatpush1.bf16.msra.mxu0 0
  %3288 = vmatprep.subr.bf16.mxu0 0
  %3289 = vmatpush1.bf16.msra.mxu0 0
  %3290 = vmatprep.subr.bf16.mxu0 0
  %3291 = vmatpush1.bf16.msra.mxu0 0
  %3292 = vmatprep.subr.bf16.mxu0 0
  %3293 = vmatpush1.bf16.msra.mxu0 0
  %3294 = vmatprep.subr.bf16.mxu0 0
  %3295 = vmatpush1.bf16.msra.mxu0 0
  %3296 = vmatprep.subr.bf16.mxu0 0
  %3297 = vmatpush1.bf16.msra.mxu0 0
  %3298 = vmatprep.mubr.bf16.mxu0 0
  %3299 = vmatmul.mubr.bf16.gmra.mrb[0].mxu0 %v3252
  %v3300 = vpop.f32.mrb[0].mxu0
  %v3301 = vadd.f32 0.0, %v3300
  %v3302 = vpop.f32.mrb[0].mxu0
  %v3303 = vadd.f32 0.0, %v3302
  %v3304 = vpop.f32.mrb[0].mxu0
  %v3305 = vpop.f32.mrb[0].mxu0
  %3306 = vdwg.mxu0
  %3307 = vmatprep.subr.bf16.mxu0 %v3244
  %3308 = vmatpush1.bf16.msra.mxu0 %v3243
  %3309 = vmatprep.subr.bf16.mxu0 %v3264
  %3310 = vmatpush1.bf16.msra.mxu0 %v3261
  %3311 = vmatprep.subr.bf16.mxu0 0
  %3312 = vmatpush1.bf16.msra.mxu0 0
  %3313 = vmatprep.subr.bf16.mxu0 0
  %3314 = vmatpush1.bf16.msra.mxu0 0
  %3315 = vmatprep.subr.bf16.mxu0 0
  %3316 = vmatpush1.bf16.msra.mxu0 0
  %3317 = vmatprep.subr.bf16.mxu0 0
  %3318 = vmatpush1.bf16.msra.mxu0 0
  %3319 = vmatprep.subr.bf16.mxu0 0
  %3320 = vmatpush1.bf16.msra.mxu0 0
  %3321 = vmatprep.subr.bf16.mxu0 0
  %3322 = vmatpush1.bf16.msra.mxu0 0
  %3323 = vmatprep.subr.bf16.mxu0 0
  %3324 = vmatpush1.bf16.msra.mxu0 0
  %3325 = vmatprep.subr.bf16.mxu0 0
  %3326 = vmatpush1.bf16.msra.mxu0 0
  %3327 = vmatprep.subr.bf16.mxu0 0
  %3328 = vmatpush1.bf16.msra.mxu0 0
  %3329 = vmatprep.subr.bf16.mxu0 0
  %3330 = vmatpush1.bf16.msra.mxu0 0
  %3331 = vmatprep.subr.bf16.mxu0 0
  %3332 = vmatpush1.bf16.msra.mxu0 0
  %3333 = vmatprep.subr.bf16.mxu0 0
  %3334 = vmatpush1.bf16.msra.mxu0 0
  %3335 = vmatprep.subr.bf16.mxu0 0
  %3336 = vmatpush1.bf16.msra.mxu0 0
  %3337 = vmatprep.subr.bf16.mxu0 0
  %3338 = vmatpush1.bf16.msra.mxu0 0
  %3339 = vmatprep.mubr.bf16.mxu0 0
  %3340 = vmatmul.mubr.bf16.gmra.mrb[0].mxu0 %v3252
  %v3341 = vpop.f32.mrb[0].mxu0
  %v3342 = vadd.f32 0.0, %v3341
  %v3343 = vpop.f32.mrb[0].mxu0
  %v3344 = vadd.f32 0.0, %v3343
  %v3345 = vpop.f32.mrb[0].mxu0
  %v3346 = vpop.f32.mrb[0].mxu0
  %3347 = vdwg.mxu0
  %v3348 = vadd.f32 %v3124, %v3301
  %v3349 = vadd.f32 %v3126, %v3303
  %v3350 = vadd.f32 %v3165, %v3342
  %v3351 = vadd.f32 %v3167, %v3344
  %3352 = vrot.lane.b32.xlu0 %v2804, 1
  %v3353 = vpop.permute.xlu0 %3352
  %3354 = vrot.lane.b32.xlu0 %v2808, 1
  %v3355 = vpop.permute.xlu0 %3354
  %3356 = vrot.lane.b32.xlu0 %v2812, 1
  %v3357 = vpop.permute.xlu0 %3356
  %3358 = vrot.lane.b32.xlu0 %v2805, 1
  %v3359 = vpop.permute.xlu0 %3358
  %3360 = vrot.lane.b32.xlu0 %v2809, 1
  %v3361 = vpop.permute.xlu0 %3360
  %3362 = vrot.lane.b32.xlu0 %v2813, 1
  %v3363 = vpop.permute.xlu0 %3362
  %3364 = vrot.lane.b32.xlu0 %v2806, 1
  %v3365 = vpop.permute.xlu0 %3364
  %3366 = vrot.lane.b32.xlu0 %v2810, 1
  %v3367 = vpop.permute.xlu0 %3366
  %3368 = vrot.lane.b32.xlu0 %v2814, 1
  %v3369 = vpop.permute.xlu0 %3368
  %3370 = vrot.lane.b32.xlu0 %v2807, 1
  %v3371 = vpop.permute.xlu0 %3370
  %3372 = vrot.lane.b32.xlu0 %v2811, 1
  %v3373 = vpop.permute.xlu0 %3372
  %3374 = vrot.lane.b32.xlu0 %v2815, 1
  %v3375 = vpop.permute.xlu0 %3374
  %v3376 = vsel %vm81, %v3365, %v3371
  %v3377 = vsel %vm81, %v3367, %v3373
  %v3378 = vsel %vm81, %v3369, %v3375
  %v3379 = vsel %vm81, %v3359, %v3365
  %v3380 = vsel %vm81, %v3361, %v3367
  %v3381 = vsel %vm81, %v3363, %v3369
  %v3382 = vsel %vm81, %v3353, %v3359
  %v3383 = vsel %vm81, %v3355, %v3361
  %v3384 = vsel %vm81, %v3357, %v3363
  %v3385 = vsel %vm81, %v3371, %v3353
  %v3386 = vsel %vm81, %v3373, %v3355
  %v3387 = vsel %vm81, %v3375, %v3357
  %v3388 = vld [vmem:[%s505] ss:$8 sm:$0xf]
  %v3390 = vlaneseq
  %v3391 = vshrl.u32 %v3390, 7
  %v3392 = vsub.s32 0, %v3391
  %v3393 = vrot.slane %v3388, %v3392
  %v3394 = vlaneseq
  %v3395 = vshrl.u32 %v3394, 7
  %v3396 = vsub.s32 1, %v3395
  %v3397 = vrot.slane %v3388, %v3396
  %v3398 = vlaneseq
  %v3399 = vshrl.u32 %v3398, 7
  %v3400 = vsub.s32 2, %v3399
  %v3401 = vrot.slane %v3388, %v3400
  %v3402 = vlaneseq
  %v3403 = vshrl.u32 %v3402, 7
  %v3404 = vsub.s32 3, %v3403
  %v3405 = vrot.slane %v3388, %v3404
  %v3410 = vmul.f32 %v3385, %v3393
  %v3411 = vmul.f32 %v3382, %v3397
  %v3412 = vmul.f32 %v3379, %v3401
  %v3413 = vmul.f32 %v3376, %v3405
  %v3414 = vmul.f32 %v3386, %v3393
  %v3415 = vmul.f32 %v3383, %v3397
  %v3416 = vmul.f32 %v3380, %v3401
  %v3417 = vmul.f32 %v3377, %v3405
  %v3418 = vmul.f32 %v3387, %v3393
  %v3419 = vmul.f32 %v3384, %v3397
  %v3420 = vmul.f32 %v3381, %v3401
  %v3421 = vmul.f32 %v3378, %v3405
  %v3422 = vpack.c.bf16 %v3414, %v3410
  %v3423 = vpack.c.bf16 %v3415, %v3411
  %v3424 = vpack.c.bf16 %v3416, %v3412
  %v3425 = vpack.c.bf16 %v3417, %v3413
  %v3426 = vpack.c.bf16 %v3418, %v3418
  %v3427 = vpack.c.bf16 %v3419, %v3419
  %v3428 = vpack.c.bf16 %v3420, %v3420
  %v3429 = vpack.c.bf16 %v3421, %v3421
  %s3430 = scalar_lea.vmem %s3, 84
  %v3431 = vld [vmem:[%s3430] sm:$0xf]
  %v3433 = vsel %vm2976, %v3431, 0
  %v3436 = vsel %vm154, %v3426, 0
  %v3439 = vsel %vm154, %v3427, 0
  %v3442 = vsel %vm154, %v3428, 0
  %v3445 = vsel %vm154, %v3429, 0
  %3447 = vmatprep.subr.bf16.mxu0 %v3423
  %3448 = vmatpush1.bf16.msra.mxu0 %v3422
  %3449 = vmatprep.subr.bf16.mxu0 %v3439
  %3450 = vmatpush1.bf16.msra.mxu0 %v3436
  %3451 = vmatprep.subr.bf16.mxu0 0
  %3452 = vmatpush1.bf16.msra.mxu0 0
  %3453 = vmatprep.subr.bf16.mxu0 0
  %3454 = vmatpush1.bf16.msra.mxu0 0
  %3455 = vmatprep.subr.bf16.mxu0 0
  %3456 = vmatpush1.bf16.msra.mxu0 0
  %3457 = vmatprep.subr.bf16.mxu0 0
  %3458 = vmatpush1.bf16.msra.mxu0 0
  %3459 = vmatprep.subr.bf16.mxu0 0
  %3460 = vmatpush1.bf16.msra.mxu0 0
  %3461 = vmatprep.subr.bf16.mxu0 0
  %3462 = vmatpush1.bf16.msra.mxu0 0
  %3463 = vmatprep.subr.bf16.mxu0 0
  %3464 = vmatpush1.bf16.msra.mxu0 0
  %3465 = vmatprep.subr.bf16.mxu0 0
  %3466 = vmatpush1.bf16.msra.mxu0 0
  %3467 = vmatprep.subr.bf16.mxu0 0
  %3468 = vmatpush1.bf16.msra.mxu0 0
  %3469 = vmatprep.subr.bf16.mxu0 0
  %3470 = vmatpush1.bf16.msra.mxu0 0
  %3471 = vmatprep.subr.bf16.mxu0 0
  %3472 = vmatpush1.bf16.msra.mxu0 0
  %3473 = vmatprep.subr.bf16.mxu0 0
  %3474 = vmatpush1.bf16.msra.mxu0 0
  %3475 = vmatprep.subr.bf16.mxu0 0
  %3476 = vmatpush1.bf16.msra.mxu0 0
  %3477 = vmatprep.subr.bf16.mxu0 0
  %3478 = vmatpush1.bf16.msra.mxu0 0
  %3479 = vmatprep.mubr.bf16.mxu0 0
  %3480 = vmatmul.mubr.bf16.gmra.mrb[0].mxu0 %v3433
  %v3481 = vpop.f32.mrb[0].mxu0
  %v3482 = vadd.f32 0.0, %v3481
  %v3483 = vpop.f32.mrb[0].mxu0
  %v3484 = vadd.f32 0.0, %v3483
  %v3485 = vpop.f32.mrb[0].mxu0
  %v3486 = vpop.f32.mrb[0].mxu0
  %3487 = vdwg.mxu0
  %3488 = vmatprep.subr.bf16.mxu0 %v3425
  %3489 = vmatpush1.bf16.msra.mxu0 %v3424
  %3490 = vmatprep.subr.bf16.mxu0 %v3445
  %3491 = vmatpush1.bf16.msra.mxu0 %v3442
  %3492 = vmatprep.subr.bf16.mxu0 0
  %3493 = vmatpush1.bf16.msra.mxu0 0
  %3494 = vmatprep.subr.bf16.mxu0 0
  %3495 = vmatpush1.bf16.msra.mxu0 0
  %3496 = vmatprep.subr.bf16.mxu0 0
  %3497 = vmatpush1.bf16.msra.mxu0 0
  %3498 = vmatprep.subr.bf16.mxu0 0
  %3499 = vmatpush1.bf16.msra.mxu0 0
  %3500 = vmatprep.subr.bf16.mxu0 0
  %3501 = vmatpush1.bf16.msra.mxu0 0
  %3502 = vmatprep.subr.bf16.mxu0 0
  %3503 = vmatpush1.bf16.msra.mxu0 0
  %3504 = vmatprep.subr.bf16.mxu0 0
  %3505 = vmatpush1.bf16.msra.mxu0 0
  %3506 = vmatprep.subr.bf16.mxu0 0
  %3507 = vmatpush1.bf16.msra.mxu0 0
  %3508 = vmatprep.subr.bf16.mxu0 0
  %3509 = vmatpush1.bf16.msra.mxu0 0
  %3510 = vmatprep.subr.bf16.mxu0 0
  %3511 = vmatpush1.bf16.msra.mxu0 0
  %3512 = vmatprep.subr.bf16.mxu0 0
  %3513 = vmatpush1.bf16.msra.mxu0 0
  %3514 = vmatprep.subr.bf16.mxu0 0
  %3515 = vmatpush1.bf16.msra.mxu0 0
  %3516 = vmatprep.subr.bf16.mxu0 0
  %3517 = vmatpush1.bf16.msra.mxu0 0
  %3518 = vmatprep.subr.bf16.mxu0 0
  %3519 = vmatpush1.bf16.msra.mxu0 0
  %3520 = vmatprep.mubr.bf16.mxu0 0
  %3521 = vmatmul.mubr.bf16.gmra.mrb[0].mxu0 %v3433
  %v3522 = vpop.f32.mrb[0].mxu0
  %v3523 = vadd.f32 0.0, %v3522
  %v3524 = vpop.f32.mrb[0].mxu0
  %v3525 = vadd.f32 0.0, %v3524
  %v3526 = vpop.f32.mrb[0].mxu0
  %v3527 = vpop.f32.mrb[0].mxu0
  %3528 = vdwg.mxu0
  %v3529 = vadd.f32 %v3348, %v3482
  %v3530 = vadd.f32 %v3349, %v3484
  %v3531 = vadd.f32 %v3350, %v3523
  %v3532 = vadd.f32 %v3351, %v3525
  %v3533 = vld [vmem:[%s639] ss:$8 sm:$0xf]
  %v3535 = vlaneseq
  %v3536 = vshrl.u32 %v3535, 7
  %v3537 = vsub.s32 0, %v3536
  %v3538 = vrot.slane %v3533, %v3537
  %v3539 = vlaneseq
  %v3540 = vshrl.u32 %v3539, 7
  %v3541 = vsub.s32 1, %v3540
  %v3542 = vrot.slane %v3533, %v3541
  %v3543 = vlaneseq
  %v3544 = vshrl.u32 %v3543, 7
  %v3545 = vsub.s32 2, %v3544
  %v3546 = vrot.slane %v3533, %v3545
  %v3547 = vlaneseq
  %v3548 = vshrl.u32 %v3547, 7
  %v3549 = vsub.s32 3, %v3548
  %v3550 = vrot.slane %v3533, %v3549
  %v3555 = vmul.f32 %v2804, %v3538
  %v3556 = vmul.f32 %v2805, %v3542
  %v3557 = vmul.f32 %v2806, %v3546
  %v3558 = vmul.f32 %v2807, %v3550
  %v3559 = vmul.f32 %v2808, %v3538
  %v3560 = vmul.f32 %v2809, %v3542
  %v3561 = vmul.f32 %v2810, %v3546
  %v3562 = vmul.f32 %v2811, %v3550
  %v3563 = vmul.f32 %v2812, %v3538
  %v3564 = vmul.f32 %v2813, %v3542
  %v3565 = vmul.f32 %v2814, %v3546
  %v3566 = vmul.f32 %v2815, %v3550
  %v3567 = vpack.c.bf16 %v3559, %v3555
  %v3568 = vpack.c.bf16 %v3560, %v3556
  %v3569 = vpack.c.bf16 %v3561, %v3557
  %v3570 = vpack.c.bf16 %v3562, %v3558
  %v3571 = vpack.c.bf16 %v3563, %v3563
  %v3572 = vpack.c.bf16 %v3564, %v3564
  %v3573 = vpack.c.bf16 %v3565, %v3565
  %v3574 = vpack.c.bf16 %v3566, %v3566
  %s3575 = scalar_lea.vmem %s3, 88
  %v3576 = vld [vmem:[%s3575] sm:$0xf]
  %v3578 = vsel %vm2976, %v3576, 0
  %v3581 = vsel %vm154, %v3571, 0
  %v3584 = vsel %vm154, %v3572, 0
  %v3587 = vsel %vm154, %v3573, 0
  %v3590 = vsel %vm154, %v3574, 0
  %3592 = vmatprep.subr.bf16.mxu0 %v3568
  %3593 = vmatpush1.bf16.msra.mxu0 %v3567
  %3594 = vmatprep.subr.bf16.mxu0 %v3584
  %3595 = vmatpush1.bf16.msra.mxu0 %v3581
  %3596 = vmatprep.subr.bf16.mxu0 0
  %3597 = vmatpush1.bf16.msra.mxu0 0
  %3598 = vmatprep.subr.bf16.mxu0 0
  %3599 = vmatpush1.bf16.msra.mxu0 0
  %3600 = vmatprep.subr.bf16.mxu0 0
  %3601 = vmatpush1.bf16.msra.mxu0 0
  %3602 = vmatprep.subr.bf16.mxu0 0
  %3603 = vmatpush1.bf16.msra.mxu0 0
  %3604 = vmatprep.subr.bf16.mxu0 0
  %3605 = vmatpush1.bf16.msra.mxu0 0
  %3606 = vmatprep.subr.bf16.mxu0 0
  %3607 = vmatpush1.bf16.msra.mxu0 0
  %3608 = vmatprep.subr.bf16.mxu0 0
  %3609 = vmatpush1.bf16.msra.mxu0 0
  %3610 = vmatprep.subr.bf16.mxu0 0
  %3611 = vmatpush1.bf16.msra.mxu0 0
  %3612 = vmatprep.subr.bf16.mxu0 0
  %3613 = vmatpush1.bf16.msra.mxu0 0
  %3614 = vmatprep.subr.bf16.mxu0 0
  %3615 = vmatpush1.bf16.msra.mxu0 0
  %3616 = vmatprep.subr.bf16.mxu0 0
  %3617 = vmatpush1.bf16.msra.mxu0 0
  %3618 = vmatprep.subr.bf16.mxu0 0
  %3619 = vmatpush1.bf16.msra.mxu0 0
  %3620 = vmatprep.subr.bf16.mxu0 0
  %3621 = vmatpush1.bf16.msra.mxu0 0
  %3622 = vmatprep.subr.bf16.mxu0 0
  %3623 = vmatpush1.bf16.msra.mxu0 0
  %3624 = vmatprep.mubr.bf16.mxu0 0
  %3625 = vmatmul.mubr.bf16.gmra.mrb[0].mxu0 %v3578
  %v3626 = vpop.f32.mrb[0].mxu0
  %v3627 = vadd.f32 0.0, %v3626
  %v3628 = vpop.f32.mrb[0].mxu0
  %v3629 = vadd.f32 0.0, %v3628
  %v3630 = vpop.f32.mrb[0].mxu0
  %v3631 = vpop.f32.mrb[0].mxu0
  %3632 = vdwg.mxu0
  %3633 = vmatprep.subr.bf16.mxu0 %v3570
  %3634 = vmatpush1.bf16.msra.mxu0 %v3569
  %3635 = vmatprep.subr.bf16.mxu0 %v3590
  %3636 = vmatpush1.bf16.msra.mxu0 %v3587
  %3637 = vmatprep.subr.bf16.mxu0 0
  %3638 = vmatpush1.bf16.msra.mxu0 0
  %3639 = vmatprep.subr.bf16.mxu0 0
  %3640 = vmatpush1.bf16.msra.mxu0 0
  %3641 = vmatprep.subr.bf16.mxu0 0
  %3642 = vmatpush1.bf16.msra.mxu0 0
  %3643 = vmatprep.subr.bf16.mxu0 0
  %3644 = vmatpush1.bf16.msra.mxu0 0
  %3645 = vmatprep.subr.bf16.mxu0 0
  %3646 = vmatpush1.bf16.msra.mxu0 0
  %3647 = vmatprep.subr.bf16.mxu0 0
  %3648 = vmatpush1.bf16.msra.mxu0 0
  %3649 = vmatprep.subr.bf16.mxu0 0
  %3650 = vmatpush1.bf16.msra.mxu0 0
  %3651 = vmatprep.subr.bf16.mxu0 0
  %3652 = vmatpush1.bf16.msra.mxu0 0
  %3653 = vmatprep.subr.bf16.mxu0 0
  %3654 = vmatpush1.bf16.msra.mxu0 0
  %3655 = vmatprep.subr.bf16.mxu0 0
  %3656 = vmatpush1.bf16.msra.mxu0 0
  %3657 = vmatprep.subr.bf16.mxu0 0
  %3658 = vmatpush1.bf16.msra.mxu0 0
  %3659 = vmatprep.subr.bf16.mxu0 0
  %3660 = vmatpush1.bf16.msra.mxu0 0
  %3661 = vmatprep.subr.bf16.mxu0 0
  %3662 = vmatpush1.bf16.msra.mxu0 0
  %3663 = vmatprep.subr.bf16.mxu0 0
  %3664 = vmatpush1.bf16.msra.mxu0 0
  %3665 = vmatprep.mubr.bf16.mxu0 0
  %3666 = vmatmul.mubr.bf16.gmra.mrb[0].mxu0 %v3578
  %v3667 = vpop.f32.mrb[0].mxu0
  %v3668 = vadd.f32 0.0, %v3667
  %v3669 = vpop.f32.mrb[0].mxu0
  %v3670 = vadd.f32 0.0, %v3669
  %v3671 = vpop.f32.mrb[0].mxu0
  %v3672 = vpop.f32.mrb[0].mxu0
  %3673 = vdwg.mxu0
  %v3674 = vadd.f32 %v3529, %v3627
  %v3675 = vadd.f32 %v3530, %v3629
  %v3676 = vadd.f32 %v3531, %v3668
  %v3677 = vadd.f32 %v3532, %v3670
  %3678 = vrot.lane.b32.xlu0 %v2804, 127
  %v3679 = vpop.permute.xlu0 %3678
  %3680 = vrot.lane.b32.xlu0 %v2808, 127
  %v3681 = vpop.permute.xlu0 %3680
  %3682 = vrot.lane.b32.xlu0 %v2812, 127
  %v3683 = vpop.permute.xlu0 %3682
  %3684 = vrot.lane.b32.xlu0 %v2805, 127
  %v3685 = vpop.permute.xlu0 %3684
  %3686 = vrot.lane.b32.xlu0 %v2809, 127
  %v3687 = vpop.permute.xlu0 %3686
  %3688 = vrot.lane.b32.xlu0 %v2813, 127
  %v3689 = vpop.permute.xlu0 %3688
  %3690 = vrot.lane.b32.xlu0 %v2806, 127
  %v3691 = vpop.permute.xlu0 %3690
  %3692 = vrot.lane.b32.xlu0 %v2810, 127
  %v3693 = vpop.permute.xlu0 %3692
  %3694 = vrot.lane.b32.xlu0 %v2814, 127
  %v3695 = vpop.permute.xlu0 %3694
  %3696 = vrot.lane.b32.xlu0 %v2807, 127
  %v3697 = vpop.permute.xlu0 %3696
  %3698 = vrot.lane.b32.xlu0 %v2811, 127
  %v3699 = vpop.permute.xlu0 %3698
  %3700 = vrot.lane.b32.xlu0 %v2815, 127
  %v3701 = vpop.permute.xlu0 %3700
  %v3702 = vsel %vm354, %v3691, %v3697
  %v3703 = vsel %vm354, %v3693, %v3699
  %v3704 = vsel %vm354, %v3695, %v3701
  %v3705 = vsel %vm354, %v3685, %v3691
  %v3706 = vsel %vm354, %v3687, %v3693
  %v3707 = vsel %vm354, %v3689, %v3695
  %v3708 = vsel %vm354, %v3679, %v3685
  %v3709 = vsel %vm354, %v3681, %v3687
  %v3710 = vsel %vm354, %v3683, %v3689
  %v3711 = vsel %vm354, %v3697, %v3679
  %v3712 = vsel %vm354, %v3699, %v3681
  %v3713 = vsel %vm354, %v3701, %v3683
  %v3714 = vld [vmem:[%s785] ss:$8 sm:$0xf]
  %v3716 = vlaneseq
  %v3717 = vshrl.u32 %v3716, 7
  %v3718 = vsub.s32 0, %v3717
  %v3719 = vrot.slane %v3714, %v3718
  %v3720 = vlaneseq
  %v3721 = vshrl.u32 %v3720, 7
  %v3722 = vsub.s32 1, %v3721
  %v3723 = vrot.slane %v3714, %v3722
  %v3724 = vlaneseq
  %v3725 = vshrl.u32 %v3724, 7
  %v3726 = vsub.s32 2, %v3725
  %v3727 = vrot.slane %v3714, %v3726
  %v3728 = vlaneseq
  %v3729 = vshrl.u32 %v3728, 7
  %v3730 = vsub.s32 3, %v3729
  %v3731 = vrot.slane %v3714, %v3730
  %v3736 = vmul.f32 %v3708, %v3719
  %v3737 = vmul.f32 %v3705, %v3723
  %v3738 = vmul.f32 %v3702, %v3727
  %v3739 = vmul.f32 %v3711, %v3731
  %v3740 = vmul.f32 %v3709, %v3719
  %v3741 = vmul.f32 %v3706, %v3723
  %v3742 = vmul.f32 %v3703, %v3727
  %v3743 = vmul.f32 %v3712, %v3731
  %v3744 = vmul.f32 %v3710, %v3719
  %v3745 = vmul.f32 %v3707, %v3723
  %v3746 = vmul.f32 %v3704, %v3727
  %v3747 = vmul.f32 %v3713, %v3731
  %v3748 = vpack.c.bf16 %v3740, %v3736
  %v3749 = vpack.c.bf16 %v3741, %v3737
  %v3750 = vpack.c.bf16 %v3742, %v3738
  %v3751 = vpack.c.bf16 %v3743, %v3739
  %v3752 = vpack.c.bf16 %v3744, %v3744
  %v3753 = vpack.c.bf16 %v3745, %v3745
  %v3754 = vpack.c.bf16 %v3746, %v3746
  %v3755 = vpack.c.bf16 %v3747, %v3747
  %s3756 = scalar_lea.vmem %s3, 92
  %v3757 = vld [vmem:[%s3756] sm:$0xf]
  %v3759 = vsel %vm2976, %v3757, 0
  %v3762 = vsel %vm154, %v3752, 0
  %v3765 = vsel %vm154, %v3753, 0
  %v3768 = vsel %vm154, %v3754, 0
  %v3771 = vsel %vm154, %v3755, 0
  %3773 = vmatprep.subr.bf16.mxu0 %v3749
  %3774 = vmatpush1.bf16.msra.mxu0 %v3748
  %3775 = vmatprep.subr.bf16.mxu0 %v3765
  %3776 = vmatpush1.bf16.msra.mxu0 %v3762
  %3777 = vmatprep.subr.bf16.mxu0 0
  %3778 = vmatpush1.bf16.msra.mxu0 0
  %3779 = vmatprep.subr.bf16.mxu0 0
  %3780 = vmatpush1.bf16.msra.mxu0 0
  %3781 = vmatprep.subr.bf16.mxu0 0
  %3782 = vmatpush1.bf16.msra.mxu0 0
  %3783 = vmatprep.subr.bf16.mxu0 0
  %3784 = vmatpush1.bf16.msra.mxu0 0
  %3785 = vmatprep.subr.bf16.mxu0 0
  %3786 = vmatpush1.bf16.msra.mxu0 0
  %3787 = vmatprep.subr.bf16.mxu0 0
  %3788 = vmatpush1.bf16.msra.mxu0 0
  %3789 = vmatprep.subr.bf16.mxu0 0
  %3790 = vmatpush1.bf16.msra.mxu0 0
  %3791 = vmatprep.subr.bf16.mxu0 0
  %3792 = vmatpush1.bf16.msra.mxu0 0
  %3793 = vmatprep.subr.bf16.mxu0 0
  %3794 = vmatpush1.bf16.msra.mxu0 0
  %3795 = vmatprep.subr.bf16.mxu0 0
  %3796 = vmatpush1.bf16.msra.mxu0 0
  %3797 = vmatprep.subr.bf16.mxu0 0
  %3798 = vmatpush1.bf16.msra.mxu0 0
  %3799 = vmatprep.subr.bf16.mxu0 0
  %3800 = vmatpush1.bf16.msra.mxu0 0
  %3801 = vmatprep.subr.bf16.mxu0 0
  %3802 = vmatpush1.bf16.msra.mxu0 0
  %3803 = vmatprep.subr.bf16.mxu0 0
  %3804 = vmatpush1.bf16.msra.mxu0 0
  %3805 = vmatprep.mubr.bf16.mxu0 0
  %3806 = vmatmul.mubr.bf16.gmra.mrb[0].mxu0 %v3759
  %v3807 = vpop.f32.mrb[0].mxu0
  %v3808 = vadd.f32 0.0, %v3807
  %v3809 = vpop.f32.mrb[0].mxu0
  %v3810 = vadd.f32 0.0, %v3809
  %v3811 = vpop.f32.mrb[0].mxu0
  %v3812 = vpop.f32.mrb[0].mxu0
  %3813 = vdwg.mxu0
  %3814 = vmatprep.subr.bf16.mxu0 %v3751
  %3815 = vmatpush1.bf16.msra.mxu0 %v3750
  %3816 = vmatprep.subr.bf16.mxu0 %v3771
  %3817 = vmatpush1.bf16.msra.mxu0 %v3768
  %3818 = vmatprep.subr.bf16.mxu0 0
  %3819 = vmatpush1.bf16.msra.mxu0 0
  %3820 = vmatprep.subr.bf16.mxu0 0
  %3821 = vmatpush1.bf16.msra.mxu0 0
  %3822 = vmatprep.subr.bf16.mxu0 0
  %3823 = vmatpush1.bf16.msra.mxu0 0
  %3824 = vmatprep.subr.bf16.mxu0 0
  %3825 = vmatpush1.bf16.msra.mxu0 0
  %3826 = vmatprep.subr.bf16.mxu0 0
  %3827 = vmatpush1.bf16.msra.mxu0 0
  %3828 = vmatprep.subr.bf16.mxu0 0
  %3829 = vmatpush1.bf16.msra.mxu0 0
  %3830 = vmatprep.subr.bf16.mxu0 0
  %3831 = vmatpush1.bf16.msra.mxu0 0
  %3832 = vmatprep.subr.bf16.mxu0 0
  %3833 = vmatpush1.bf16.msra.mxu0 0
  %3834 = vmatprep.subr.bf16.mxu0 0
  %3835 = vmatpush1.bf16.msra.mxu0 0
  %3836 = vmatprep.subr.bf16.mxu0 0
  %3837 = vmatpush1.bf16.msra.mxu0 0
  %3838 = vmatprep.subr.bf16.mxu0 0
  %3839 = vmatpush1.bf16.msra.mxu0 0
  %3840 = vmatprep.subr.bf16.mxu0 0
  %3841 = vmatpush1.bf16.msra.mxu0 0
  %3842 = vmatprep.subr.bf16.mxu0 0
  %3843 = vmatpush1.bf16.msra.mxu0 0
  %3844 = vmatprep.subr.bf16.mxu0 0
  %3845 = vmatpush1.bf16.msra.mxu0 0
  %3846 = vmatprep.mubr.bf16.mxu0 0
  %3847 = vmatmul.mubr.bf16.gmra.mrb[0].mxu0 %v3759
  %v3848 = vpop.f32.mrb[0].mxu0
  %v3849 = vadd.f32 0.0, %v3848
  %v3850 = vpop.f32.mrb[0].mxu0
  %v3851 = vadd.f32 0.0, %v3850
  %v3852 = vpop.f32.mrb[0].mxu0
  %v3853 = vpop.f32.mrb[0].mxu0
  %3854 = vdwg.mxu0
  %v3855 = vadd.f32 %v3674, %v3808
  %v3856 = vadd.f32 %v3675, %v3810
  %v3857 = vadd.f32 %v3676, %v3849
  %v3858 = vadd.f32 %v3677, %v3851
  %3859 = vrot.lane.b32.xlu0 %v2804, 112
  %v3860 = vpop.permute.xlu0 %3859
  %3861 = vrot.lane.b32.xlu0 %v2808, 112
  %v3862 = vpop.permute.xlu0 %3861
  %3863 = vrot.lane.b32.xlu0 %v2812, 112
  %v3864 = vpop.permute.xlu0 %3863
  %3865 = vrot.lane.b32.xlu0 %v2805, 112
  %v3866 = vpop.permute.xlu0 %3865
  %3867 = vrot.lane.b32.xlu0 %v2809, 112
  %v3868 = vpop.permute.xlu0 %3867
  %3869 = vrot.lane.b32.xlu0 %v2813, 112
  %v3870 = vpop.permute.xlu0 %3869
  %3871 = vrot.lane.b32.xlu0 %v2806, 112
  %v3872 = vpop.permute.xlu0 %3871
  %3873 = vrot.lane.b32.xlu0 %v2810, 112
  %v3874 = vpop.permute.xlu0 %3873
  %3875 = vrot.lane.b32.xlu0 %v2814, 112
  %v3876 = vpop.permute.xlu0 %3875
  %3877 = vrot.lane.b32.xlu0 %v2807, 112
  %v3878 = vpop.permute.xlu0 %3877
  %3879 = vrot.lane.b32.xlu0 %v2811, 112
  %v3880 = vpop.permute.xlu0 %3879
  %3881 = vrot.lane.b32.xlu0 %v2815, 112
  %v3882 = vpop.permute.xlu0 %3881
  %v3883 = vsel %vm927, %v3872, %v3878
  %v3884 = vsel %vm927, %v3874, %v3880
  %v3885 = vsel %vm927, %v3876, %v3882
  %v3886 = vsel %vm927, %v3866, %v3872
  %v3887 = vsel %vm927, %v3868, %v3874
  %v3888 = vsel %vm927, %v3870, %v3876
  %v3889 = vsel %vm927, %v3860, %v3866
  %v3890 = vsel %vm927, %v3862, %v3868
  %v3891 = vsel %vm927, %v3864, %v3870
  %v3892 = vsel %vm927, %v3878, %v3860
  %v3893 = vsel %vm927, %v3880, %v3862
  %v3894 = vsel %vm927, %v3882, %v3864
  %3895 = vrot.lane.b32.xlu0 %v3889, 1
  %v3896 = vpop.permute.xlu0 %3895
  %3897 = vrot.lane.b32.xlu0 %v3890, 1
  %v3898 = vpop.permute.xlu0 %3897
  %3899 = vrot.lane.b32.xlu0 %v3891, 1
  %v3900 = vpop.permute.xlu0 %3899
  %3901 = vrot.lane.b32.xlu0 %v3886, 1
  %v3902 = vpop.permute.xlu0 %3901
  %3903 = vrot.lane.b32.xlu0 %v3887, 1
  %v3904 = vpop.permute.xlu0 %3903
  %3905 = vrot.lane.b32.xlu0 %v3888, 1
  %v3906 = vpop.permute.xlu0 %3905
  %3907 = vrot.lane.b32.xlu0 %v3883, 1
  %v3908 = vpop.permute.xlu0 %3907
  %3909 = vrot.lane.b32.xlu0 %v3884, 1
  %v3910 = vpop.permute.xlu0 %3909
  %3911 = vrot.lane.b32.xlu0 %v3885, 1
  %v3912 = vpop.permute.xlu0 %3911
  %3913 = vrot.lane.b32.xlu0 %v3892, 1
  %v3914 = vpop.permute.xlu0 %3913
  %3915 = vrot.lane.b32.xlu0 %v3893, 1
  %v3916 = vpop.permute.xlu0 %3915
  %3917 = vrot.lane.b32.xlu0 %v3894, 1
  %v3918 = vpop.permute.xlu0 %3917
  %v3919 = vsel %vm81, %v3908, %v3914
  %v3920 = vsel %vm81, %v3910, %v3916
  %v3921 = vsel %vm81, %v3912, %v3918
  %v3922 = vsel %vm81, %v3902, %v3908
  %v3923 = vsel %vm81, %v3904, %v3910
  %v3924 = vsel %vm81, %v3906, %v3912
  %v3925 = vsel %vm81, %v3896, %v3902
  %v3926 = vsel %vm81, %v3898, %v3904
  %v3927 = vsel %vm81, %v3900, %v3906
  %v3928 = vsel %vm81, %v3914, %v3896
  %v3929 = vsel %vm81, %v3916, %v3898
  %v3930 = vsel %vm81, %v3918, %v3900
  %v3931 = vld [vmem:[%s944] ss:$8 sm:$0xf]
  %v3933 = vlaneseq
  %v3934 = vshrl.u32 %v3933, 7
  %v3935 = vsub.s32 0, %v3934
  %v3936 = vrot.slane %v3931, %v3935
  %v3937 = vlaneseq
  %v3938 = vshrl.u32 %v3937, 7
  %v3939 = vsub.s32 1, %v3938
  %v3940 = vrot.slane %v3931, %v3939
  %v3941 = vlaneseq
  %v3942 = vshrl.u32 %v3941, 7
  %v3943 = vsub.s32 2, %v3942
  %v3944 = vrot.slane %v3931, %v3943
  %v3945 = vlaneseq
  %v3946 = vshrl.u32 %v3945, 7
  %v3947 = vsub.s32 3, %v3946
  %v3948 = vrot.slane %v3931, %v3947
  %v3953 = vmul.f32 %v3928, %v3936
  %v3954 = vmul.f32 %v3925, %v3940
  %v3955 = vmul.f32 %v3922, %v3944
  %v3956 = vmul.f32 %v3919, %v3948
  %v3957 = vmul.f32 %v3929, %v3936
  %v3958 = vmul.f32 %v3926, %v3940
  %v3959 = vmul.f32 %v3923, %v3944
  %v3960 = vmul.f32 %v3920, %v3948
  %v3961 = vmul.f32 %v3930, %v3936
  %v3962 = vmul.f32 %v3927, %v3940
  %v3963 = vmul.f32 %v3924, %v3944
  %v3964 = vmul.f32 %v3921, %v3948
  %v3965 = vpack.c.bf16 %v3957, %v3953
  %v3966 = vpack.c.bf16 %v3958, %v3954
  %v3967 = vpack.c.bf16 %v3959, %v3955
  %v3968 = vpack.c.bf16 %v3960, %v3956
  %v3969 = vpack.c.bf16 %v3961, %v3961
  %v3970 = vpack.c.bf16 %v3962, %v3962
  %v3971 = vpack.c.bf16 %v3963, %v3963
  %v3972 = vpack.c.bf16 %v3964, %v3964
  %s3973 = scalar_lea.vmem %s3, 96
  %v3974 = vld [vmem:[%s3973] sm:$0xf]
  %v3976 = vsel %vm2976, %v3974, 0
  %v3979 = vsel %vm154, %v3969, 0
  %v3982 = vsel %vm154, %v3970, 0
  %v3985 = vsel %vm154, %v3971, 0
  %v3988 = vsel %vm154, %v3972, 0
  %3990 = vmatprep.subr.bf16.mxu0 %v3966
  %3991 = vmatpush1.bf16.msra.mxu0 %v3965
  %3992 = vmatprep.subr.bf16.mxu0 %v3982
  %3993 = vmatpush1.bf16.msra.mxu0 %v3979
  %3994 = vmatprep.subr.bf16.mxu0 0
  %3995 = vmatpush1.bf16.msra.mxu0 0
  %3996 = vmatprep.subr.bf16.mxu0 0
  %3997 = vmatpush1.bf16.msra.mxu0 0
  %3998 = vmatprep.subr.bf16.mxu0 0
  %3999 = vmatpush1.bf16.msra.mxu0 0
  %4000 = vmatprep.subr.bf16.mxu0 0
  %4001 = vmatpush1.bf16.msra.mxu0 0
  %4002 = vmatprep.subr.bf16.mxu0 0
  %4003 = vmatpush1.bf16.msra.mxu0 0
  %4004 = vmatprep.subr.bf16.mxu0 0
  %4005 = vmatpush1.bf16.msra.mxu0 0
  %4006 = vmatprep.subr.bf16.mxu0 0
  %4007 = vmatpush1.bf16.msra.mxu0 0
  %4008 = vmatprep.subr.bf16.mxu0 0
  %4009 = vmatpush1.bf16.msra.mxu0 0
  %4010 = vmatprep.subr.bf16.mxu0 0
  %4011 = vmatpush1.bf16.msra.mxu0 0
  %4012 = vmatprep.subr.bf16.mxu0 0
  %4013 = vmatpush1.bf16.msra.mxu0 0
  %4014 = vmatprep.subr.bf16.mxu0 0
  %4015 = vmatpush1.bf16.msra.mxu0 0
  %4016 = vmatprep.subr.bf16.mxu0 0
  %4017 = vmatpush1.bf16.msra.mxu0 0
  %4018 = vmatprep.subr.bf16.mxu0 0
  %4019 = vmatpush1.bf16.msra.mxu0 0
  %4020 = vmatprep.subr.bf16.mxu0 0
  %4021 = vmatpush1.bf16.msra.mxu0 0
  %4022 = vmatprep.mubr.bf16.mxu0 0
  %4023 = vmatmul.mubr.bf16.gmra.mrb[0].mxu0 %v3976
  %v4024 = vpop.f32.mrb[0].mxu0
  %v4025 = vadd.f32 0.0, %v4024
  %v4026 = vpop.f32.mrb[0].mxu0
  %v4027 = vadd.f32 0.0, %v4026
  %v4028 = vpop.f32.mrb[0].mxu0
  %v4029 = vpop.f32.mrb[0].mxu0
  %4030 = vdwg.mxu0
  %4031 = vmatprep.subr.bf16.mxu0 %v3968
  %4032 = vmatpush1.bf16.msra.mxu0 %v3967
  %4033 = vmatprep.subr.bf16.mxu0 %v3988
  %4034 = vmatpush1.bf16.msra.mxu0 %v3985
  %4035 = vmatprep.subr.bf16.mxu0 0
  %4036 = vmatpush1.bf16.msra.mxu0 0
  %4037 = vmatprep.subr.bf16.mxu0 0
  %4038 = vmatpush1.bf16.msra.mxu0 0
  %4039 = vmatprep.subr.bf16.mxu0 0
  %4040 = vmatpush1.bf16.msra.mxu0 0
  %4041 = vmatprep.subr.bf16.mxu0 0
  %4042 = vmatpush1.bf16.msra.mxu0 0
  %4043 = vmatprep.subr.bf16.mxu0 0
  %4044 = vmatpush1.bf16.msra.mxu0 0
  %4045 = vmatprep.subr.bf16.mxu0 0
  %4046 = vmatpush1.bf16.msra.mxu0 0
  %4047 = vmatprep.subr.bf16.mxu0 0
  %4048 = vmatpush1.bf16.msra.mxu0 0
  %4049 = vmatprep.subr.bf16.mxu0 0
  %4050 = vmatpush1.bf16.msra.mxu0 0
  %4051 = vmatprep.subr.bf16.mxu0 0
  %4052 = vmatpush1.bf16.msra.mxu0 0
  %4053 = vmatprep.subr.bf16.mxu0 0
  %4054 = vmatpush1.bf16.msra.mxu0 0
  %4055 = vmatprep.subr.bf16.mxu0 0
  %4056 = vmatpush1.bf16.msra.mxu0 0
  %4057 = vmatprep.subr.bf16.mxu0 0
  %4058 = vmatpush1.bf16.msra.mxu0 0
  %4059 = vmatprep.subr.bf16.mxu0 0
  %4060 = vmatpush1.bf16.msra.mxu0 0
  %4061 = vmatprep.subr.bf16.mxu0 0
  %4062 = vmatpush1.bf16.msra.mxu0 0
  %4063 = vmatprep.mubr.bf16.mxu0 0
  %4064 = vmatmul.mubr.bf16.gmra.mrb[0].mxu0 %v3976
  %v4065 = vpop.f32.mrb[0].mxu0
  %v4066 = vadd.f32 0.0, %v4065
  %v4067 = vpop.f32.mrb[0].mxu0
  %v4068 = vadd.f32 0.0, %v4067
  %v4069 = vpop.f32.mrb[0].mxu0
  %v4070 = vpop.f32.mrb[0].mxu0
  %4071 = vdwg.mxu0
  %v4072 = vadd.f32 %v3855, %v4025
  %v4073 = vadd.f32 %v3856, %v4027
  %v4074 = vadd.f32 %v3857, %v4066
  %v4075 = vadd.f32 %v3858, %v4068
  %v4076 = vld [vmem:[%s1078] ss:$8 sm:$0xf]
  %v4078 = vlaneseq
  %v4079 = vshrl.u32 %v4078, 7
  %v4080 = vsub.s32 0, %v4079
  %v4081 = vrot.slane %v4076, %v4080
  %v4082 = vlaneseq
  %v4083 = vshrl.u32 %v4082, 7
  %v4084 = vsub.s32 1, %v4083
  %v4085 = vrot.slane %v4076, %v4084
  %v4086 = vlaneseq
  %v4087 = vshrl.u32 %v4086, 7
  %v4088 = vsub.s32 2, %v4087
  %v4089 = vrot.slane %v4076, %v4088
  %v4090 = vlaneseq
  %v4091 = vshrl.u32 %v4090, 7
  %v4092 = vsub.s32 3, %v4091
  %v4093 = vrot.slane %v4076, %v4092
  %v4098 = vmul.f32 %v3889, %v4081
  %v4099 = vmul.f32 %v3886, %v4085
  %v4100 = vmul.f32 %v3883, %v4089
  %v4101 = vmul.f32 %v3892, %v4093
  %v4102 = vmul.f32 %v3890, %v4081
  %v4103 = vmul.f32 %v3887, %v4085
  %v4104 = vmul.f32 %v3884, %v4089
  %v4105 = vmul.f32 %v3893, %v4093
  %v4106 = vmul.f32 %v3891, %v4081
  %v4107 = vmul.f32 %v3888, %v4085
  %v4108 = vmul.f32 %v3885, %v4089
  %v4109 = vmul.f32 %v3894, %v4093
  %v4110 = vpack.c.bf16 %v4102, %v4098
  %v4111 = vpack.c.bf16 %v4103, %v4099
  %v4112 = vpack.c.bf16 %v4104, %v4100
  %v4113 = vpack.c.bf16 %v4105, %v4101
  %v4114 = vpack.c.bf16 %v4106, %v4106
  %v4115 = vpack.c.bf16 %v4107, %v4107
  %v4116 = vpack.c.bf16 %v4108, %v4108
  %v4117 = vpack.c.bf16 %v4109, %v4109
  %s4118 = scalar_lea.vmem %s3, 100
  %v4119 = vld [vmem:[%s4118] sm:$0xf]
  %v4121 = vsel %vm2976, %v4119, 0
  %v4124 = vsel %vm154, %v4114, 0
  %v4127 = vsel %vm154, %v4115, 0
  %v4130 = vsel %vm154, %v4116, 0
  %v4133 = vsel %vm154, %v4117, 0
  %4135 = vmatprep.subr.bf16.mxu0 %v4111
  %4136 = vmatpush1.bf16.msra.mxu0 %v4110
  %4137 = vmatprep.subr.bf16.mxu0 %v4127
  %4138 = vmatpush1.bf16.msra.mxu0 %v4124
  %4139 = vmatprep.subr.bf16.mxu0 0
  %4140 = vmatpush1.bf16.msra.mxu0 0
  %4141 = vmatprep.subr.bf16.mxu0 0
  %4142 = vmatpush1.bf16.msra.mxu0 0
  %4143 = vmatprep.subr.bf16.mxu0 0
  %4144 = vmatpush1.bf16.msra.mxu0 0
  %4145 = vmatprep.subr.bf16.mxu0 0
  %4146 = vmatpush1.bf16.msra.mxu0 0
  %4147 = vmatprep.subr.bf16.mxu0 0
  %4148 = vmatpush1.bf16.msra.mxu0 0
  %4149 = vmatprep.subr.bf16.mxu0 0
  %4150 = vmatpush1.bf16.msra.mxu0 0
  %4151 = vmatprep.subr.bf16.mxu0 0
  %4152 = vmatpush1.bf16.msra.mxu0 0
  %4153 = vmatprep.subr.bf16.mxu0 0
  %4154 = vmatpush1.bf16.msra.mxu0 0
  %4155 = vmatprep.subr.bf16.mxu0 0
  %4156 = vmatpush1.bf16.msra.mxu0 0
  %4157 = vmatprep.subr.bf16.mxu0 0
  %4158 = vmatpush1.bf16.msra.mxu0 0
  %4159 = vmatprep.subr.bf16.mxu0 0
  %4160 = vmatpush1.bf16.msra.mxu0 0
  %4161 = vmatprep.subr.bf16.mxu0 0
  %4162 = vmatpush1.bf16.msra.mxu0 0
  %4163 = vmatprep.subr.bf16.mxu0 0
  %4164 = vmatpush1.bf16.msra.mxu0 0
  %4165 = vmatprep.subr.bf16.mxu0 0
  %4166 = vmatpush1.bf16.msra.mxu0 0
  %4167 = vmatprep.mubr.bf16.mxu0 0
  %4168 = vmatmul.mubr.bf16.gmra.mrb[0].mxu0 %v4121
  %v4169 = vpop.f32.mrb[0].mxu0
  %v4170 = vadd.f32 0.0, %v4169
  %v4171 = vpop.f32.mrb[0].mxu0
  %v4172 = vadd.f32 0.0, %v4171
  %v4173 = vpop.f32.mrb[0].mxu0
  %v4174 = vpop.f32.mrb[0].mxu0
  %4175 = vdwg.mxu0
  %4176 = vmatprep.subr.bf16.mxu0 %v4113
  %4177 = vmatpush1.bf16.msra.mxu0 %v4112
  %4178 = vmatprep.subr.bf16.mxu0 %v4133
  %4179 = vmatpush1.bf16.msra.mxu0 %v4130
  %4180 = vmatprep.subr.bf16.mxu0 0
  %4181 = vmatpush1.bf16.msra.mxu0 0
  %4182 = vmatprep.subr.bf16.mxu0 0
  %4183 = vmatpush1.bf16.msra.mxu0 0
  %4184 = vmatprep.subr.bf16.mxu0 0
  %4185 = vmatpush1.bf16.msra.mxu0 0
  %4186 = vmatprep.subr.bf16.mxu0 0
  %4187 = vmatpush1.bf16.msra.mxu0 0
  %4188 = vmatprep.subr.bf16.mxu0 0
  %4189 = vmatpush1.bf16.msra.mxu0 0
  %4190 = vmatprep.subr.bf16.mxu0 0
  %4191 = vmatpush1.bf16.msra.mxu0 0
  %4192 = vmatprep.subr.bf16.mxu0 0
  %4193 = vmatpush1.bf16.msra.mxu0 0
  %4194 = vmatprep.subr.bf16.mxu0 0
  %4195 = vmatpush1.bf16.msra.mxu0 0
  %4196 = vmatprep.subr.bf16.mxu0 0
  %4197 = vmatpush1.bf16.msra.mxu0 0
  %4198 = vmatprep.subr.bf16.mxu0 0
  %4199 = vmatpush1.bf16.msra.mxu0 0
  %4200 = vmatprep.subr.bf16.mxu0 0
  %4201 = vmatpush1.bf16.msra.mxu0 0
  %4202 = vmatprep.subr.bf16.mxu0 0
  %4203 = vmatpush1.bf16.msra.mxu0 0
  %4204 = vmatprep.subr.bf16.mxu0 0
  %4205 = vmatpush1.bf16.msra.mxu0 0
  %4206 = vmatprep.subr.bf16.mxu0 0
  %4207 = vmatpush1.bf16.msra.mxu0 0
  %4208 = vmatprep.mubr.bf16.mxu0 0
  %4209 = vmatmul.mubr.bf16.gmra.mrb[0].mxu0 %v4121
  %v4210 = vpop.f32.mrb[0].mxu0
  %v4211 = vadd.f32 0.0, %v4210
  %v4212 = vpop.f32.mrb[0].mxu0
  %v4213 = vadd.f32 0.0, %v4212
  %v4214 = vpop.f32.mrb[0].mxu0
  %v4215 = vpop.f32.mrb[0].mxu0
  %4216 = vdwg.mxu0
  %v4217 = vadd.f32 %v4072, %v4170
  %v4218 = vadd.f32 %v4073, %v4172
  %v4219 = vadd.f32 %v4074, %v4211
  %v4220 = vadd.f32 %v4075, %v4213
  %4221 = vrot.lane.b32.xlu0 %v3889, 127
  %v4222 = vpop.permute.xlu0 %4221
  %4223 = vrot.lane.b32.xlu0 %v3890, 127
  %v4224 = vpop.permute.xlu0 %4223
  %4225 = vrot.lane.b32.xlu0 %v3891, 127
  %v4226 = vpop.permute.xlu0 %4225
  %4227 = vrot.lane.b32.xlu0 %v3886, 127
  %v4228 = vpop.permute.xlu0 %4227
  %4229 = vrot.lane.b32.xlu0 %v3887, 127
  %v4230 = vpop.permute.xlu0 %4229
  %4231 = vrot.lane.b32.xlu0 %v3888, 127
  %v4232 = vpop.permute.xlu0 %4231
  %4233 = vrot.lane.b32.xlu0 %v3883, 127
  %v4234 = vpop.permute.xlu0 %4233
  %4235 = vrot.lane.b32.xlu0 %v3884, 127
  %v4236 = vpop.permute.xlu0 %4235
  %4237 = vrot.lane.b32.xlu0 %v3885, 127
  %v4238 = vpop.permute.xlu0 %4237
  %4239 = vrot.lane.b32.xlu0 %v3892, 127
  %v4240 = vpop.permute.xlu0 %4239
  %4241 = vrot.lane.b32.xlu0 %v3893, 127
  %v4242 = vpop.permute.xlu0 %4241
  %4243 = vrot.lane.b32.xlu0 %v3894, 127
  %v4244 = vpop.permute.xlu0 %4243
  %v4245 = vsel %vm354, %v4234, %v4240
  %v4246 = vsel %vm354, %v4236, %v4242
  %v4247 = vsel %vm354, %v4238, %v4244
  %v4248 = vsel %vm354, %v4228, %v4234
  %v4249 = vsel %vm354, %v4230, %v4236
  %v4250 = vsel %vm354, %v4232, %v4238
  %v4251 = vsel %vm354, %v4222, %v4228
  %v4252 = vsel %vm354, %v4224, %v4230
  %v4253 = vsel %vm354, %v4226, %v4232
  %v4254 = vsel %vm354, %v4240, %v4222
  %v4255 = vsel %vm354, %v4242, %v4224
  %v4256 = vsel %vm354, %v4244, %v4226
  %v4257 = vld [vmem:[%s1224] ss:$8 sm:$0xf]
  %v4259 = vlaneseq
  %v4260 = vshrl.u32 %v4259, 7
  %v4261 = vsub.s32 0, %v4260
  %v4262 = vrot.slane %v4257, %v4261
  %v4263 = vlaneseq
  %v4264 = vshrl.u32 %v4263, 7
  %v4265 = vsub.s32 1, %v4264
  %v4266 = vrot.slane %v4257, %v4265
  %v4267 = vlaneseq
  %v4268 = vshrl.u32 %v4267, 7
  %v4269 = vsub.s32 2, %v4268
  %v4270 = vrot.slane %v4257, %v4269
  %v4271 = vlaneseq
  %v4272 = vshrl.u32 %v4271, 7
  %v4273 = vsub.s32 3, %v4272
  %v4274 = vrot.slane %v4257, %v4273
  %v4279 = vmul.f32 %v4251, %v4262
  %v4280 = vmul.f32 %v4248, %v4266
  %v4281 = vmul.f32 %v4245, %v4270
  %v4282 = vmul.f32 %v4254, %v4274
  %v4283 = vmul.f32 %v4252, %v4262
  %v4284 = vmul.f32 %v4249, %v4266
  %v4285 = vmul.f32 %v4246, %v4270
  %v4286 = vmul.f32 %v4255, %v4274
  %v4287 = vmul.f32 %v4253, %v4262
  %v4288 = vmul.f32 %v4250, %v4266
  %v4289 = vmul.f32 %v4247, %v4270
  %v4290 = vmul.f32 %v4256, %v4274
  %v4291 = vpack.c.bf16 %v4283, %v4279
  %v4292 = vpack.c.bf16 %v4284, %v4280
  %v4293 = vpack.c.bf16 %v4285, %v4281
  %v4294 = vpack.c.bf16 %v4286, %v4282
  %v4295 = vpack.c.bf16 %v4287, %v4287
  %v4296 = vpack.c.bf16 %v4288, %v4288
  %v4297 = vpack.c.bf16 %v4289, %v4289
  %v4298 = vpack.c.bf16 %v4290, %v4290
  %s4299 = scalar_lea.vmem %s3, 104
  %v4300 = vld [vmem:[%s4299] sm:$0xf]
  %v4302 = vsel %vm2976, %v4300, 0
  %v4305 = vsel %vm154, %v4295, 0
  %v4308 = vsel %vm154, %v4296, 0
  %v4311 = vsel %vm154, %v4297, 0
  %v4314 = vsel %vm154, %v4298, 0
  %4316 = vmatprep.subr.bf16.mxu0 %v4292
  %4317 = vmatpush1.bf16.msra.mxu0 %v4291
  %4318 = vmatprep.subr.bf16.mxu0 %v4308
  %4319 = vmatpush1.bf16.msra.mxu0 %v4305
  %4320 = vmatprep.subr.bf16.mxu0 0
  %4321 = vmatpush1.bf16.msra.mxu0 0
  %4322 = vmatprep.subr.bf16.mxu0 0
  %4323 = vmatpush1.bf16.msra.mxu0 0
  %4324 = vmatprep.subr.bf16.mxu0 0
  %4325 = vmatpush1.bf16.msra.mxu0 0
  %4326 = vmatprep.subr.bf16.mxu0 0
  %4327 = vmatpush1.bf16.msra.mxu0 0
  %4328 = vmatprep.subr.bf16.mxu0 0
  %4329 = vmatpush1.bf16.msra.mxu0 0
  %4330 = vmatprep.subr.bf16.mxu0 0
  %4331 = vmatpush1.bf16.msra.mxu0 0
  %4332 = vmatprep.subr.bf16.mxu0 0
  %4333 = vmatpush1.bf16.msra.mxu0 0
  %4334 = vmatprep.subr.bf16.mxu0 0
  %4335 = vmatpush1.bf16.msra.mxu0 0
  %4336 = vmatprep.subr.bf16.mxu0 0
  %4337 = vmatpush1.bf16.msra.mxu0 0
  %4338 = vmatprep.subr.bf16.mxu0 0
  %4339 = vmatpush1.bf16.msra.mxu0 0
  %4340 = vmatprep.subr.bf16.mxu0 0
  %4341 = vmatpush1.bf16.msra.mxu0 0
  %4342 = vmatprep.subr.bf16.mxu0 0
  %4343 = vmatpush1.bf16.msra.mxu0 0
  %4344 = vmatprep.subr.bf16.mxu0 0
  %4345 = vmatpush1.bf16.msra.mxu0 0
  %4346 = vmatprep.subr.bf16.mxu0 0
  %4347 = vmatpush1.bf16.msra.mxu0 0
  %4348 = vmatprep.mubr.bf16.mxu0 0
  %4349 = vmatmul.mubr.bf16.gmra.mrb[0].mxu0 %v4302
  %v4350 = vpop.f32.mrb[0].mxu0
  %v4351 = vadd.f32 0.0, %v4350
  %v4352 = vpop.f32.mrb[0].mxu0
  %v4353 = vadd.f32 0.0, %v4352
  %v4354 = vpop.f32.mrb[0].mxu0
  %v4355 = vpop.f32.mrb[0].mxu0
  %4356 = vdwg.mxu0
  %4357 = vmatprep.subr.bf16.mxu0 %v4294
  %4358 = vmatpush1.bf16.msra.mxu0 %v4293
  %4359 = vmatprep.subr.bf16.mxu0 %v4314
  %4360 = vmatpush1.bf16.msra.mxu0 %v4311
  %4361 = vmatprep.subr.bf16.mxu0 0
  %4362 = vmatpush1.bf16.msra.mxu0 0
  %4363 = vmatprep.subr.bf16.mxu0 0
  %4364 = vmatpush1.bf16.msra.mxu0 0
  %4365 = vmatprep.subr.bf16.mxu0 0
  %4366 = vmatpush1.bf16.msra.mxu0 0
  %4367 = vmatprep.subr.bf16.mxu0 0
  %4368 = vmatpush1.bf16.msra.mxu0 0
  %4369 = vmatprep.subr.bf16.mxu0 0
  %4370 = vmatpush1.bf16.msra.mxu0 0
  %4371 = vmatprep.subr.bf16.mxu0 0
  %4372 = vmatpush1.bf16.msra.mxu0 0
  %4373 = vmatprep.subr.bf16.mxu0 0
  %4374 = vmatpush1.bf16.msra.mxu0 0
  %4375 = vmatprep.subr.bf16.mxu0 0
  %4376 = vmatpush1.bf16.msra.mxu0 0
  %4377 = vmatprep.subr.bf16.mxu0 0
  %4378 = vmatpush1.bf16.msra.mxu0 0
  %4379 = vmatprep.subr.bf16.mxu0 0
  %4380 = vmatpush1.bf16.msra.mxu0 0
  %4381 = vmatprep.subr.bf16.mxu0 0
  %4382 = vmatpush1.bf16.msra.mxu0 0
  %4383 = vmatprep.subr.bf16.mxu0 0
  %4384 = vmatpush1.bf16.msra.mxu0 0
  %4385 = vmatprep.subr.bf16.mxu0 0
  %4386 = vmatpush1.bf16.msra.mxu0 0
  %4387 = vmatprep.subr.bf16.mxu0 0
  %4388 = vmatpush1.bf16.msra.mxu0 0
  %4389 = vmatprep.mubr.bf16.mxu0 0
  %4390 = vmatmul.mubr.bf16.gmra.mrb[0].mxu0 %v4302
  %v4391 = vpop.f32.mrb[0].mxu0
  %v4392 = vadd.f32 0.0, %v4391
  %v4393 = vpop.f32.mrb[0].mxu0
  %v4394 = vadd.f32 0.0, %v4393
  %v4395 = vpop.f32.mrb[0].mxu0
  %v4396 = vpop.f32.mrb[0].mxu0
  %4397 = vdwg.mxu0
  %v4398 = vadd.f32 %v4217, %v4351
  %v4399 = vadd.f32 %v4218, %v4353
  %v4400 = vadd.f32 %v4219, %v4392
  %v4401 = vadd.f32 %v4220, %v4394
  %4402 = vst [vmem:[#allocation2 + $0x60] sm:$0xff] %v4398
  %4403 = vst [vmem:[#allocation2 + $0x68] sm:$0xff] %v4399
  %4404 = vst [vmem:[#allocation2 + $0x70] sm:$0xff] %v4400
  %4405 = vst [vmem:[#allocation2 + $0x78] sm:$0xff] %v4401
  %v4406 = vld [vmem:[#allocation2] sm:$0xf]
  %v4407 = vld [vmem:[#allocation2 + $0x8] sm:$0xf]
  %4408 = vst [vmem:[%s5] sm:$0xf] %v4406
  %4409 = vst [vmem:[%s5 + $0x8] sm:$0xf] %v4407
  %v4410 = vld [vmem:[#allocation2 + $0x20] sm:$0xf]
  %v4411 = vld [vmem:[#allocation2 + $0x28] sm:$0xf]
  %v4414 = vrot.slane %v4410, 4
  %v4415 = vrot.slane %v4411, 4
  %4418 = vst [vmem:[%s5] sm:$0xf0] %v4414
  %4419 = vst [vmem:[%s5 + $0x8] sm:$0xf0] %v4415
  %v4420 = vld [vmem:[#allocation2 + $0x40] sm:$0xf]
  %v4421 = vld [vmem:[#allocation2 + $0x48] sm:$0xf]
  %4422 = vst [vmem:[%s5 + $0x10] sm:$0xf] %v4420
  %4423 = vst [vmem:[%s5 + $0x18] sm:$0xf] %v4421
  %v4424 = vld [vmem:[#allocation2 + $0x60] sm:$0xf]
  %v4425 = vld [vmem:[#allocation2 + $0x68] sm:$0xf]
  %v4428 = vrot.slane %v4424, 4
  %v4429 = vrot.slane %v4425, 4
  %4432 = vst [vmem:[%s5 + $0x10] sm:$0xf0] %v4428
  %4433 = vst [vmem:[%s5 + $0x18] sm:$0xf0] %v4429
  %v4434 = vld [vmem:[#allocation2 + $0x10] sm:$0xf]
  %v4435 = vld [vmem:[#allocation2 + $0x18] sm:$0xf]
  %s4436 = scalar_lea.vmem %s5, 32
  %4437 = vst [vmem:[%s4436] sm:$0xf] %v4434
  %4438 = vst [vmem:[%s4436 + $0x8] sm:$0xf] %v4435
  %v4439 = vld [vmem:[#allocation2 + $0x30] sm:$0xf]
  %v4440 = vld [vmem:[#allocation2 + $0x38] sm:$0xf]
  %v4443 = vrot.slane %v4439, 4
  %v4444 = vrot.slane %v4440, 4
  %4447 = vst [vmem:[%s4436] sm:$0xf0] %v4443
  %4448 = vst [vmem:[%s4436 + $0x8] sm:$0xf0] %v4444
  %v4449 = vld [vmem:[#allocation2 + $0x50] sm:$0xf]
  %v4450 = vld [vmem:[#allocation2 + $0x58] sm:$0xf]
  %4451 = vst [vmem:[%s4436 + $0x10] sm:$0xf] %v4449
  %4452 = vst [vmem:[%s4436 + $0x18] sm:$0xf] %v4450
  %v4453 = vld [vmem:[#allocation2 + $0x70] sm:$0xf]
  %v4454 = vld [vmem:[#allocation2 + $0x78] sm:$0xf]
  %v4457 = vrot.slane %v4453, 4
  %v4458 = vrot.slane %v4454, 4
  %4461 = vst [vmem:[%s4436 + $0x10] sm:$0xf0] %v4457
  %4462 = vst [vmem:[%s4436 + $0x18] sm:$0xf0] %v4458
  // Predicated region
  $region22: #{dense_block_forward.1} parent=0 // pred_check
    _
  $region23: #{dense_block_forward.1} parent=0 // pred_check_branch
    %4464 = sbr.rel (0) target = $region25
  $region24: #{dense_block_forward.1} parent=0 // pred_region
    _
  $region25: #{dense_block_forward.1} parent=0 // pred_fallthru
    _
  // Predicated region
  $region26: #{dense_block_forward.1} parent=0 // pred_check
    _
  $region27: #{dense_block_forward.1} parent=0 // pred_check_branch
    %4466 = sbr.rel (0) target = $region29
  $region28: #{dense_block_forward.1} parent=0 // pred_region
    _
  $region29: #{dense_block_forward.1} parent=0 // pred_fallthru
    _

</llo_original>
